<compile_context>
chip_gen: v5e
topology: v5e:2x2
jax: 0.10.0
libtpu: 0.0.40
codegen_flags: <defaults>
</compile_context>

<pallas_src>
import functools

import jax
import jax.numpy as jnp
from jax.experimental import pallas as pl
from jax.experimental.pallas import tpu as pltpu

INPUT_SIZE = 28 * 28      # 784
HIDDEN_SIZE = 784

LANE = 128                # TPU lane width (last dim)
SUBLANE = 8               # TPU sublane width (second-to-last dim)


def _round_up(n: int, m: int) -> int:
    return ((n + m - 1) // m) * m


def autoencoder_kernel(x_ref, w1_ref, b1_ref, w2_ref, b2_ref, o_ref):
    """Fused encoder+decoder for one batch tile.

    x_ref : (bm, Dp)    VMEM (compute dtype, lane-padded)
    w1_ref: (Dp, Hp)    VMEM (compute dtype)
    b1_ref: (1, Hp)     VMEM f32
    w2_ref: (Hp, Dp)    VMEM (compute dtype)
    b2_ref: (1, Dp)     VMEM f32
    o_ref : (bm, Dp)    VMEM f32
    """
    x = x_ref[...]
    # encoder: Linear + ReLU (f32 accumulation on the MXU)
    h = jnp.dot(x, w1_ref[...], preferred_element_type=jnp.float32) + b1_ref[...]
    h = jnp.maximum(h, 0.0)
    # decoder: Linear + ReLU
    h = h.astype(w2_ref.dtype)
    y = jnp.dot(h, w2_ref[...], preferred_element_type=jnp.float32) + b2_ref[...]
    o_ref[...] = jnp.maximum(y, 0.0).astype(o_ref.dtype)


@functools.partial(jax.jit, static_argnames=("block_m", "compute_dtype"))
def autoencoder_forward(x_nchw, w1, b1, w2, b2, *, block_m=256,
                        compute_dtype=jnp.bfloat16):
    """Forward pass of the AutoEncoder.

    x_nchw: (B, 1, 28, 28) f32
    w1: (hidden, input)  b1: (hidden,)   -- torch nn.Linear layout (out, in)
    w2: (input, hidden)  b2: (input,)
    Returns (B, input) f32.
    """
    B = x_nchw.shape[0]
    hidden, d_in = w1.shape
    assert x_nchw.shape[1] * x_nchw.shape[2] * x_nchw.shape[3] == d_in

    # Lane-dense padded sizes (multiples of 128).
    d_in_p = _round_up(d_in, LANE)       # 784 -> 896
    hidden_p = _round_up(hidden, LANE)   # 784 -> 896

    # Batch tile: full (sublane-padded) batch if it is small, else block_m rows.
    bm = min(block_m, _round_up(B, SUBLANE))
    B_p = _round_up(B, bm)
    grid = (B_p // bm,)

    # Flatten NCHW -> (B, 784), zero-pad batch rows and feature lanes.
    x = x_nchw.reshape(B, d_in)
    x_p = jnp.pad(x, ((0, B_p - B), (0, d_in_p - d_in))).astype(compute_dtype)

    # Weights stored (in, out) so the kernel computes x @ W; zero padding keeps
    # the padded lanes/hidden units inert (relu(0 + 0) = 0, then sliced away).
    w1_p = jnp.pad(w1.T, ((0, d_in_p - d_in), (0, hidden_p - hidden))).astype(compute_dtype)
    w2_p = jnp.pad(w2.T, ((0, hidden_p - hidden), (0, d_in_p - d_in))).astype(compute_dtype)
    b1_p = jnp.pad(b1, (0, hidden_p - hidden)).reshape(1, hidden_p).astype(jnp.float32)
    b2_p = jnp.pad(b2, (0, d_in_p - d_in)).reshape(1, d_in_p).astype(jnp.float32)

    out_p = pl.pallas_call(
        autoencoder_kernel,
        out_shape=jax.ShapeDtypeStruct((B_p, d_in_p), jnp.float32),
        grid_spec=pltpu.PrefetchScalarGridSpec(
            num_scalar_prefetch=0,
            grid=grid,
            in_specs=[
                pl.BlockSpec((bm, d_in_p), lambda i: (i, 0)),        # x tile
                pl.BlockSpec((d_in_p, hidden_p), lambda i: (0, 0)),  # W1 (whole)
                pl.BlockSpec((1, hidden_p), lambda i: (0, 0)),       # b1
                pl.BlockSpec((hidden_p, d_in_p), lambda i: (0, 0)),  # W2 (whole)
                pl.BlockSpec((1, d_in_p), lambda i: (0, 0)),         # b2
            ],
            out_specs=pl.BlockSpec((bm, d_in_p), lambda i: (i, 0)),
        ),
        compiler_params=pltpu.CompilerParams(
            dimension_semantics=("parallel",),
            vmem_limit_bytes=48 * 1024 * 1024,
        ),
    )(x_p, w1_p, b1_p, w2_p, b2_p)

    # Strip batch / lane padding.
    return out_p[:B, :d_in]


def init_params(key, input_size, hidden_size):
    """torch.nn.Linear default init: U(-1/sqrt(fan_in), 1/sqrt(fan_in)), torch (out, in) layout."""
    k1, k2, k3, k4 = jax.random.split(key, 4)
    bound1 = 1.0 / jnp.sqrt(input_size)
    bound2 = 1.0 / jnp.sqrt(hidden_size)
    w1 = jax.random.uniform(k1, (hidden_size, input_size), jnp.float32, -bound1, bound1)
    b1 = jax.random.uniform(k2, (hidden_size,), jnp.float32, -bound1, bound1)
    w2 = jax.random.uniform(k3, (input_size, hidden_size), jnp.float32, -bound2, bound2)
    b2 = jax.random.uniform(k4, (input_size,), jnp.float32, -bound2, bound2)
    return w1, b1, w2, b2


def reference_forward(x_nchw, w1, b1, w2, b2):
    x = x_nchw.reshape(x_nchw.shape[0], -1)
    h = jnp.maximum(x @ w1.T + b1, 0.0)
    y = jnp.maximum(h @ w2.T + b2, 0.0)
    return y


if __name__ == "__main__":
    key = jax.random.PRNGKey(0)
    k_params, k_x = jax.random.split(key)

    w1, b1, w2, b2 = init_params(k_params, INPUT_SIZE, HIDDEN_SIZE)

    # small deterministic input batch, NCHW as in the torch docstring
    batch = 16
    x = jax.random.uniform(k_x, (batch, 1, 28, 28), jnp.float32)

    ref = reference_forward(x, w1, b1, w2, b2)

    # f32 operands: bit-for-bit comparable path.
    out_f32 = autoencoder_forward(x, w1, b1, w2, b2, compute_dtype=jnp.float32)
    out_f32 = jax.block_until_ready(out_f32)
    assert out_f32.shape == (batch, INPUT_SIZE), out_f32.shape
    assert jnp.allclose(out_f32, ref, atol=1e-4, rtol=1e-4), "f32 mismatch vs. reference"

    # bf16 operands with f32 accumulation: the v6e/v7x throughput path.
    out_bf16 = autoencoder_forward(x, w1, b1, w2, b2, compute_dtype=jnp.bfloat16)
    out_bf16 = jax.block_until_ready(out_bf16)
    assert out_bf16.shape == (batch, INPUT_SIZE), out_bf16.shape
    assert jnp.allclose(out_bf16, ref, atol=3e-2, rtol=3e-2), "bf16 mismatch vs. reference"

    print("KERNEL_OK")
</pallas_src>

<mosaic_0001>
module attributes {stable_mosaic.version = 11 : i64} {
  func.func @autoencoder_kernel(%arg0: i32, %arg1: memref<16x896xf32, #tpu.memory_space<vmem>>, %arg2: memref<896x896xf32, #tpu.memory_space<vmem>>, %arg3: memref<1x896xf32, #tpu.memory_space<vmem>>, %arg4: memref<896x896xf32, #tpu.memory_space<vmem>>, %arg5: memref<1x896xf32, #tpu.memory_space<vmem>>, %arg6: memref<16x896xf32, #tpu.memory_space<vmem>>) attributes {dimension_semantics = [#tpu.dimension_semantics<parallel>], iteration_bounds = array<i64: 1>, scalar_prefetch = 0 : i64, scratch_operands = 0 : i64, tpu.core_type = #tpu.core_type<tc>, window_params = [{transform_indices = @transform_0, window_bounds = array<i64: 16, 896>}, {pipeline_mode = #tpu.pipeline_mode<synchronous>, transform_indices = @transform_1, window_bounds = array<i64: 896, 896>}, {pipeline_mode = #tpu.pipeline_mode<synchronous>, transform_indices = @transform_2, window_bounds = array<i64: 1, 896>}, {pipeline_mode = #tpu.pipeline_mode<synchronous>, transform_indices = @transform_3, window_bounds = array<i64: 896, 896>}, {pipeline_mode = #tpu.pipeline_mode<synchronous>, transform_indices = @transform_4, window_bounds = array<i64: 1, 896>}, {transform_indices = @transform_5, window_bounds = array<i64: 16, 896>}]} {
    %c0 = arith.constant 0 : index
    %c0_0 = arith.constant 0 : index
    %0 = vector.load %arg1[%c0, %c0_0] : memref<16x896xf32, #tpu.memory_space<vmem>>, vector<16x896xf32>
    %c0_1 = arith.constant 0 : index
    %c0_2 = arith.constant 0 : index
    %1 = vector.load %arg2[%c0_1, %c0_2] : memref<896x896xf32, #tpu.memory_space<vmem>>, vector<896x896xf32>
    %cst = arith.constant dense<0.000000e+00> : vector<16x896xf32>
    %2 = tpu.matmul %0, %1, %cst {dimension_numbers = #tpu.dot_dimension_numbers<[1], [0], [0], [1], [0, 0, 1, 1], [], []>} : vector<16x896xf32>, vector<896x896xf32>, vector<16x896xf32> -> vector<16x896xf32>
    %c0_3 = arith.constant 0 : index
    %c0_4 = arith.constant 0 : index
    %3 = vector.load %arg3[%c0_3, %c0_4] : memref<1x896xf32, #tpu.memory_space<vmem>>, vector<1x896xf32>
    %4 = vector.broadcast %3 : vector<1x896xf32> to vector<16x896xf32>
    %5 = arith.addf %2, %4 : vector<16x896xf32>
    %cst_5 = arith.constant 0.000000e+00 : f32
    %6 = vector.broadcast %cst_5 : f32 to vector<16x896xf32>
    %7 = arith.maximumf %5, %6 : vector<16x896xf32>
    %c0_6 = arith.constant 0 : index
    %c0_7 = arith.constant 0 : index
    %8 = vector.load %arg4[%c0_6, %c0_7] : memref<896x896xf32, #tpu.memory_space<vmem>>, vector<896x896xf32>
    %cst_8 = arith.constant dense<0.000000e+00> : vector<16x896xf32>
    %9 = tpu.matmul %7, %8, %cst_8 {dimension_numbers = #tpu.dot_dimension_numbers<[1], [0], [0], [1], [0, 0, 1, 1], [], []>} : vector<16x896xf32>, vector<896x896xf32>, vector<16x896xf32> -> vector<16x896xf32>
    %c0_9 = arith.constant 0 : index
    %c0_10 = arith.constant 0 : index
    %10 = vector.load %arg5[%c0_9, %c0_10] : memref<1x896xf32, #tpu.memory_space<vmem>>, vector<1x896xf32>
    %11 = vector.broadcast %10 : vector<1x896xf32> to vector<16x896xf32>
    %12 = arith.addf %9, %11 : vector<16x896xf32>
    %cst_11 = arith.constant 0.000000e+00 : f32
    %13 = vector.broadcast %cst_11 : f32 to vector<16x896xf32>
    %14 = arith.maximumf %12, %13 : vector<16x896xf32>
    %c0_12 = arith.constant 0 : index
    %c0_13 = arith.constant 0 : index
    %15 = vector.load %arg6[%c0_12, %c0_13] : memref<16x896xf32, #tpu.memory_space<vmem>>, vector<16x896xf32>
    tpu.vector_store %arg6[%c0_12, %c0_13], %14 {strides = array<i32>} : memref<16x896xf32, #tpu.memory_space<vmem>>, vector<16x896xf32>,
    return
  }
  func.func @transform_0(%arg0: i32) -> (i32, i32) {
    %c0_i32 = arith.constant 0 : i32
    %c0_i32_0 = arith.constant 0 : i32
    return %arg0, %c0_i32 : i32, i32
  }
  func.func @transform_1(%arg0: i32) -> (i32, i32) {
    %c0_i32 = arith.constant 0 : i32
    %c0_i32_0 = arith.constant 0 : i32
    %c0_i32_1 = arith.constant 0 : i32
    return %c0_i32, %c0_i32_0 : i32, i32
  }
  func.func @transform_2(%arg0: i32) -> (i32, i32) {
    %c0_i32 = arith.constant 0 : i32
    %c0_i32_0 = arith.constant 0 : i32
    %c0_i32_1 = arith.constant 0 : i32
    return %c0_i32, %c0_i32_0 : i32, i32
  }
  func.func @transform_3(%arg0: i32) -> (i32, i32) {
    %c0_i32 = arith.constant 0 : i32
    %c0_i32_0 = arith.constant 0 : i32
    %c0_i32_1 = arith.constant 0 : i32
    return %c0_i32, %c0_i32_0 : i32, i32
  }
  func.func @transform_4(%arg0: i32) -> (i32, i32) {
    %c0_i32 = arith.constant 0 : i32
    %c0_i32_0 = arith.constant 0 : i32
    %c0_i32_1 = arith.constant 0 : i32
    return %c0_i32, %c0_i32_0 : i32, i32
  }
  func.func @transform_5(%arg0: i32) -> (i32, i32) {
    %c0_i32 = arith.constant 0 : i32
    %c0_i32_0 = arith.constant 0 : i32
    return %arg0, %c0_i32 : i32, i32
  }
}

</mosaic_0001>

<llo_original>
// kernel: autoencoder_forward.1
$region0: #{autoencoder_forward.1}
  #allocation0 [shape = 'u32[]', space=smem, size = 0x4, offset = 0x4, fixed_abs, tag = 'smem constant byte address 0x4 - core index']
  #allocation1 [shape = 'u32[72,128]{1,0:T(1,128)}', space=vmem, size = 0x9000, scoped, tag = 'internal scratch']
  %s0 = inlined_call_operand.vmem [shape: f32[16,896], index: 0, kind: input, shape index: {}]
  %s1 = inlined_call_operand.vmem [shape: f32[896,896], index: 1, kind: input, shape index: {}]
  %s2 = inlined_call_operand.vmem [shape: f32[1,896], index: 2, kind: input, shape index: {}]
  %s3 = inlined_call_operand.vmem [shape: f32[896,896], index: 3, kind: input, shape index: {}]
  %s4 = inlined_call_operand.vmem [shape: f32[1,896], index: 4, kind: input, shape index: {}]
  %s5 = inlined_call_operand.hbm [shape: f32[16,896], index: 5, kind: output, shape index: {}]
  %s6 = sld [smem:[#allocation0]]
  $region30: #{autoencoder_forward.1} parent=0
    _
  %s8 = ssub.s32 1, %s6
  %s9 = scalar_select 0, %s8, %s6
  $region1: #{autoencoder_forward.1} parent=0
    #allocation2 [shape = 'u8[57344]{0}', space=vmem, size = 0xe000, scoped, tag = 'output window, operand 0, single buffered']
    #allocation3 [shape = 's32[1]{0}', space=sflag, size = 0x4, scoped, tag = 'scoped memory for autoencoder_forward.1']
    %10 = vsyncpa [#allocation3], 0
    // Predicated region
    $region2: #{autoencoder_forward.1} parent=1 // pred_check
      _
    $region3: #{autoencoder_forward.1} parent=1 // pred_check_branch
      %12 = sbr.rel (0) target = $region5
    $region4: #{autoencoder_forward.1} parent=1 // pred_region
      _
    $region5: #{autoencoder_forward.1} parent=1 // pred_fallthru
      _
    // Predicated region
    $region6: #{autoencoder_forward.1} parent=1 // pred_check
      _
    $region7: #{autoencoder_forward.1} parent=1 // pred_check_branch
      %14 = sbr.rel (0) target = $region9
    $region8: #{autoencoder_forward.1} parent=1 // pred_region
      _
    $region9: #{autoencoder_forward.1} parent=1 // pred_fallthru
      _
    // Predicated region
    $region10: #{autoencoder_forward.1} parent=1 // pred_check
      _
    $region11: #{autoencoder_forward.1} parent=1 // pred_check_branch
      %16 = sbr.rel (0) target = $region13
    $region12: #{autoencoder_forward.1} parent=1 // pred_region
      _
    $region13: #{autoencoder_forward.1} parent=1 // pred_fallthru
      _
    // Predicated region
    $region14: #{autoencoder_forward.1} parent=1 // pred_check
      _
    $region15: #{autoencoder_forward.1} parent=1 // pred_check_branch
      %18 = sbr.rel (0) target = $region17
    $region16: #{autoencoder_forward.1} parent=1 // pred_region
      _
    $region17: #{autoencoder_forward.1} parent=1 // pred_fallthru
      _
    // Predicated region
    $region18: #{autoencoder_forward.1} parent=1 // pred_check
      _
    $region19: #{autoencoder_forward.1} parent=1 // pred_check_branch
      %20 = sbr.rel (0) target = $region21
    $region20: #{autoencoder_forward.1} parent=1 // pred_region
      _
    $region21: #{autoencoder_forward.1} parent=1 // pred_fallthru
      _
    %v21 = vld [vmem:[%s0] sm:$0xff]
    %v22 = vld [vmem:[%s0 + $0x8] sm:$0xff]
    %v23 = vld [vmem:[%s0 + $0x10] sm:$0xff]
    %v24 = vld [vmem:[%s0 + $0x18] sm:$0xff]
    %v25 = vld [vmem:[%s0 + $0x20] sm:$0xff]
    %v26 = vld [vmem:[%s0 + $0x28] sm:$0xff]
    %v27 = vld [vmem:[%s0 + $0x30] sm:$0xff]
    %v28 = vld [vmem:[%s0 + $0x38] sm:$0xff]
    %v29 = vld [vmem:[%s0 + $0x40] sm:$0xff]
    %v30 = vld [vmem:[%s0 + $0x48] sm:$0xff]
    %v31 = vld [vmem:[%s0 + $0x50] sm:$0xff]
    %v32 = vld [vmem:[%s0 + $0x58] sm:$0xff]
    %v33 = vld [vmem:[%s0 + $0x60] sm:$0xff]
    %v34 = vld [vmem:[%s0 + $0x68] sm:$0xff]
    %v35 = vld [vmem:[%s1] sm:$0xff]
    %v36 = vld [vmem:[%s1 + $0x8] sm:$0xff]
    %v37 = vld [vmem:[%s1 + $0x10] sm:$0xff]
    %v38 = vld [vmem:[%s1 + $0x18] sm:$0xff]
    %v39 = vld [vmem:[%s1 + $0x20] sm:$0xff]
    %v40 = vld [vmem:[%s1 + $0x28] sm:$0xff]
    %v41 = vld [vmem:[%s1 + $0x30] sm:$0xff]
    %v42 = vld [vmem:[%s1 + $0x38] sm:$0xff]
    %v43 = vld [vmem:[%s1 + $0x40] sm:$0xff]
    %v44 = vld [vmem:[%s1 + $0x48] sm:$0xff]
    %v45 = vld [vmem:[%s1 + $0x50] sm:$0xff]
    %v46 = vld [vmem:[%s1 + $0x58] sm:$0xff]
    %v47 = vld [vmem:[%s1 + $0x60] sm:$0xff]
    %v48 = vld [vmem:[%s1 + $0x68] sm:$0xff]
    %v49 = vld [vmem:[%s1 + $0x70] sm:$0xff]
    %v50 = vld [vmem:[%s1 + $0x78] sm:$0xff]
    %v51 = vld [vmem:[%s1 + $0x80] sm:$0xff]
    %v52 = vld [vmem:[%s1 + $0x88] sm:$0xff]
    %v53 = vld [vmem:[%s1 + $0x90] sm:$0xff]
    %v54 = vld [vmem:[%s1 + $0x98] sm:$0xff]
    %v55 = vld [vmem:[%s1 + $0xa0] sm:$0xff]
    %v56 = vld [vmem:[%s1 + $0xa8] sm:$0xff]
    %v57 = vld [vmem:[%s1 + $0xb0] sm:$0xff]
    %v58 = vld [vmem:[%s1 + $0xb8] sm:$0xff]
    %v59 = vld [vmem:[%s1 + $0xc0] sm:$0xff]
    %v60 = vld [vmem:[%s1 + $0xc8] sm:$0xff]
    %v61 = vld [vmem:[%s1 + $0xd0] sm:$0xff]
    %v62 = vld [vmem:[%s1 + $0xd8] sm:$0xff]
    %v63 = vld [vmem:[%s1 + $0xe0] sm:$0xff]
    %v64 = vld [vmem:[%s1 + $0xe8] sm:$0xff]
    %v65 = vld [vmem:[%s1 + $0xf0] sm:$0xff]
    %v66 = vld [vmem:[%s1 + $0xf8] sm:$0xff]
    %v67 = vld [vmem:[%s1 + $0x100] sm:$0xff]
    %v68 = vld [vmem:[%s1 + $0x108] sm:$0xff]
    %v69 = vld [vmem:[%s1 + $0x110] sm:$0xff]
    %v70 = vld [vmem:[%s1 + $0x118] sm:$0xff]
    %v71 = vld [vmem:[%s1 + $0x120] sm:$0xff]
    %v72 = vld [vmem:[%s1 + $0x128] sm:$0xff]
    %v73 = vld [vmem:[%s1 + $0x130] sm:$0xff]
    %v74 = vld [vmem:[%s1 + $0x138] sm:$0xff]
    %v75 = vld [vmem:[%s1 + $0x140] sm:$0xff]
    %v76 = vld [vmem:[%s1 + $0x148] sm:$0xff]
    %v77 = vld [vmem:[%s1 + $0x150] sm:$0xff]
    %v78 = vld [vmem:[%s1 + $0x158] sm:$0xff]
    %v79 = vld [vmem:[%s1 + $0x160] sm:$0xff]
    %v80 = vld [vmem:[%s1 + $0x168] sm:$0xff]
    %v81 = vld [vmem:[%s1 + $0x170] sm:$0xff]
    %v82 = vld [vmem:[%s1 + $0x178] sm:$0xff]
    %v83 = vld [vmem:[%s1 + $0x180] sm:$0xff]
    %v84 = vld [vmem:[%s1 + $0x188] sm:$0xff]
    %v85 = vld [vmem:[%s1 + $0x190] sm:$0xff]
    %v86 = vld [vmem:[%s1 + $0x198] sm:$0xff]
    %v87 = vld [vmem:[%s1 + $0x1a0] sm:$0xff]
    %v88 = vld [vmem:[%s1 + $0x1a8] sm:$0xff]
    %v89 = vld [vmem:[%s1 + $0x1b0] sm:$0xff]
    %v90 = vld [vmem:[%s1 + $0x1b8] sm:$0xff]
    %v91 = vld [vmem:[%s1 + $0x1c0] sm:$0xff]
    %v92 = vld [vmem:[%s1 + $0x1c8] sm:$0xff]
    %v93 = vld [vmem:[%s1 + $0x1d0] sm:$0xff]
    %v94 = vld [vmem:[%s1 + $0x1d8] sm:$0xff]
    %v95 = vld [vmem:[%s1 + $0x1e0] sm:$0xff]
    %v96 = vld [vmem:[%s1 + $0x1e8] sm:$0xff]
    %v97 = vld [vmem:[%s1 + $0x1f0] sm:$0xff]
    %v98 = vld [vmem:[%s1 + $0x1f8] sm:$0xff]
    %v99 = vld [vmem:[%s1 + $0x200] sm:$0xff]
    %v100 = vld [vmem:[%s1 + $0x208] sm:$0xff]
    %v101 = vld [vmem:[%s1 + $0x210] sm:$0xff]
    %v102 = vld [vmem:[%s1 + $0x218] sm:$0xff]
    %v103 = vld [vmem:[%s1 + $0x220] sm:$0xff]
    %v104 = vld [vmem:[%s1 + $0x228] sm:$0xff]
    %v105 = vld [vmem:[%s1 + $0x230] sm:$0xff]
    %v106 = vld [vmem:[%s1 + $0x238] sm:$0xff]
    %v107 = vld [vmem:[%s1 + $0x240] sm:$0xff]
    %v108 = vld [vmem:[%s1 + $0x248] sm:$0xff]
    %v109 = vld [vmem:[%s1 + $0x250] sm:$0xff]
    %v110 = vld [vmem:[%s1 + $0x258] sm:$0xff]
    %v111 = vld [vmem:[%s1 + $0x260] sm:$0xff]
    %v112 = vld [vmem:[%s1 + $0x268] sm:$0xff]
    %v113 = vld [vmem:[%s1 + $0x270] sm:$0xff]
    %v114 = vld [vmem:[%s1 + $0x278] sm:$0xff]
    %v115 = vld [vmem:[%s1 + $0x280] sm:$0xff]
    %v116 = vld [vmem:[%s1 + $0x288] sm:$0xff]
    %v117 = vld [vmem:[%s1 + $0x290] sm:$0xff]
    %v118 = vld [vmem:[%s1 + $0x298] sm:$0xff]
    %v119 = vld [vmem:[%s1 + $0x2a0] sm:$0xff]
    %v120 = vld [vmem:[%s1 + $0x2a8] sm:$0xff]
    %v121 = vld [vmem:[%s1 + $0x2b0] sm:$0xff]
    %v122 = vld [vmem:[%s1 + $0x2b8] sm:$0xff]
    %v123 = vld [vmem:[%s1 + $0x2c0] sm:$0xff]
    %v124 = vld [vmem:[%s1 + $0x2c8] sm:$0xff]
    %v125 = vld [vmem:[%s1 + $0x2d0] sm:$0xff]
    %v126 = vld [vmem:[%s1 + $0x2d8] sm:$0xff]
    %v127 = vld [vmem:[%s1 + $0x2e0] sm:$0xff]
    %v128 = vld [vmem:[%s1 + $0x2e8] sm:$0xff]
    %v129 = vld [vmem:[%s1 + $0x2f0] sm:$0xff]
    %v130 = vld [vmem:[%s1 + $0x2f8] sm:$0xff]
    %v131 = vld [vmem:[%s1 + $0x300] sm:$0xff]
    %v132 = vld [vmem:[%s1 + $0x308] sm:$0xff]
    %v133 = vld [vmem:[%s1 + $0x310] sm:$0xff]
    %v134 = vld [vmem:[%s1 + $0x318] sm:$0xff]
    %v135 = vld [vmem:[%s1 + $0x320] sm:$0xff]
    %v136 = vld [vmem:[%s1 + $0x328] sm:$0xff]
    %v137 = vld [vmem:[%s1 + $0x330] sm:$0xff]
    %v138 = vld [vmem:[%s1 + $0x338] sm:$0xff]
    %v139 = vld [vmem:[%s1 + $0x340] sm:$0xff]
    %v140 = vld [vmem:[%s1 + $0x348] sm:$0xff]
    %v141 = vld [vmem:[%s1 + $0x350] sm:$0xff]
    %v142 = vld [vmem:[%s1 + $0x358] sm:$0xff]
    %v143 = vld [vmem:[%s1 + $0x360] sm:$0xff]
    %v144 = vld [vmem:[%s1 + $0x368] sm:$0xff]
    %v145 = vld [vmem:[%s1 + $0x370] sm:$0xff]
    %v146 = vld [vmem:[%s1 + $0x378] sm:$0xff]
    %v147 = vld [vmem:[%s1 + $0x380] sm:$0xff]
    %v148 = vld [vmem:[%s1 + $0x388] sm:$0xff]
    %v149 = vld [vmem:[%s1 + $0x390] sm:$0xff]
    %v150 = vld [vmem:[%s1 + $0x398] sm:$0xff]
    %v151 = vld [vmem:[%s1 + $0x3a0] sm:$0xff]
    %v152 = vld [vmem:[%s1 + $0x3a8] sm:$0xff]
    %v153 = vld [vmem:[%s1 + $0x3b0] sm:$0xff]
    %v154 = vld [vmem:[%s1 + $0x3b8] sm:$0xff]
    %v155 = vld [vmem:[%s1 + $0x3c0] sm:$0xff]
    %v156 = vld [vmem:[%s1 + $0x3c8] sm:$0xff]
    %v157 = vld [vmem:[%s1 + $0x3d0] sm:$0xff]
    %v158 = vld [vmem:[%s1 + $0x3d8] sm:$0xff]
    %v159 = vld [vmem:[%s1 + $0x3e0] sm:$0xff]
    %v160 = vld [vmem:[%s1 + $0x3e8] sm:$0xff]
    %v161 = vld [vmem:[%s1 + $0x3f0] sm:$0xff]
    %v162 = vld [vmem:[%s1 + $0x3f8] sm:$0xff]
    %v163 = vld [vmem:[%s1 + $0x400] sm:$0xff]
    %v164 = vld [vmem:[%s1 + $0x408] sm:$0xff]
    %v165 = vld [vmem:[%s1 + $0x410] sm:$0xff]
    %v166 = vld [vmem:[%s1 + $0x418] sm:$0xff]
    %v167 = vld [vmem:[%s1 + $0x420] sm:$0xff]
    %v168 = vld [vmem:[%s1 + $0x428] sm:$0xff]
    %v169 = vld [vmem:[%s1 + $0x430] sm:$0xff]
    %v170 = vld [vmem:[%s1 + $0x438] sm:$0xff]
    %v171 = vld [vmem:[%s1 + $0x440] sm:$0xff]
    %v172 = vld [vmem:[%s1 + $0x448] sm:$0xff]
    %v173 = vld [vmem:[%s1 + $0x450] sm:$0xff]
    %v174 = vld [vmem:[%s1 + $0x458] sm:$0xff]
    %v175 = vld [vmem:[%s1 + $0x460] sm:$0xff]
    %v176 = vld [vmem:[%s1 + $0x468] sm:$0xff]
    %v177 = vld [vmem:[%s1 + $0x470] sm:$0xff]
    %v178 = vld [vmem:[%s1 + $0x478] sm:$0xff]
    %v179 = vld [vmem:[%s1 + $0x480] sm:$0xff]
    %v180 = vld [vmem:[%s1 + $0x488] sm:$0xff]
    %v181 = vld [vmem:[%s1 + $0x490] sm:$0xff]
    %v182 = vld [vmem:[%s1 + $0x498] sm:$0xff]
    %v183 = vld [vmem:[%s1 + $0x4a0] sm:$0xff]
    %v184 = vld [vmem:[%s1 + $0x4a8] sm:$0xff]
    %v185 = vld [vmem:[%s1 + $0x4b0] sm:$0xff]
    %v186 = vld [vmem:[%s1 + $0x4b8] sm:$0xff]
    %v187 = vld [vmem:[%s1 + $0x4c0] sm:$0xff]
    %v188 = vld [vmem:[%s1 + $0x4c8] sm:$0xff]
    %v189 = vld [vmem:[%s1 + $0x4d0] sm:$0xff]
    %v190 = vld [vmem:[%s1 + $0x4d8] sm:$0xff]
    %v191 = vld [vmem:[%s1 + $0x4e0] sm:$0xff]
    %v192 = vld [vmem:[%s1 + $0x4e8] sm:$0xff]
    %v193 = vld [vmem:[%s1 + $0x4f0] sm:$0xff]
    %v194 = vld [vmem:[%s1 + $0x4f8] sm:$0xff]
    %v195 = vld [vmem:[%s1 + $0x500] sm:$0xff]
    %v196 = vld [vmem:[%s1 + $0x508] sm:$0xff]
    %v197 = vld [vmem:[%s1 + $0x510] sm:$0xff]
    %v198 = vld [vmem:[%s1 + $0x518] sm:$0xff]
    %v199 = vld [vmem:[%s1 + $0x520] sm:$0xff]
    %v200 = vld [vmem:[%s1 + $0x528] sm:$0xff]
    %v201 = vld [vmem:[%s1 + $0x530] sm:$0xff]
    %v202 = vld [vmem:[%s1 + $0x538] sm:$0xff]
    %v203 = vld [vmem:[%s1 + $0x540] sm:$0xff]
    %v204 = vld [vmem:[%s1 + $0x548] sm:$0xff]
    %v205 = vld [vmem:[%s1 + $0x550] sm:$0xff]
    %v206 = vld [vmem:[%s1 + $0x558] sm:$0xff]
    %v207 = vld [vmem:[%s1 + $0x560] sm:$0xff]
    %v208 = vld [vmem:[%s1 + $0x568] sm:$0xff]
    %v209 = vld [vmem:[%s1 + $0x570] sm:$0xff]
    %v210 = vld [vmem:[%s1 + $0x578] sm:$0xff]
    %v211 = vld [vmem:[%s1 + $0x580] sm:$0xff]
    %v212 = vld [vmem:[%s1 + $0x588] sm:$0xff]
    %v213 = vld [vmem:[%s1 + $0x590] sm:$0xff]
    %v214 = vld [vmem:[%s1 + $0x598] sm:$0xff]
    %v215 = vld [vmem:[%s1 + $0x5a0] sm:$0xff]
    %v216 = vld [vmem:[%s1 + $0x5a8] sm:$0xff]
    %v217 = vld [vmem:[%s1 + $0x5b0] sm:$0xff]
    %v218 = vld [vmem:[%s1 + $0x5b8] sm:$0xff]
    %v219 = vld [vmem:[%s1 + $0x5c0] sm:$0xff]
    %v220 = vld [vmem:[%s1 + $0x5c8] sm:$0xff]
    %v221 = vld [vmem:[%s1 + $0x5d0] sm:$0xff]
    %v222 = vld [vmem:[%s1 + $0x5d8] sm:$0xff]
    %v223 = vld [vmem:[%s1 + $0x5e0] sm:$0xff]
    %v224 = vld [vmem:[%s1 + $0x5e8] sm:$0xff]
    %v225 = vld [vmem:[%s1 + $0x5f0] sm:$0xff]
    %v226 = vld [vmem:[%s1 + $0x5f8] sm:$0xff]
    %v227 = vld [vmem:[%s1 + $0x600] sm:$0xff]
    %v228 = vld [vmem:[%s1 + $0x608] sm:$0xff]
    %v229 = vld [vmem:[%s1 + $0x610] sm:$0xff]
    %v230 = vld [vmem:[%s1 + $0x618] sm:$0xff]
    %v231 = vld [vmem:[%s1 + $0x620] sm:$0xff]
    %v232 = vld [vmem:[%s1 + $0x628] sm:$0xff]
    %v233 = vld [vmem:[%s1 + $0x630] sm:$0xff]
    %v234 = vld [vmem:[%s1 + $0x638] sm:$0xff]
    %v235 = vld [vmem:[%s1 + $0x640] sm:$0xff]
    %v236 = vld [vmem:[%s1 + $0x648] sm:$0xff]
    %v237 = vld [vmem:[%s1 + $0x650] sm:$0xff]
    %v238 = vld [vmem:[%s1 + $0x658] sm:$0xff]
    %v239 = vld [vmem:[%s1 + $0x660] sm:$0xff]
    %v240 = vld [vmem:[%s1 + $0x668] sm:$0xff]
    %v241 = vld [vmem:[%s1 + $0x670] sm:$0xff]
    %v242 = vld [vmem:[%s1 + $0x678] sm:$0xff]
    %v243 = vld [vmem:[%s1 + $0x680] sm:$0xff]
    %v244 = vld [vmem:[%s1 + $0x688] sm:$0xff]
    %v245 = vld [vmem:[%s1 + $0x690] sm:$0xff]
    %v246 = vld [vmem:[%s1 + $0x698] sm:$0xff]
    %v247 = vld [vmem:[%s1 + $0x6a0] sm:$0xff]
    %v248 = vld [vmem:[%s1 + $0x6a8] sm:$0xff]
    %v249 = vld [vmem:[%s1 + $0x6b0] sm:$0xff]
    %v250 = vld [vmem:[%s1 + $0x6b8] sm:$0xff]
    %v251 = vld [vmem:[%s1 + $0x6c0] sm:$0xff]
    %v252 = vld [vmem:[%s1 + $0x6c8] sm:$0xff]
    %v253 = vld [vmem:[%s1 + $0x6d0] sm:$0xff]
    %v254 = vld [vmem:[%s1 + $0x6d8] sm:$0xff]
    %v255 = vld [vmem:[%s1 + $0x6e0] sm:$0xff]
    %v256 = vld [vmem:[%s1 + $0x6e8] sm:$0xff]
    %v257 = vld [vmem:[%s1 + $0x6f0] sm:$0xff]
    %v258 = vld [vmem:[%s1 + $0x6f8] sm:$0xff]
    %v259 = vld [vmem:[%s1 + $0x700] sm:$0xff]
    %v260 = vld [vmem:[%s1 + $0x708] sm:$0xff]
    %v261 = vld [vmem:[%s1 + $0x710] sm:$0xff]
    %v262 = vld [vmem:[%s1 + $0x718] sm:$0xff]
    %v263 = vld [vmem:[%s1 + $0x720] sm:$0xff]
    %v264 = vld [vmem:[%s1 + $0x728] sm:$0xff]
    %v265 = vld [vmem:[%s1 + $0x730] sm:$0xff]
    %v266 = vld [vmem:[%s1 + $0x738] sm:$0xff]
    %v267 = vld [vmem:[%s1 + $0x740] sm:$0xff]
    %v268 = vld [vmem:[%s1 + $0x748] sm:$0xff]
    %v269 = vld [vmem:[%s1 + $0x750] sm:$0xff]
    %v270 = vld [vmem:[%s1 + $0x758] sm:$0xff]
    %v271 = vld [vmem:[%s1 + $0x760] sm:$0xff]
    %v272 = vld [vmem:[%s1 + $0x768] sm:$0xff]
    %v273 = vld [vmem:[%s1 + $0x770] sm:$0xff]
    %v274 = vld [vmem:[%s1 + $0x778] sm:$0xff]
    %v275 = vld [vmem:[%s1 + $0x780] sm:$0xff]
    %v276 = vld [vmem:[%s1 + $0x788] sm:$0xff]
    %v277 = vld [vmem:[%s1 + $0x790] sm:$0xff]
    %v278 = vld [vmem:[%s1 + $0x798] sm:$0xff]
    %v279 = vld [vmem:[%s1 + $0x7a0] sm:$0xff]
    %v280 = vld [vmem:[%s1 + $0x7a8] sm:$0xff]
    %v281 = vld [vmem:[%s1 + $0x7b0] sm:$0xff]
    %v282 = vld [vmem:[%s1 + $0x7b8] sm:$0xff]
    %v283 = vld [vmem:[%s1 + $0x7c0] sm:$0xff]
    %v284 = vld [vmem:[%s1 + $0x7c8] sm:$0xff]
    %v285 = vld [vmem:[%s1 + $0x7d0] sm:$0xff]
    %v286 = vld [vmem:[%s1 + $0x7d8] sm:$0xff]
    %v287 = vld [vmem:[%s1 + $0x7e0] sm:$0xff]
    %v288 = vld [vmem:[%s1 + $0x7e8] sm:$0xff]
    %v289 = vld [vmem:[%s1 + $0x7f0] sm:$0xff]
    %v290 = vld [vmem:[%s1 + $0x7f8] sm:$0xff]
    %v291 = vld [vmem:[%s1 + $0x800] sm:$0xff]
    %v292 = vld [vmem:[%s1 + $0x808] sm:$0xff]
    %v293 = vld [vmem:[%s1 + $0x810] sm:$0xff]
    %v294 = vld [vmem:[%s1 + $0x818] sm:$0xff]
    %v295 = vld [vmem:[%s1 + $0x820] sm:$0xff]
    %v296 = vld [vmem:[%s1 + $0x828] sm:$0xff]
    %v297 = vld [vmem:[%s1 + $0x830] sm:$0xff]
    %v298 = vld [vmem:[%s1 + $0x838] sm:$0xff]
    %v299 = vld [vmem:[%s1 + $0x840] sm:$0xff]
    %v300 = vld [vmem:[%s1 + $0x848] sm:$0xff]
    %v301 = vld [vmem:[%s1 + $0x850] sm:$0xff]
    %v302 = vld [vmem:[%s1 + $0x858] sm:$0xff]
    %v303 = vld [vmem:[%s1 + $0x860] sm:$0xff]
    %v304 = vld [vmem:[%s1 + $0x868] sm:$0xff]
    %v305 = vld [vmem:[%s1 + $0x870] sm:$0xff]
    %v306 = vld [vmem:[%s1 + $0x878] sm:$0xff]
    %v307 = vld [vmem:[%s1 + $0x880] sm:$0xff]
    %v308 = vld [vmem:[%s1 + $0x888] sm:$0xff]
    %v309 = vld [vmem:[%s1 + $0x890] sm:$0xff]
    %v310 = vld [vmem:[%s1 + $0x898] sm:$0xff]
    %v311 = vld [vmem:[%s1 + $0x8a0] sm:$0xff]
    %v312 = vld [vmem:[%s1 + $0x8a8] sm:$0xff]
    %v313 = vld [vmem:[%s1 + $0x8b0] sm:$0xff]
    %v314 = vld [vmem:[%s1 + $0x8b8] sm:$0xff]
    %v315 = vld [vmem:[%s1 + $0x8c0] sm:$0xff]
    %v316 = vld [vmem:[%s1 + $0x8c8] sm:$0xff]
    %v317 = vld [vmem:[%s1 + $0x8d0] sm:$0xff]
    %v318 = vld [vmem:[%s1 + $0x8d8] sm:$0xff]
    %v319 = vld [vmem:[%s1 + $0x8e0] sm:$0xff]
    %v320 = vld [vmem:[%s1 + $0x8e8] sm:$0xff]
    %v321 = vld [vmem:[%s1 + $0x8f0] sm:$0xff]
    %v322 = vld [vmem:[%s1 + $0x8f8] sm:$0xff]
    %v323 = vld [vmem:[%s1 + $0x900] sm:$0xff]
    %v324 = vld [vmem:[%s1 + $0x908] sm:$0xff]
    %v325 = vld [vmem:[%s1 + $0x910] sm:$0xff]
    %v326 = vld [vmem:[%s1 + $0x918] sm:$0xff]
    %v327 = vld [vmem:[%s1 + $0x920] sm:$0xff]
    %v328 = vld [vmem:[%s1 + $0x928] sm:$0xff]
    %v329 = vld [vmem:[%s1 + $0x930] sm:$0xff]
    %v330 = vld [vmem:[%s1 + $0x938] sm:$0xff]
    %v331 = vld [vmem:[%s1 + $0x940] sm:$0xff]
    %v332 = vld [vmem:[%s1 + $0x948] sm:$0xff]
    %v333 = vld [vmem:[%s1 + $0x950] sm:$0xff]
    %v334 = vld [vmem:[%s1 + $0x958] sm:$0xff]
    %v335 = vld [vmem:[%s1 + $0x960] sm:$0xff]
    %v336 = vld [vmem:[%s1 + $0x968] sm:$0xff]
    %v337 = vld [vmem:[%s1 + $0x970] sm:$0xff]
    %v338 = vld [vmem:[%s1 + $0x978] sm:$0xff]
    %v339 = vld [vmem:[%s1 + $0x980] sm:$0xff]
    %v340 = vld [vmem:[%s1 + $0x988] sm:$0xff]
    %v341 = vld [vmem:[%s1 + $0x990] sm:$0xff]
    %v342 = vld [vmem:[%s1 + $0x998] sm:$0xff]
    %v343 = vld [vmem:[%s1 + $0x9a0] sm:$0xff]
    %v344 = vld [vmem:[%s1 + $0x9a8] sm:$0xff]
    %v345 = vld [vmem:[%s1 + $0x9b0] sm:$0xff]
    %v346 = vld [vmem:[%s1 + $0x9b8] sm:$0xff]
    %v347 = vld [vmem:[%s1 + $0x9c0] sm:$0xff]
    %v348 = vld [vmem:[%s1 + $0x9c8] sm:$0xff]
    %v349 = vld [vmem:[%s1 + $0x9d0] sm:$0xff]
    %v350 = vld [vmem:[%s1 + $0x9d8] sm:$0xff]
    %v351 = vld [vmem:[%s1 + $0x9e0] sm:$0xff]
    %v352 = vld [vmem:[%s1 + $0x9e8] sm:$0xff]
    %v353 = vld [vmem:[%s1 + $0x9f0] sm:$0xff]
    %v354 = vld [vmem:[%s1 + $0x9f8] sm:$0xff]
    %v355 = vld [vmem:[%s1 + $0xa00] sm:$0xff]
    %v356 = vld [vmem:[%s1 + $0xa08] sm:$0xff]
    %v357 = vld [vmem:[%s1 + $0xa10] sm:$0xff]
    %v358 = vld [vmem:[%s1 + $0xa18] sm:$0xff]
    %v359 = vld [vmem:[%s1 + $0xa20] sm:$0xff]
    %v360 = vld [vmem:[%s1 + $0xa28] sm:$0xff]
    %v361 = vld [vmem:[%s1 + $0xa30] sm:$0xff]
    %v362 = vld [vmem:[%s1 + $0xa38] sm:$0xff]
    %v363 = vld [vmem:[%s1 + $0xa40] sm:$0xff]
    %v364 = vld [vmem:[%s1 + $0xa48] sm:$0xff]
    %v365 = vld [vmem:[%s1 + $0xa50] sm:$0xff]
    %v366 = vld [vmem:[%s1 + $0xa58] sm:$0xff]
    %v367 = vld [vmem:[%s1 + $0xa60] sm:$0xff]
    %v368 = vld [vmem:[%s1 + $0xa68] sm:$0xff]
    %v369 = vld [vmem:[%s1 + $0xa70] sm:$0xff]
    %v370 = vld [vmem:[%s1 + $0xa78] sm:$0xff]
    %v371 = vld [vmem:[%s1 + $0xa80] sm:$0xff]
    %v372 = vld [vmem:[%s1 + $0xa88] sm:$0xff]
    %v373 = vld [vmem:[%s1 + $0xa90] sm:$0xff]
    %v374 = vld [vmem:[%s1 + $0xa98] sm:$0xff]
    %v375 = vld [vmem:[%s1 + $0xaa0] sm:$0xff]
    %v376 = vld [vmem:[%s1 + $0xaa8] sm:$0xff]
    %v377 = vld [vmem:[%s1 + $0xab0] sm:$0xff]
    %v378 = vld [vmem:[%s1 + $0xab8] sm:$0xff]
    %v379 = vld [vmem:[%s1 + $0xac0] sm:$0xff]
    %v380 = vld [vmem:[%s1 + $0xac8] sm:$0xff]
    %v381 = vld [vmem:[%s1 + $0xad0] sm:$0xff]
    %v382 = vld [vmem:[%s1 + $0xad8] sm:$0xff]
    %v383 = vld [vmem:[%s1 + $0xae0] sm:$0xff]
    %v384 = vld [vmem:[%s1 + $0xae8] sm:$0xff]
    %v385 = vld [vmem:[%s1 + $0xaf0] sm:$0xff]
    %v386 = vld [vmem:[%s1 + $0xaf8] sm:$0xff]
    %v387 = vld [vmem:[%s1 + $0xb00] sm:$0xff]
    %v388 = vld [vmem:[%s1 + $0xb08] sm:$0xff]
    %v389 = vld [vmem:[%s1 + $0xb10] sm:$0xff]
    %v390 = vld [vmem:[%s1 + $0xb18] sm:$0xff]
    %v391 = vld [vmem:[%s1 + $0xb20] sm:$0xff]
    %v392 = vld [vmem:[%s1 + $0xb28] sm:$0xff]
    %v393 = vld [vmem:[%s1 + $0xb30] sm:$0xff]
    %v394 = vld [vmem:[%s1 + $0xb38] sm:$0xff]
    %v395 = vld [vmem:[%s1 + $0xb40] sm:$0xff]
    %v396 = vld [vmem:[%s1 + $0xb48] sm:$0xff]
    %v397 = vld [vmem:[%s1 + $0xb50] sm:$0xff]
    %v398 = vld [vmem:[%s1 + $0xb58] sm:$0xff]
    %v399 = vld [vmem:[%s1 + $0xb60] sm:$0xff]
    %v400 = vld [vmem:[%s1 + $0xb68] sm:$0xff]
    %v401 = vld [vmem:[%s1 + $0xb70] sm:$0xff]
    %v402 = vld [vmem:[%s1 + $0xb78] sm:$0xff]
    %v403 = vld [vmem:[%s1 + $0xb80] sm:$0xff]
    %v404 = vld [vmem:[%s1 + $0xb88] sm:$0xff]
    %v405 = vld [vmem:[%s1 + $0xb90] sm:$0xff]
    %v406 = vld [vmem:[%s1 + $0xb98] sm:$0xff]
    %v407 = vld [vmem:[%s1 + $0xba0] sm:$0xff]
    %v408 = vld [vmem:[%s1 + $0xba8] sm:$0xff]
    %v409 = vld [vmem:[%s1 + $0xbb0] sm:$0xff]
    %v410 = vld [vmem:[%s1 + $0xbb8] sm:$0xff]
    %v411 = vld [vmem:[%s1 + $0xbc0] sm:$0xff]
    %v412 = vld [vmem:[%s1 + $0xbc8] sm:$0xff]
    %v413 = vld [vmem:[%s1 + $0xbd0] sm:$0xff]
    %v414 = vld [vmem:[%s1 + $0xbd8] sm:$0xff]
    %v415 = vld [vmem:[%s1 + $0xbe0] sm:$0xff]
    %v416 = vld [vmem:[%s1 + $0xbe8] sm:$0xff]
    %v417 = vld [vmem:[%s1 + $0xbf0] sm:$0xff]
    %v418 = vld [vmem:[%s1 + $0xbf8] sm:$0xff]
    %v419 = vld [vmem:[%s1 + $0xc00] sm:$0xff]
    %v420 = vld [vmem:[%s1 + $0xc08] sm:$0xff]
    %v421 = vld [vmem:[%s1 + $0xc10] sm:$0xff]
    %v422 = vld [vmem:[%s1 + $0xc18] sm:$0xff]
    %v423 = vld [vmem:[%s1 + $0xc20] sm:$0xff]
    %v424 = vld [vmem:[%s1 + $0xc28] sm:$0xff]
    %v425 = vld [vmem:[%s1 + $0xc30] sm:$0xff]
    %v426 = vld [vmem:[%s1 + $0xc38] sm:$0xff]
    %v427 = vld [vmem:[%s1 + $0xc40] sm:$0xff]
    %v428 = vld [vmem:[%s1 + $0xc48] sm:$0xff]
    %v429 = vld [vmem:[%s1 + $0xc50] sm:$0xff]
    %v430 = vld [vmem:[%s1 + $0xc58] sm:$0xff]
    %v431 = vld [vmem:[%s1 + $0xc60] sm:$0xff]
    %v432 = vld [vmem:[%s1 + $0xc68] sm:$0xff]
    %v433 = vld [vmem:[%s1 + $0xc70] sm:$0xff]
    %v434 = vld [vmem:[%s1 + $0xc78] sm:$0xff]
    %v435 = vld [vmem:[%s1 + $0xc80] sm:$0xff]
    %v436 = vld [vmem:[%s1 + $0xc88] sm:$0xff]
    %v437 = vld [vmem:[%s1 + $0xc90] sm:$0xff]
    %v438 = vld [vmem:[%s1 + $0xc98] sm:$0xff]
    %v439 = vld [vmem:[%s1 + $0xca0] sm:$0xff]
    %v440 = vld [vmem:[%s1 + $0xca8] sm:$0xff]
    %v441 = vld [vmem:[%s1 + $0xcb0] sm:$0xff]
    %v442 = vld [vmem:[%s1 + $0xcb8] sm:$0xff]
    %v443 = vld [vmem:[%s1 + $0xcc0] sm:$0xff]
    %v444 = vld [vmem:[%s1 + $0xcc8] sm:$0xff]
    %v445 = vld [vmem:[%s1 + $0xcd0] sm:$0xff]
    %v446 = vld [vmem:[%s1 + $0xcd8] sm:$0xff]
    %v447 = vld [vmem:[%s1 + $0xce0] sm:$0xff]
    %v448 = vld [vmem:[%s1 + $0xce8] sm:$0xff]
    %v449 = vld [vmem:[%s1 + $0xcf0] sm:$0xff]
    %v450 = vld [vmem:[%s1 + $0xcf8] sm:$0xff]
    %v451 = vld [vmem:[%s1 + $0xd00] sm:$0xff]
    %v452 = vld [vmem:[%s1 + $0xd08] sm:$0xff]
    %v453 = vld [vmem:[%s1 + $0xd10] sm:$0xff]
    %v454 = vld [vmem:[%s1 + $0xd18] sm:$0xff]
    %v455 = vld [vmem:[%s1 + $0xd20] sm:$0xff]
    %v456 = vld [vmem:[%s1 + $0xd28] sm:$0xff]
    %v457 = vld [vmem:[%s1 + $0xd30] sm:$0xff]
    %v458 = vld [vmem:[%s1 + $0xd38] sm:$0xff]
    %v459 = vld [vmem:[%s1 + $0xd40] sm:$0xff]
    %v460 = vld [vmem:[%s1 + $0xd48] sm:$0xff]
    %v461 = vld [vmem:[%s1 + $0xd50] sm:$0xff]
    %v462 = vld [vmem:[%s1 + $0xd58] sm:$0xff]
    %v463 = vld [vmem:[%s1 + $0xd60] sm:$0xff]
    %v464 = vld [vmem:[%s1 + $0xd68] sm:$0xff]
    %v465 = vld [vmem:[%s1 + $0xd70] sm:$0xff]
    %v466 = vld [vmem:[%s1 + $0xd78] sm:$0xff]
    %v467 = vld [vmem:[%s1 + $0xd80] sm:$0xff]
    %v468 = vld [vmem:[%s1 + $0xd88] sm:$0xff]
    %v469 = vld [vmem:[%s1 + $0xd90] sm:$0xff]
    %v470 = vld [vmem:[%s1 + $0xd98] sm:$0xff]
    %v471 = vld [vmem:[%s1 + $0xda0] sm:$0xff]
    %v472 = vld [vmem:[%s1 + $0xda8] sm:$0xff]
    %v473 = vld [vmem:[%s1 + $0xdb0] sm:$0xff]
    %v474 = vld [vmem:[%s1 + $0xdb8] sm:$0xff]
    %v475 = vld [vmem:[%s1 + $0xdc0] sm:$0xff]
    %v476 = vld [vmem:[%s1 + $0xdc8] sm:$0xff]
    %v477 = vld [vmem:[%s1 + $0xdd0] sm:$0xff]
    %v478 = vld [vmem:[%s1 + $0xdd8] sm:$0xff]
    %v479 = vld [vmem:[%s1 + $0xde0] sm:$0xff]
    %v480 = vld [vmem:[%s1 + $0xde8] sm:$0xff]
    %v481 = vld [vmem:[%s1 + $0xdf0] sm:$0xff]
    %v482 = vld [vmem:[%s1 + $0xdf8] sm:$0xff]
    %v483 = vld [vmem:[%s1 + $0xe00] sm:$0xff]
    %v484 = vld [vmem:[%s1 + $0xe08] sm:$0xff]
    %v485 = vld [vmem:[%s1 + $0xe10] sm:$0xff]
    %v486 = vld [vmem:[%s1 + $0xe18] sm:$0xff]
    %v487 = vld [vmem:[%s1 + $0xe20] sm:$0xff]
    %v488 = vld [vmem:[%s1 + $0xe28] sm:$0xff]
    %v489 = vld [vmem:[%s1 + $0xe30] sm:$0xff]
    %v490 = vld [vmem:[%s1 + $0xe38] sm:$0xff]
    %v491 = vld [vmem:[%s1 + $0xe40] sm:$0xff]
    %v492 = vld [vmem:[%s1 + $0xe48] sm:$0xff]
    %v493 = vld [vmem:[%s1 + $0xe50] sm:$0xff]
    %v494 = vld [vmem:[%s1 + $0xe58] sm:$0xff]
    %v495 = vld [vmem:[%s1 + $0xe60] sm:$0xff]
    %v496 = vld [vmem:[%s1 + $0xe68] sm:$0xff]
    %v497 = vld [vmem:[%s1 + $0xe70] sm:$0xff]
    %v498 = vld [vmem:[%s1 + $0xe78] sm:$0xff]
    %v499 = vld [vmem:[%s1 + $0xe80] sm:$0xff]
    %v500 = vld [vmem:[%s1 + $0xe88] sm:$0xff]
    %v501 = vld [vmem:[%s1 + $0xe90] sm:$0xff]
    %v502 = vld [vmem:[%s1 + $0xe98] sm:$0xff]
    %v503 = vld [vmem:[%s1 + $0xea0] sm:$0xff]
    %v504 = vld [vmem:[%s1 + $0xea8] sm:$0xff]
    %v505 = vld [vmem:[%s1 + $0xeb0] sm:$0xff]
    %v506 = vld [vmem:[%s1 + $0xeb8] sm:$0xff]
    %v507 = vld [vmem:[%s1 + $0xec0] sm:$0xff]
    %v508 = vld [vmem:[%s1 + $0xec8] sm:$0xff]
    %v509 = vld [vmem:[%s1 + $0xed0] sm:$0xff]
    %v510 = vld [vmem:[%s1 + $0xed8] sm:$0xff]
    %v511 = vld [vmem:[%s1 + $0xee0] sm:$0xff]
    %v512 = vld [vmem:[%s1 + $0xee8] sm:$0xff]
    %v513 = vld [vmem:[%s1 + $0xef0] sm:$0xff]
    %v514 = vld [vmem:[%s1 + $0xef8] sm:$0xff]
    %v515 = vld [vmem:[%s1 + $0xf00] sm:$0xff]
    %v516 = vld [vmem:[%s1 + $0xf08] sm:$0xff]
    %v517 = vld [vmem:[%s1 + $0xf10] sm:$0xff]
    %v518 = vld [vmem:[%s1 + $0xf18] sm:$0xff]
    %v519 = vld [vmem:[%s1 + $0xf20] sm:$0xff]
    %v520 = vld [vmem:[%s1 + $0xf28] sm:$0xff]
    %v521 = vld [vmem:[%s1 + $0xf30] sm:$0xff]
    %v522 = vld [vmem:[%s1 + $0xf38] sm:$0xff]
    %v523 = vld [vmem:[%s1 + $0xf40] sm:$0xff]
    %v524 = vld [vmem:[%s1 + $0xf48] sm:$0xff]
    %v525 = vld [vmem:[%s1 + $0xf50] sm:$0xff]
    %v526 = vld [vmem:[%s1 + $0xf58] sm:$0xff]
    %v527 = vld [vmem:[%s1 + $0xf60] sm:$0xff]
    %v528 = vld [vmem:[%s1 + $0xf68] sm:$0xff]
    %v529 = vld [vmem:[%s1 + $0xf70] sm:$0xff]
    %v530 = vld [vmem:[%s1 + $0xf78] sm:$0xff]
    %v531 = vld [vmem:[%s1 + $0xf80] sm:$0xff]
    %v532 = vld [vmem:[%s1 + $0xf88] sm:$0xff]
    %v533 = vld [vmem:[%s1 + $0xf90] sm:$0xff]
    %v534 = vld [vmem:[%s1 + $0xf98] sm:$0xff]
    %v535 = vld [vmem:[%s1 + $0xfa0] sm:$0xff]
    %v536 = vld [vmem:[%s1 + $0xfa8] sm:$0xff]
    %v537 = vld [vmem:[%s1 + $0xfb0] sm:$0xff]
    %v538 = vld [vmem:[%s1 + $0xfb8] sm:$0xff]
    %v539 = vld [vmem:[%s1 + $0xfc0] sm:$0xff]
    %v540 = vld [vmem:[%s1 + $0xfc8] sm:$0xff]
    %v541 = vld [vmem:[%s1 + $0xfd0] sm:$0xff]
    %v542 = vld [vmem:[%s1 + $0xfd8] sm:$0xff]
    %v543 = vld [vmem:[%s1 + $0xfe0] sm:$0xff]
    %v544 = vld [vmem:[%s1 + $0xfe8] sm:$0xff]
    %v545 = vld [vmem:[%s1 + $0xff0] sm:$0xff]
    %v546 = vld [vmem:[%s1 + $0xff8] sm:$0xff]
    %v547 = vld [vmem:[%s1 + $0x1000] sm:$0xff]
    %v548 = vld [vmem:[%s1 + $0x1008] sm:$0xff]
    %v549 = vld [vmem:[%s1 + $0x1010] sm:$0xff]
    %v550 = vld [vmem:[%s1 + $0x1018] sm:$0xff]
    %v551 = vld [vmem:[%s1 + $0x1020] sm:$0xff]
    %v552 = vld [vmem:[%s1 + $0x1028] sm:$0xff]
    %v553 = vld [vmem:[%s1 + $0x1030] sm:$0xff]
    %v554 = vld [vmem:[%s1 + $0x1038] sm:$0xff]
    %v555 = vld [vmem:[%s1 + $0x1040] sm:$0xff]
    %v556 = vld [vmem:[%s1 + $0x1048] sm:$0xff]
    %v557 = vld [vmem:[%s1 + $0x1050] sm:$0xff]
    %v558 = vld [vmem:[%s1 + $0x1058] sm:$0xff]
    %v559 = vld [vmem:[%s1 + $0x1060] sm:$0xff]
    %v560 = vld [vmem:[%s1 + $0x1068] sm:$0xff]
    %v561 = vld [vmem:[%s1 + $0x1070] sm:$0xff]
    %v562 = vld [vmem:[%s1 + $0x1078] sm:$0xff]
    %v563 = vld [vmem:[%s1 + $0x1080] sm:$0xff]
    %v564 = vld [vmem:[%s1 + $0x1088] sm:$0xff]
    %v565 = vld [vmem:[%s1 + $0x1090] sm:$0xff]
    %v566 = vld [vmem:[%s1 + $0x1098] sm:$0xff]
    %v567 = vld [vmem:[%s1 + $0x10a0] sm:$0xff]
    %v568 = vld [vmem:[%s1 + $0x10a8] sm:$0xff]
    %v569 = vld [vmem:[%s1 + $0x10b0] sm:$0xff]
    %v570 = vld [vmem:[%s1 + $0x10b8] sm:$0xff]
    %v571 = vld [vmem:[%s1 + $0x10c0] sm:$0xff]
    %v572 = vld [vmem:[%s1 + $0x10c8] sm:$0xff]
    %v573 = vld [vmem:[%s1 + $0x10d0] sm:$0xff]
    %v574 = vld [vmem:[%s1 + $0x10d8] sm:$0xff]
    %v575 = vld [vmem:[%s1 + $0x10e0] sm:$0xff]
    %v576 = vld [vmem:[%s1 + $0x10e8] sm:$0xff]
    %v577 = vld [vmem:[%s1 + $0x10f0] sm:$0xff]
    %v578 = vld [vmem:[%s1 + $0x10f8] sm:$0xff]
    %v579 = vld [vmem:[%s1 + $0x1100] sm:$0xff]
    %v580 = vld [vmem:[%s1 + $0x1108] sm:$0xff]
    %v581 = vld [vmem:[%s1 + $0x1110] sm:$0xff]
    %v582 = vld [vmem:[%s1 + $0x1118] sm:$0xff]
    %v583 = vld [vmem:[%s1 + $0x1120] sm:$0xff]
    %v584 = vld [vmem:[%s1 + $0x1128] sm:$0xff]
    %v585 = vld [vmem:[%s1 + $0x1130] sm:$0xff]
    %v586 = vld [vmem:[%s1 + $0x1138] sm:$0xff]
    %v587 = vld [vmem:[%s1 + $0x1140] sm:$0xff]
    %v588 = vld [vmem:[%s1 + $0x1148] sm:$0xff]
    %v589 = vld [vmem:[%s1 + $0x1150] sm:$0xff]
    %v590 = vld [vmem:[%s1 + $0x1158] sm:$0xff]
    %v591 = vld [vmem:[%s1 + $0x1160] sm:$0xff]
    %v592 = vld [vmem:[%s1 + $0x1168] sm:$0xff]
    %v593 = vld [vmem:[%s1 + $0x1170] sm:$0xff]
    %v594 = vld [vmem:[%s1 + $0x1178] sm:$0xff]
    %v595 = vld [vmem:[%s1 + $0x1180] sm:$0xff]
    %v596 = vld [vmem:[%s1 + $0x1188] sm:$0xff]
    %v597 = vld [vmem:[%s1 + $0x1190] sm:$0xff]
    %v598 = vld [vmem:[%s1 + $0x1198] sm:$0xff]
    %v599 = vld [vmem:[%s1 + $0x11a0] sm:$0xff]
    %v600 = vld [vmem:[%s1 + $0x11a8] sm:$0xff]
    %v601 = vld [vmem:[%s1 + $0x11b0] sm:$0xff]
    %v602 = vld [vmem:[%s1 + $0x11b8] sm:$0xff]
    %v603 = vld [vmem:[%s1 + $0x11c0] sm:$0xff]
    %v604 = vld [vmem:[%s1 + $0x11c8] sm:$0xff]
    %v605 = vld [vmem:[%s1 + $0x11d0] sm:$0xff]
    %v606 = vld [vmem:[%s1 + $0x11d8] sm:$0xff]
    %v607 = vld [vmem:[%s1 + $0x11e0] sm:$0xff]
    %v608 = vld [vmem:[%s1 + $0x11e8] sm:$0xff]
    %v609 = vld [vmem:[%s1 + $0x11f0] sm:$0xff]
    %v610 = vld [vmem:[%s1 + $0x11f8] sm:$0xff]
    %v611 = vld [vmem:[%s1 + $0x1200] sm:$0xff]
    %v612 = vld [vmem:[%s1 + $0x1208] sm:$0xff]
    %v613 = vld [vmem:[%s1 + $0x1210] sm:$0xff]
    %v614 = vld [vmem:[%s1 + $0x1218] sm:$0xff]
    %v615 = vld [vmem:[%s1 + $0x1220] sm:$0xff]
    %v616 = vld [vmem:[%s1 + $0x1228] sm:$0xff]
    %v617 = vld [vmem:[%s1 + $0x1230] sm:$0xff]
    %v618 = vld [vmem:[%s1 + $0x1238] sm:$0xff]
    %v619 = vld [vmem:[%s1 + $0x1240] sm:$0xff]
    %v620 = vld [vmem:[%s1 + $0x1248] sm:$0xff]
    %v621 = vld [vmem:[%s1 + $0x1250] sm:$0xff]
    %v622 = vld [vmem:[%s1 + $0x1258] sm:$0xff]
    %v623 = vld [vmem:[%s1 + $0x1260] sm:$0xff]
    %v624 = vld [vmem:[%s1 + $0x1268] sm:$0xff]
    %v625 = vld [vmem:[%s1 + $0x1270] sm:$0xff]
    %v626 = vld [vmem:[%s1 + $0x1278] sm:$0xff]
    %v627 = vld [vmem:[%s1 + $0x1280] sm:$0xff]
    %v628 = vld [vmem:[%s1 + $0x1288] sm:$0xff]
    %v629 = vld [vmem:[%s1 + $0x1290] sm:$0xff]
    %v630 = vld [vmem:[%s1 + $0x1298] sm:$0xff]
    %v631 = vld [vmem:[%s1 + $0x12a0] sm:$0xff]
    %v632 = vld [vmem:[%s1 + $0x12a8] sm:$0xff]
    %v633 = vld [vmem:[%s1 + $0x12b0] sm:$0xff]
    %v634 = vld [vmem:[%s1 + $0x12b8] sm:$0xff]
    %v635 = vld [vmem:[%s1 + $0x12c0] sm:$0xff]
    %v636 = vld [vmem:[%s1 + $0x12c8] sm:$0xff]
    %v637 = vld [vmem:[%s1 + $0x12d0] sm:$0xff]
    %v638 = vld [vmem:[%s1 + $0x12d8] sm:$0xff]
    %v639 = vld [vmem:[%s1 + $0x12e0] sm:$0xff]
    %v640 = vld [vmem:[%s1 + $0x12e8] sm:$0xff]
    %v641 = vld [vmem:[%s1 + $0x12f0] sm:$0xff]
    %v642 = vld [vmem:[%s1 + $0x12f8] sm:$0xff]
    %v643 = vld [vmem:[%s1 + $0x1300] sm:$0xff]
    %v644 = vld [vmem:[%s1 + $0x1308] sm:$0xff]
    %v645 = vld [vmem:[%s1 + $0x1310] sm:$0xff]
    %v646 = vld [vmem:[%s1 + $0x1318] sm:$0xff]
    %v647 = vld [vmem:[%s1 + $0x1320] sm:$0xff]
    %v648 = vld [vmem:[%s1 + $0x1328] sm:$0xff]
    %v649 = vld [vmem:[%s1 + $0x1330] sm:$0xff]
    %v650 = vld [vmem:[%s1 + $0x1338] sm:$0xff]
    %v651 = vld [vmem:[%s1 + $0x1340] sm:$0xff]
    %v652 = vld [vmem:[%s1 + $0x1348] sm:$0xff]
    %v653 = vld [vmem:[%s1 + $0x1350] sm:$0xff]
    %v654 = vld [vmem:[%s1 + $0x1358] sm:$0xff]
    %v655 = vld [vmem:[%s1 + $0x1360] sm:$0xff]
    %v656 = vld [vmem:[%s1 + $0x1368] sm:$0xff]
    %v657 = vld [vmem:[%s1 + $0x1370] sm:$0xff]
    %v658 = vld [vmem:[%s1 + $0x1378] sm:$0xff]
    %v659 = vld [vmem:[%s1 + $0x1380] sm:$0xff]
    %v660 = vld [vmem:[%s1 + $0x1388] sm:$0xff]
    %v661 = vld [vmem:[%s1 + $0x1390] sm:$0xff]
    %v662 = vld [vmem:[%s1 + $0x1398] sm:$0xff]
    %v663 = vld [vmem:[%s1 + $0x13a0] sm:$0xff]
    %v664 = vld [vmem:[%s1 + $0x13a8] sm:$0xff]
    %v665 = vld [vmem:[%s1 + $0x13b0] sm:$0xff]
    %v666 = vld [vmem:[%s1 + $0x13b8] sm:$0xff]
    %v667 = vld [vmem:[%s1 + $0x13c0] sm:$0xff]
    %v668 = vld [vmem:[%s1 + $0x13c8] sm:$0xff]
    %v669 = vld [vmem:[%s1 + $0x13d0] sm:$0xff]
    %v670 = vld [vmem:[%s1 + $0x13d8] sm:$0xff]
    %v671 = vld [vmem:[%s1 + $0x13e0] sm:$0xff]
    %v672 = vld [vmem:[%s1 + $0x13e8] sm:$0xff]
    %v673 = vld [vmem:[%s1 + $0x13f0] sm:$0xff]
    %v674 = vld [vmem:[%s1 + $0x13f8] sm:$0xff]
    %v675 = vld [vmem:[%s1 + $0x1400] sm:$0xff]
    %v676 = vld [vmem:[%s1 + $0x1408] sm:$0xff]
    %v677 = vld [vmem:[%s1 + $0x1410] sm:$0xff]
    %v678 = vld [vmem:[%s1 + $0x1418] sm:$0xff]
    %v679 = vld [vmem:[%s1 + $0x1420] sm:$0xff]
    %v680 = vld [vmem:[%s1 + $0x1428] sm:$0xff]
    %v681 = vld [vmem:[%s1 + $0x1430] sm:$0xff]
    %v682 = vld [vmem:[%s1 + $0x1438] sm:$0xff]
    %v683 = vld [vmem:[%s1 + $0x1440] sm:$0xff]
    %v684 = vld [vmem:[%s1 + $0x1448] sm:$0xff]
    %v685 = vld [vmem:[%s1 + $0x1450] sm:$0xff]
    %v686 = vld [vmem:[%s1 + $0x1458] sm:$0xff]
    %v687 = vld [vmem:[%s1 + $0x1460] sm:$0xff]
    %v688 = vld [vmem:[%s1 + $0x1468] sm:$0xff]
    %v689 = vld [vmem:[%s1 + $0x1470] sm:$0xff]
    %v690 = vld [vmem:[%s1 + $0x1478] sm:$0xff]
    %v691 = vld [vmem:[%s1 + $0x1480] sm:$0xff]
    %v692 = vld [vmem:[%s1 + $0x1488] sm:$0xff]
    %v693 = vld [vmem:[%s1 + $0x1490] sm:$0xff]
    %v694 = vld [vmem:[%s1 + $0x1498] sm:$0xff]
    %v695 = vld [vmem:[%s1 + $0x14a0] sm:$0xff]
    %v696 = vld [vmem:[%s1 + $0x14a8] sm:$0xff]
    %v697 = vld [vmem:[%s1 + $0x14b0] sm:$0xff]
    %v698 = vld [vmem:[%s1 + $0x14b8] sm:$0xff]
    %v699 = vld [vmem:[%s1 + $0x14c0] sm:$0xff]
    %v700 = vld [vmem:[%s1 + $0x14c8] sm:$0xff]
    %v701 = vld [vmem:[%s1 + $0x14d0] sm:$0xff]
    %v702 = vld [vmem:[%s1 + $0x14d8] sm:$0xff]
    %v703 = vld [vmem:[%s1 + $0x14e0] sm:$0xff]
    %v704 = vld [vmem:[%s1 + $0x14e8] sm:$0xff]
    %v705 = vld [vmem:[%s1 + $0x14f0] sm:$0xff]
    %v706 = vld [vmem:[%s1 + $0x14f8] sm:$0xff]
    %v707 = vld [vmem:[%s1 + $0x1500] sm:$0xff]
    %v708 = vld [vmem:[%s1 + $0x1508] sm:$0xff]
    %v709 = vld [vmem:[%s1 + $0x1510] sm:$0xff]
    %v710 = vld [vmem:[%s1 + $0x1518] sm:$0xff]
    %v711 = vld [vmem:[%s1 + $0x1520] sm:$0xff]
    %v712 = vld [vmem:[%s1 + $0x1528] sm:$0xff]
    %v713 = vld [vmem:[%s1 + $0x1530] sm:$0xff]
    %v714 = vld [vmem:[%s1 + $0x1538] sm:$0xff]
    %v715 = vld [vmem:[%s1 + $0x1540] sm:$0xff]
    %v716 = vld [vmem:[%s1 + $0x1548] sm:$0xff]
    %v717 = vld [vmem:[%s1 + $0x1550] sm:$0xff]
    %v718 = vld [vmem:[%s1 + $0x1558] sm:$0xff]
    %v719 = vld [vmem:[%s1 + $0x1560] sm:$0xff]
    %v720 = vld [vmem:[%s1 + $0x1568] sm:$0xff]
    %v721 = vld [vmem:[%s1 + $0x1570] sm:$0xff]
    %v722 = vld [vmem:[%s1 + $0x1578] sm:$0xff]
    %v723 = vld [vmem:[%s1 + $0x1580] sm:$0xff]
    %v724 = vld [vmem:[%s1 + $0x1588] sm:$0xff]
    %v725 = vld [vmem:[%s1 + $0x1590] sm:$0xff]
    %v726 = vld [vmem:[%s1 + $0x1598] sm:$0xff]
    %v727 = vld [vmem:[%s1 + $0x15a0] sm:$0xff]
    %v728 = vld [vmem:[%s1 + $0x15a8] sm:$0xff]
    %v729 = vld [vmem:[%s1 + $0x15b0] sm:$0xff]
    %v730 = vld [vmem:[%s1 + $0x15b8] sm:$0xff]
    %v731 = vld [vmem:[%s1 + $0x15c0] sm:$0xff]
    %v732 = vld [vmem:[%s1 + $0x15c8] sm:$0xff]
    %v733 = vld [vmem:[%s1 + $0x15d0] sm:$0xff]
    %v734 = vld [vmem:[%s1 + $0x15d8] sm:$0xff]
    %v735 = vld [vmem:[%s1 + $0x15e0] sm:$0xff]
    %v736 = vld [vmem:[%s1 + $0x15e8] sm:$0xff]
    %v737 = vld [vmem:[%s1 + $0x15f0] sm:$0xff]
    %v738 = vld [vmem:[%s1 + $0x15f8] sm:$0xff]
    %v739 = vld [vmem:[%s1 + $0x1600] sm:$0xff]
    %v740 = vld [vmem:[%s1 + $0x1608] sm:$0xff]
    %v741 = vld [vmem:[%s1 + $0x1610] sm:$0xff]
    %v742 = vld [vmem:[%s1 + $0x1618] sm:$0xff]
    %v743 = vld [vmem:[%s1 + $0x1620] sm:$0xff]
    %v744 = vld [vmem:[%s1 + $0x1628] sm:$0xff]
    %v745 = vld [vmem:[%s1 + $0x1630] sm:$0xff]
    %v746 = vld [vmem:[%s1 + $0x1638] sm:$0xff]
    %v747 = vld [vmem:[%s1 + $0x1640] sm:$0xff]
    %v748 = vld [vmem:[%s1 + $0x1648] sm:$0xff]
    %v749 = vld [vmem:[%s1 + $0x1650] sm:$0xff]
    %v750 = vld [vmem:[%s1 + $0x1658] sm:$0xff]
    %v751 = vld [vmem:[%s1 + $0x1660] sm:$0xff]
    %v752 = vld [vmem:[%s1 + $0x1668] sm:$0xff]
    %v753 = vld [vmem:[%s1 + $0x1670] sm:$0xff]
    %v754 = vld [vmem:[%s1 + $0x1678] sm:$0xff]
    %v755 = vld [vmem:[%s1 + $0x1680] sm:$0xff]
    %v756 = vld [vmem:[%s1 + $0x1688] sm:$0xff]
    %v757 = vld [vmem:[%s1 + $0x1690] sm:$0xff]
    %v758 = vld [vmem:[%s1 + $0x1698] sm:$0xff]
    %v759 = vld [vmem:[%s1 + $0x16a0] sm:$0xff]
    %v760 = vld [vmem:[%s1 + $0x16a8] sm:$0xff]
    %v761 = vld [vmem:[%s1 + $0x16b0] sm:$0xff]
    %v762 = vld [vmem:[%s1 + $0x16b8] sm:$0xff]
    %v763 = vld [vmem:[%s1 + $0x16c0] sm:$0xff]
    %v764 = vld [vmem:[%s1 + $0x16c8] sm:$0xff]
    %v765 = vld [vmem:[%s1 + $0x16d0] sm:$0xff]
    %v766 = vld [vmem:[%s1 + $0x16d8] sm:$0xff]
    %v767 = vld [vmem:[%s1 + $0x16e0] sm:$0xff]
    %v768 = vld [vmem:[%s1 + $0x16e8] sm:$0xff]
    %v769 = vld [vmem:[%s1 + $0x16f0] sm:$0xff]
    %v770 = vld [vmem:[%s1 + $0x16f8] sm:$0xff]
    %v771 = vld [vmem:[%s1 + $0x1700] sm:$0xff]
    %v772 = vld [vmem:[%s1 + $0x1708] sm:$0xff]
    %v773 = vld [vmem:[%s1 + $0x1710] sm:$0xff]
    %v774 = vld [vmem:[%s1 + $0x1718] sm:$0xff]
    %v775 = vld [vmem:[%s1 + $0x1720] sm:$0xff]
    %v776 = vld [vmem:[%s1 + $0x1728] sm:$0xff]
    %v777 = vld [vmem:[%s1 + $0x1730] sm:$0xff]
    %v778 = vld [vmem:[%s1 + $0x1738] sm:$0xff]
    %v779 = vld [vmem:[%s1 + $0x1740] sm:$0xff]
    %v780 = vld [vmem:[%s1 + $0x1748] sm:$0xff]
    %v781 = vld [vmem:[%s1 + $0x1750] sm:$0xff]
    %v782 = vld [vmem:[%s1 + $0x1758] sm:$0xff]
    %v783 = vld [vmem:[%s1 + $0x1760] sm:$0xff]
    %v784 = vld [vmem:[%s1 + $0x1768] sm:$0xff]
    %v785 = vld [vmem:[%s1 + $0x1770] sm:$0xff]
    %v786 = vld [vmem:[%s1 + $0x1778] sm:$0xff]
    %v787 = vld [vmem:[%s1 + $0x1780] sm:$0xff]
    %v788 = vld [vmem:[%s1 + $0x1788] sm:$0xff]
    %v789 = vld [vmem:[%s1 + $0x1790] sm:$0xff]
    %v790 = vld [vmem:[%s1 + $0x1798] sm:$0xff]
    %v791 = vld [vmem:[%s1 + $0x17a0] sm:$0xff]
    %v792 = vld [vmem:[%s1 + $0x17a8] sm:$0xff]
    %v793 = vld [vmem:[%s1 + $0x17b0] sm:$0xff]
    %v794 = vld [vmem:[%s1 + $0x17b8] sm:$0xff]
    %v795 = vld [vmem:[%s1 + $0x17c0] sm:$0xff]
    %v796 = vld [vmem:[%s1 + $0x17c8] sm:$0xff]
    %v797 = vld [vmem:[%s1 + $0x17d0] sm:$0xff]
    %v798 = vld [vmem:[%s1 + $0x17d8] sm:$0xff]
    %v799 = vld [vmem:[%s1 + $0x17e0] sm:$0xff]
    %v800 = vld [vmem:[%s1 + $0x17e8] sm:$0xff]
    %v801 = vld [vmem:[%s1 + $0x17f0] sm:$0xff]
    %v802 = vld [vmem:[%s1 + $0x17f8] sm:$0xff]
    %v803 = vld [vmem:[%s1 + $0x1800] sm:$0xff]
    %v804 = vld [vmem:[%s1 + $0x1808] sm:$0xff]
    %v805 = vld [vmem:[%s1 + $0x1810] sm:$0xff]
    %v806 = vld [vmem:[%s1 + $0x1818] sm:$0xff]
    %v807 = vld [vmem:[%s1 + $0x1820] sm:$0xff]
    %v808 = vld [vmem:[%s1 + $0x1828] sm:$0xff]
    %v809 = vld [vmem:[%s1 + $0x1830] sm:$0xff]
    %v810 = vld [vmem:[%s1 + $0x1838] sm:$0xff]
    %v811 = vld [vmem:[%s1 + $0x1840] sm:$0xff]
    %v812 = vld [vmem:[%s1 + $0x1848] sm:$0xff]
    %v813 = vld [vmem:[%s1 + $0x1850] sm:$0xff]
    %v814 = vld [vmem:[%s1 + $0x1858] sm:$0xff]
    %v815 = vld [vmem:[%s1 + $0x1860] sm:$0xff]
    %v816 = vld [vmem:[%s1 + $0x1868] sm:$0xff]
    %v817 = vld [vmem:[%s1 + $0x1870] sm:$0xff]
    %v818 = vld [vmem:[%s1 + $0x1878] sm:$0xff]
    %v819 = vld [vmem:[%s2] sm:$0xff]
    %v821 = vperm.slane %v819, 0
    %v822 = vperm.slane %v819, 1
    %v823 = vperm.slane %v819, 2
    %v824 = vperm.slane %v819, 3
    %v825 = vperm.slane %v819, 4
    %v826 = vperm.slane %v819, 5
    %v827 = vperm.slane %v819, 6
    %835 = vmatpush.msra.mxu0 %v140
    %836 = vmatpush.msra.mxu0 %v133
    %837 = vmatpush.msra.mxu0 %v126
    %838 = vmatpush.msra.mxu0 %v119
    %839 = vmatpush.msra.mxu0 %v112
    %840 = vmatpush.msra.mxu0 %v105
    %841 = vmatpush.msra.mxu0 %v98
    %842 = vmatpush.msra.mxu0 %v91
    %843 = vmatpush.msra.mxu0 %v84
    %844 = vmatpush.msra.mxu0 %v77
    %845 = vmatpush.msra.mxu0 %v70
    %846 = vmatpush.msra.mxu0 %v63
    %847 = vmatpush.msra.mxu0 %v56
    %848 = vmatpush.msra.mxu0 %v49
    %849 = vmatpush.msra.mxu0 %v42
    %850 = vmatpush.msra.mxu0 %v35
    %851 = vmatmul.f32.gmra.mxu0 %v21
    %v852 = vpop.f32.mrf.mxu0
    %v853 = vadd.f32 %v821, %v852
    %854 = vmatmul.f32.gmra.mxu0 %v28
    %v855 = vpop.f32.mrf.mxu0
    %v856 = vadd.f32 %v821, %v855
    %857 = vdwg.mxu0
    %858 = vmatpush.msra.mxu0 %v252
    %859 = vmatpush.msra.mxu0 %v245
    %860 = vmatpush.msra.mxu0 %v238
    %861 = vmatpush.msra.mxu0 %v231
    %862 = vmatpush.msra.mxu0 %v224
    %863 = vmatpush.msra.mxu0 %v217
    %864 = vmatpush.msra.mxu0 %v210
    %865 = vmatpush.msra.mxu0 %v203
    %866 = vmatpush.msra.mxu0 %v196
    %867 = vmatpush.msra.mxu0 %v189
    %868 = vmatpush.msra.mxu0 %v182
    %869 = vmatpush.msra.mxu0 %v175
    %870 = vmatpush.msra.mxu0 %v168
    %871 = vmatpush.msra.mxu0 %v161
    %872 = vmatpush.msra.mxu0 %v154
    %873 = vmatpush.msra.mxu0 %v147
    %874 = vmatmul.f32.gmra.mxu0 %v22
    %v875 = vpop.f32.mrf.mxu0
    %v876 = vadd.f32 %v853, %v875
    %877 = vmatmul.f32.gmra.mxu0 %v29
    %v878 = vpop.f32.mrf.mxu0
    %v879 = vadd.f32 %v856, %v878
    %880 = vdwg.mxu0
    %881 = vmatpush.msra.mxu0 %v364
    %882 = vmatpush.msra.mxu0 %v357
    %883 = vmatpush.msra.mxu0 %v350
    %884 = vmatpush.msra.mxu0 %v343
    %885 = vmatpush.msra.mxu0 %v336
    %886 = vmatpush.msra.mxu0 %v329
    %887 = vmatpush.msra.mxu0 %v322
    %888 = vmatpush.msra.mxu0 %v315
    %889 = vmatpush.msra.mxu0 %v308
    %890 = vmatpush.msra.mxu0 %v301
    %891 = vmatpush.msra.mxu0 %v294
    %892 = vmatpush.msra.mxu0 %v287
    %893 = vmatpush.msra.mxu0 %v280
    %894 = vmatpush.msra.mxu0 %v273
    %895 = vmatpush.msra.mxu0 %v266
    %896 = vmatpush.msra.mxu0 %v259
    %897 = vmatmul.f32.gmra.mxu0 %v23
    %v898 = vpop.f32.mrf.mxu0
    %v899 = vadd.f32 %v876, %v898
    %900 = vmatmul.f32.gmra.mxu0 %v30
    %v901 = vpop.f32.mrf.mxu0
    %v902 = vadd.f32 %v879, %v901
    %903 = vdwg.mxu0
    %904 = vmatpush.msra.mxu0 %v476
    %905 = vmatpush.msra.mxu0 %v469
    %906 = vmatpush.msra.mxu0 %v462
    %907 = vmatpush.msra.mxu0 %v455
    %908 = vmatpush.msra.mxu0 %v448
    %909 = vmatpush.msra.mxu0 %v441
    %910 = vmatpush.msra.mxu0 %v434
    %911 = vmatpush.msra.mxu0 %v427
    %912 = vmatpush.msra.mxu0 %v420
    %913 = vmatpush.msra.mxu0 %v413
    %914 = vmatpush.msra.mxu0 %v406
    %915 = vmatpush.msra.mxu0 %v399
    %916 = vmatpush.msra.mxu0 %v392
    %917 = vmatpush.msra.mxu0 %v385
    %918 = vmatpush.msra.mxu0 %v378
    %919 = vmatpush.msra.mxu0 %v371
    %920 = vmatmul.f32.gmra.mxu0 %v24
    %v921 = vpop.f32.mrf.mxu0
    %v922 = vadd.f32 %v899, %v921
    %923 = vmatmul.f32.gmra.mxu0 %v31
    %v924 = vpop.f32.mrf.mxu0
    %v925 = vadd.f32 %v902, %v924
    %926 = vdwg.mxu0
    %927 = vmatpush.msra.mxu0 %v588
    %928 = vmatpush.msra.mxu0 %v581
    %929 = vmatpush.msra.mxu0 %v574
    %930 = vmatpush.msra.mxu0 %v567
    %931 = vmatpush.msra.mxu0 %v560
    %932 = vmatpush.msra.mxu0 %v553
    %933 = vmatpush.msra.mxu0 %v546
    %934 = vmatpush.msra.mxu0 %v539
    %935 = vmatpush.msra.mxu0 %v532
    %936 = vmatpush.msra.mxu0 %v525
    %937 = vmatpush.msra.mxu0 %v518
    %938 = vmatpush.msra.mxu0 %v511
    %939 = vmatpush.msra.mxu0 %v504
    %940 = vmatpush.msra.mxu0 %v497
    %941 = vmatpush.msra.mxu0 %v490
    %942 = vmatpush.msra.mxu0 %v483
    %943 = vmatmul.f32.gmra.mxu0 %v25
    %v944 = vpop.f32.mrf.mxu0
    %v945 = vadd.f32 %v922, %v944
    %946 = vmatmul.f32.gmra.mxu0 %v32
    %v947 = vpop.f32.mrf.mxu0
    %v948 = vadd.f32 %v925, %v947
    %949 = vdwg.mxu0
    %950 = vmatpush.msra.mxu0 %v700
    %951 = vmatpush.msra.mxu0 %v693
    %952 = vmatpush.msra.mxu0 %v686
    %953 = vmatpush.msra.mxu0 %v679
    %954 = vmatpush.msra.mxu0 %v672
    %955 = vmatpush.msra.mxu0 %v665
    %956 = vmatpush.msra.mxu0 %v658
    %957 = vmatpush.msra.mxu0 %v651
    %958 = vmatpush.msra.mxu0 %v644
    %959 = vmatpush.msra.mxu0 %v637
    %960 = vmatpush.msra.mxu0 %v630
    %961 = vmatpush.msra.mxu0 %v623
    %962 = vmatpush.msra.mxu0 %v616
    %963 = vmatpush.msra.mxu0 %v609
    %964 = vmatpush.msra.mxu0 %v602
    %965 = vmatpush.msra.mxu0 %v595
    %966 = vmatmul.f32.gmra.mxu0 %v26
    %v967 = vpop.f32.mrf.mxu0
    %v968 = vadd.f32 %v945, %v967
    %969 = vmatmul.f32.gmra.mxu0 %v33
    %v970 = vpop.f32.mrf.mxu0
    %v971 = vadd.f32 %v948, %v970
    %972 = vdwg.mxu0
    %973 = vmatpush.msra.mxu0 %v812
    %974 = vmatpush.msra.mxu0 %v805
    %975 = vmatpush.msra.mxu0 %v798
    %976 = vmatpush.msra.mxu0 %v791
    %977 = vmatpush.msra.mxu0 %v784
    %978 = vmatpush.msra.mxu0 %v777
    %979 = vmatpush.msra.mxu0 %v770
    %980 = vmatpush.msra.mxu0 %v763
    %981 = vmatpush.msra.mxu0 %v756
    %982 = vmatpush.msra.mxu0 %v749
    %983 = vmatpush.msra.mxu0 %v742
    %984 = vmatpush.msra.mxu0 %v735
    %985 = vmatpush.msra.mxu0 %v728
    %986 = vmatpush.msra.mxu0 %v721
    %987 = vmatpush.msra.mxu0 %v714
    %988 = vmatpush.msra.mxu0 %v707
    %989 = vmatmul.f32.gmra.mxu0 %v27
    %v990 = vpop.f32.mrf.mxu0
    %v991 = vadd.f32 %v968, %v990
    %992 = vmatmul.f32.gmra.mxu0 %v34
    %v993 = vpop.f32.mrf.mxu0
    %v994 = vadd.f32 %v971, %v993
    %995 = vdwg.mxu0
    %996 = vmatpush.msra.mxu0 %v141
    %997 = vmatpush.msra.mxu0 %v134
    %998 = vmatpush.msra.mxu0 %v127
    %999 = vmatpush.msra.mxu0 %v120
    %1000 = vmatpush.msra.mxu0 %v113
    %1001 = vmatpush.msra.mxu0 %v106
    %1002 = vmatpush.msra.mxu0 %v99
    %1003 = vmatpush.msra.mxu0 %v92
    %1004 = vmatpush.msra.mxu0 %v85
    %1005 = vmatpush.msra.mxu0 %v78
    %1006 = vmatpush.msra.mxu0 %v71
    %1007 = vmatpush.msra.mxu0 %v64
    %1008 = vmatpush.msra.mxu0 %v57
    %1009 = vmatpush.msra.mxu0 %v50
    %1010 = vmatpush.msra.mxu0 %v43
    %1011 = vmatpush.msra.mxu0 %v36
    %1012 = vmatmul.f32.gmra.mxu0 %v21
    %v1013 = vpop.f32.mrf.mxu0
    %v1014 = vadd.f32 %v822, %v1013
    %1015 = vmatmul.f32.gmra.mxu0 %v28
    %v1016 = vpop.f32.mrf.mxu0
    %v1017 = vadd.f32 %v822, %v1016
    %1018 = vdwg.mxu0
    %1019 = vmatpush.msra.mxu0 %v253
    %1020 = vmatpush.msra.mxu0 %v246
    %1021 = vmatpush.msra.mxu0 %v239
    %1022 = vmatpush.msra.mxu0 %v232
    %1023 = vmatpush.msra.mxu0 %v225
    %1024 = vmatpush.msra.mxu0 %v218
    %1025 = vmatpush.msra.mxu0 %v211
    %1026 = vmatpush.msra.mxu0 %v204
    %1027 = vmatpush.msra.mxu0 %v197
    %1028 = vmatpush.msra.mxu0 %v190
    %1029 = vmatpush.msra.mxu0 %v183
    %1030 = vmatpush.msra.mxu0 %v176
    %1031 = vmatpush.msra.mxu0 %v169
    %1032 = vmatpush.msra.mxu0 %v162
    %1033 = vmatpush.msra.mxu0 %v155
    %1034 = vmatpush.msra.mxu0 %v148
    %1035 = vmatmul.f32.gmra.mxu0 %v22
    %v1036 = vpop.f32.mrf.mxu0
    %v1037 = vadd.f32 %v1014, %v1036
    %1038 = vmatmul.f32.gmra.mxu0 %v29
    %v1039 = vpop.f32.mrf.mxu0
    %v1040 = vadd.f32 %v1017, %v1039
    %1041 = vdwg.mxu0
    %1042 = vmatpush.msra.mxu0 %v365
    %1043 = vmatpush.msra.mxu0 %v358
    %1044 = vmatpush.msra.mxu0 %v351
    %1045 = vmatpush.msra.mxu0 %v344
    %1046 = vmatpush.msra.mxu0 %v337
    %1047 = vmatpush.msra.mxu0 %v330
    %1048 = vmatpush.msra.mxu0 %v323
    %1049 = vmatpush.msra.mxu0 %v316
    %1050 = vmatpush.msra.mxu0 %v309
    %1051 = vmatpush.msra.mxu0 %v302
    %1052 = vmatpush.msra.mxu0 %v295
    %1053 = vmatpush.msra.mxu0 %v288
    %1054 = vmatpush.msra.mxu0 %v281
    %1055 = vmatpush.msra.mxu0 %v274
    %1056 = vmatpush.msra.mxu0 %v267
    %1057 = vmatpush.msra.mxu0 %v260
    %1058 = vmatmul.f32.gmra.mxu0 %v23
    %v1059 = vpop.f32.mrf.mxu0
    %v1060 = vadd.f32 %v1037, %v1059
    %1061 = vmatmul.f32.gmra.mxu0 %v30
    %v1062 = vpop.f32.mrf.mxu0
    %v1063 = vadd.f32 %v1040, %v1062
    %1064 = vdwg.mxu0
    %1065 = vmatpush.msra.mxu0 %v477
    %1066 = vmatpush.msra.mxu0 %v470
    %1067 = vmatpush.msra.mxu0 %v463
    %1068 = vmatpush.msra.mxu0 %v456
    %1069 = vmatpush.msra.mxu0 %v449
    %1070 = vmatpush.msra.mxu0 %v442
    %1071 = vmatpush.msra.mxu0 %v435
    %1072 = vmatpush.msra.mxu0 %v428
    %1073 = vmatpush.msra.mxu0 %v421
    %1074 = vmatpush.msra.mxu0 %v414
    %1075 = vmatpush.msra.mxu0 %v407
    %1076 = vmatpush.msra.mxu0 %v400
    %1077 = vmatpush.msra.mxu0 %v393
    %1078 = vmatpush.msra.mxu0 %v386
    %1079 = vmatpush.msra.mxu0 %v379
    %1080 = vmatpush.msra.mxu0 %v372
    %1081 = vmatmul.f32.gmra.mxu0 %v24
    %v1082 = vpop.f32.mrf.mxu0
    %v1083 = vadd.f32 %v1060, %v1082
    %1084 = vmatmul.f32.gmra.mxu0 %v31
    %v1085 = vpop.f32.mrf.mxu0
    %v1086 = vadd.f32 %v1063, %v1085
    %1087 = vdwg.mxu0
    %1088 = vmatpush.msra.mxu0 %v589
    %1089 = vmatpush.msra.mxu0 %v582
    %1090 = vmatpush.msra.mxu0 %v575
    %1091 = vmatpush.msra.mxu0 %v568
    %1092 = vmatpush.msra.mxu0 %v561
    %1093 = vmatpush.msra.mxu0 %v554
    %1094 = vmatpush.msra.mxu0 %v547
    %1095 = vmatpush.msra.mxu0 %v540
    %1096 = vmatpush.msra.mxu0 %v533
    %1097 = vmatpush.msra.mxu0 %v526
    %1098 = vmatpush.msra.mxu0 %v519
    %1099 = vmatpush.msra.mxu0 %v512
    %1100 = vmatpush.msra.mxu0 %v505
    %1101 = vmatpush.msra.mxu0 %v498
    %1102 = vmatpush.msra.mxu0 %v491
    %1103 = vmatpush.msra.mxu0 %v484
    %1104 = vmatmul.f32.gmra.mxu0 %v25
    %v1105 = vpop.f32.mrf.mxu0
    %v1106 = vadd.f32 %v1083, %v1105
    %1107 = vmatmul.f32.gmra.mxu0 %v32
    %v1108 = vpop.f32.mrf.mxu0
    %v1109 = vadd.f32 %v1086, %v1108
    %1110 = vdwg.mxu0
    %1111 = vmatpush.msra.mxu0 %v701
    %1112 = vmatpush.msra.mxu0 %v694
    %1113 = vmatpush.msra.mxu0 %v687
    %1114 = vmatpush.msra.mxu0 %v680
    %1115 = vmatpush.msra.mxu0 %v673
    %1116 = vmatpush.msra.mxu0 %v666
    %1117 = vmatpush.msra.mxu0 %v659
    %1118 = vmatpush.msra.mxu0 %v652
    %1119 = vmatpush.msra.mxu0 %v645
    %1120 = vmatpush.msra.mxu0 %v638
    %1121 = vmatpush.msra.mxu0 %v631
    %1122 = vmatpush.msra.mxu0 %v624
    %1123 = vmatpush.msra.mxu0 %v617
    %1124 = vmatpush.msra.mxu0 %v610
    %1125 = vmatpush.msra.mxu0 %v603
    %1126 = vmatpush.msra.mxu0 %v596
    %1127 = vmatmul.f32.gmra.mxu0 %v26
    %v1128 = vpop.f32.mrf.mxu0
    %v1129 = vadd.f32 %v1106, %v1128
    %1130 = vmatmul.f32.gmra.mxu0 %v33
    %v1131 = vpop.f32.mrf.mxu0
    %v1132 = vadd.f32 %v1109, %v1131
    %1133 = vdwg.mxu0
    %1134 = vmatpush.msra.mxu0 %v813
    %1135 = vmatpush.msra.mxu0 %v806
    %1136 = vmatpush.msra.mxu0 %v799
    %1137 = vmatpush.msra.mxu0 %v792
    %1138 = vmatpush.msra.mxu0 %v785
    %1139 = vmatpush.msra.mxu0 %v778
    %1140 = vmatpush.msra.mxu0 %v771
    %1141 = vmatpush.msra.mxu0 %v764
    %1142 = vmatpush.msra.mxu0 %v757
    %1143 = vmatpush.msra.mxu0 %v750
    %1144 = vmatpush.msra.mxu0 %v743
    %1145 = vmatpush.msra.mxu0 %v736
    %1146 = vmatpush.msra.mxu0 %v729
    %1147 = vmatpush.msra.mxu0 %v722
    %1148 = vmatpush.msra.mxu0 %v715
    %1149 = vmatpush.msra.mxu0 %v708
    %1150 = vmatmul.f32.gmra.mxu0 %v27
    %v1151 = vpop.f32.mrf.mxu0
    %v1152 = vadd.f32 %v1129, %v1151
    %1153 = vmatmul.f32.gmra.mxu0 %v34
    %v1154 = vpop.f32.mrf.mxu0
    %v1155 = vadd.f32 %v1132, %v1154
    %1156 = vdwg.mxu0
    %1157 = vmatpush.msra.mxu0 %v142
    %1158 = vmatpush.msra.mxu0 %v135
    %1159 = vmatpush.msra.mxu0 %v128
    %1160 = vmatpush.msra.mxu0 %v121
    %1161 = vmatpush.msra.mxu0 %v114
    %1162 = vmatpush.msra.mxu0 %v107
    %1163 = vmatpush.msra.mxu0 %v100
    %1164 = vmatpush.msra.mxu0 %v93
    %1165 = vmatpush.msra.mxu0 %v86
    %1166 = vmatpush.msra.mxu0 %v79
    %1167 = vmatpush.msra.mxu0 %v72
    %1168 = vmatpush.msra.mxu0 %v65
    %1169 = vmatpush.msra.mxu0 %v58
    %1170 = vmatpush.msra.mxu0 %v51
    %1171 = vmatpush.msra.mxu0 %v44
    %1172 = vmatpush.msra.mxu0 %v37
    %1173 = vmatmul.f32.gmra.mxu0 %v21
    %v1174 = vpop.f32.mrf.mxu0
    %v1175 = vadd.f32 %v823, %v1174
    %1176 = vmatmul.f32.gmra.mxu0 %v28
    %v1177 = vpop.f32.mrf.mxu0
    %v1178 = vadd.f32 %v823, %v1177
    %1179 = vdwg.mxu0
    %1180 = vmatpush.msra.mxu0 %v254
    %1181 = vmatpush.msra.mxu0 %v247
    %1182 = vmatpush.msra.mxu0 %v240
    %1183 = vmatpush.msra.mxu0 %v233
    %1184 = vmatpush.msra.mxu0 %v226
    %1185 = vmatpush.msra.mxu0 %v219
    %1186 = vmatpush.msra.mxu0 %v212
    %1187 = vmatpush.msra.mxu0 %v205
    %1188 = vmatpush.msra.mxu0 %v198
    %1189 = vmatpush.msra.mxu0 %v191
    %1190 = vmatpush.msra.mxu0 %v184
    %1191 = vmatpush.msra.mxu0 %v177
    %1192 = vmatpush.msra.mxu0 %v170
    %1193 = vmatpush.msra.mxu0 %v163
    %1194 = vmatpush.msra.mxu0 %v156
    %1195 = vmatpush.msra.mxu0 %v149
    %1196 = vmatmul.f32.gmra.mxu0 %v22
    %v1197 = vpop.f32.mrf.mxu0
    %v1198 = vadd.f32 %v1175, %v1197
    %1199 = vmatmul.f32.gmra.mxu0 %v29
    %v1200 = vpop.f32.mrf.mxu0
    %v1201 = vadd.f32 %v1178, %v1200
    %1202 = vdwg.mxu0
    %1203 = vmatpush.msra.mxu0 %v366
    %1204 = vmatpush.msra.mxu0 %v359
    %1205 = vmatpush.msra.mxu0 %v352
    %1206 = vmatpush.msra.mxu0 %v345
    %1207 = vmatpush.msra.mxu0 %v338
    %1208 = vmatpush.msra.mxu0 %v331
    %1209 = vmatpush.msra.mxu0 %v324
    %1210 = vmatpush.msra.mxu0 %v317
    %1211 = vmatpush.msra.mxu0 %v310
    %1212 = vmatpush.msra.mxu0 %v303
    %1213 = vmatpush.msra.mxu0 %v296
    %1214 = vmatpush.msra.mxu0 %v289
    %1215 = vmatpush.msra.mxu0 %v282
    %1216 = vmatpush.msra.mxu0 %v275
    %1217 = vmatpush.msra.mxu0 %v268
    %1218 = vmatpush.msra.mxu0 %v261
    %1219 = vmatmul.f32.gmra.mxu0 %v23
    %v1220 = vpop.f32.mrf.mxu0
    %v1221 = vadd.f32 %v1198, %v1220
    %1222 = vmatmul.f32.gmra.mxu0 %v30
    %v1223 = vpop.f32.mrf.mxu0
    %v1224 = vadd.f32 %v1201, %v1223
    %1225 = vdwg.mxu0
    %1226 = vmatpush.msra.mxu0 %v478
    %1227 = vmatpush.msra.mxu0 %v471
    %1228 = vmatpush.msra.mxu0 %v464
    %1229 = vmatpush.msra.mxu0 %v457
    %1230 = vmatpush.msra.mxu0 %v450
    %1231 = vmatpush.msra.mxu0 %v443
    %1232 = vmatpush.msra.mxu0 %v436
    %1233 = vmatpush.msra.mxu0 %v429
    %1234 = vmatpush.msra.mxu0 %v422
    %1235 = vmatpush.msra.mxu0 %v415
    %1236 = vmatpush.msra.mxu0 %v408
    %1237 = vmatpush.msra.mxu0 %v401
    %1238 = vmatpush.msra.mxu0 %v394
    %1239 = vmatpush.msra.mxu0 %v387
    %1240 = vmatpush.msra.mxu0 %v380
    %1241 = vmatpush.msra.mxu0 %v373
    %1242 = vmatmul.f32.gmra.mxu0 %v24
    %v1243 = vpop.f32.mrf.mxu0
    %v1244 = vadd.f32 %v1221, %v1243
    %1245 = vmatmul.f32.gmra.mxu0 %v31
    %v1246 = vpop.f32.mrf.mxu0
    %v1247 = vadd.f32 %v1224, %v1246
    %1248 = vdwg.mxu0
    %1249 = vmatpush.msra.mxu0 %v590
    %1250 = vmatpush.msra.mxu0 %v583
    %1251 = vmatpush.msra.mxu0 %v576
    %1252 = vmatpush.msra.mxu0 %v569
    %1253 = vmatpush.msra.mxu0 %v562
    %1254 = vmatpush.msra.mxu0 %v555
    %1255 = vmatpush.msra.mxu0 %v548
    %1256 = vmatpush.msra.mxu0 %v541
    %1257 = vmatpush.msra.mxu0 %v534
    %1258 = vmatpush.msra.mxu0 %v527
    %1259 = vmatpush.msra.mxu0 %v520
    %1260 = vmatpush.msra.mxu0 %v513
    %1261 = vmatpush.msra.mxu0 %v506
    %1262 = vmatpush.msra.mxu0 %v499
    %1263 = vmatpush.msra.mxu0 %v492
    %1264 = vmatpush.msra.mxu0 %v485
    %1265 = vmatmul.f32.gmra.mxu0 %v25
    %v1266 = vpop.f32.mrf.mxu0
    %v1267 = vadd.f32 %v1244, %v1266
    %1268 = vmatmul.f32.gmra.mxu0 %v32
    %v1269 = vpop.f32.mrf.mxu0
    %v1270 = vadd.f32 %v1247, %v1269
    %1271 = vdwg.mxu0
    %1272 = vmatpush.msra.mxu0 %v702
    %1273 = vmatpush.msra.mxu0 %v695
    %1274 = vmatpush.msra.mxu0 %v688
    %1275 = vmatpush.msra.mxu0 %v681
    %1276 = vmatpush.msra.mxu0 %v674
    %1277 = vmatpush.msra.mxu0 %v667
    %1278 = vmatpush.msra.mxu0 %v660
    %1279 = vmatpush.msra.mxu0 %v653
    %1280 = vmatpush.msra.mxu0 %v646
    %1281 = vmatpush.msra.mxu0 %v639
    %1282 = vmatpush.msra.mxu0 %v632
    %1283 = vmatpush.msra.mxu0 %v625
    %1284 = vmatpush.msra.mxu0 %v618
    %1285 = vmatpush.msra.mxu0 %v611
    %1286 = vmatpush.msra.mxu0 %v604
    %1287 = vmatpush.msra.mxu0 %v597
    %1288 = vmatmul.f32.gmra.mxu0 %v26
    %v1289 = vpop.f32.mrf.mxu0
    %v1290 = vadd.f32 %v1267, %v1289
    %1291 = vmatmul.f32.gmra.mxu0 %v33
    %v1292 = vpop.f32.mrf.mxu0
    %v1293 = vadd.f32 %v1270, %v1292
    %1294 = vdwg.mxu0
    %1295 = vmatpush.msra.mxu0 %v814
    %1296 = vmatpush.msra.mxu0 %v807
    %1297 = vmatpush.msra.mxu0 %v800
    %1298 = vmatpush.msra.mxu0 %v793
    %1299 = vmatpush.msra.mxu0 %v786
    %1300 = vmatpush.msra.mxu0 %v779
    %1301 = vmatpush.msra.mxu0 %v772
    %1302 = vmatpush.msra.mxu0 %v765
    %1303 = vmatpush.msra.mxu0 %v758
    %1304 = vmatpush.msra.mxu0 %v751
    %1305 = vmatpush.msra.mxu0 %v744
    %1306 = vmatpush.msra.mxu0 %v737
    %1307 = vmatpush.msra.mxu0 %v730
    %1308 = vmatpush.msra.mxu0 %v723
    %1309 = vmatpush.msra.mxu0 %v716
    %1310 = vmatpush.msra.mxu0 %v709
    %1311 = vmatmul.f32.gmra.mxu0 %v27
    %v1312 = vpop.f32.mrf.mxu0
    %v1313 = vadd.f32 %v1290, %v1312
    %1314 = vmatmul.f32.gmra.mxu0 %v34
    %v1315 = vpop.f32.mrf.mxu0
    %v1316 = vadd.f32 %v1293, %v1315
    %1317 = vdwg.mxu0
    %1318 = vmatpush.msra.mxu0 %v143
    %1319 = vmatpush.msra.mxu0 %v136
    %1320 = vmatpush.msra.mxu0 %v129
    %1321 = vmatpush.msra.mxu0 %v122
    %1322 = vmatpush.msra.mxu0 %v115
    %1323 = vmatpush.msra.mxu0 %v108
    %1324 = vmatpush.msra.mxu0 %v101
    %1325 = vmatpush.msra.mxu0 %v94
    %1326 = vmatpush.msra.mxu0 %v87
    %1327 = vmatpush.msra.mxu0 %v80
    %1328 = vmatpush.msra.mxu0 %v73
    %1329 = vmatpush.msra.mxu0 %v66
    %1330 = vmatpush.msra.mxu0 %v59
    %1331 = vmatpush.msra.mxu0 %v52
    %1332 = vmatpush.msra.mxu0 %v45
    %1333 = vmatpush.msra.mxu0 %v38
    %1334 = vmatmul.f32.gmra.mxu0 %v21
    %v1335 = vpop.f32.mrf.mxu0
    %v1336 = vadd.f32 %v824, %v1335
    %1337 = vmatmul.f32.gmra.mxu0 %v28
    %v1338 = vpop.f32.mrf.mxu0
    %v1339 = vadd.f32 %v824, %v1338
    %1340 = vdwg.mxu0
    %1341 = vmatpush.msra.mxu0 %v255
    %1342 = vmatpush.msra.mxu0 %v248
    %1343 = vmatpush.msra.mxu0 %v241
    %1344 = vmatpush.msra.mxu0 %v234
    %1345 = vmatpush.msra.mxu0 %v227
    %1346 = vmatpush.msra.mxu0 %v220
    %1347 = vmatpush.msra.mxu0 %v213
    %1348 = vmatpush.msra.mxu0 %v206
    %1349 = vmatpush.msra.mxu0 %v199
    %1350 = vmatpush.msra.mxu0 %v192
    %1351 = vmatpush.msra.mxu0 %v185
    %1352 = vmatpush.msra.mxu0 %v178
    %1353 = vmatpush.msra.mxu0 %v171
    %1354 = vmatpush.msra.mxu0 %v164
    %1355 = vmatpush.msra.mxu0 %v157
    %1356 = vmatpush.msra.mxu0 %v150
    %1357 = vmatmul.f32.gmra.mxu0 %v22
    %v1358 = vpop.f32.mrf.mxu0
    %v1359 = vadd.f32 %v1336, %v1358
    %1360 = vmatmul.f32.gmra.mxu0 %v29
    %v1361 = vpop.f32.mrf.mxu0
    %v1362 = vadd.f32 %v1339, %v1361
    %1363 = vdwg.mxu0
    %1364 = vmatpush.msra.mxu0 %v367
    %1365 = vmatpush.msra.mxu0 %v360
    %1366 = vmatpush.msra.mxu0 %v353
    %1367 = vmatpush.msra.mxu0 %v346
    %1368 = vmatpush.msra.mxu0 %v339
    %1369 = vmatpush.msra.mxu0 %v332
    %1370 = vmatpush.msra.mxu0 %v325
    %1371 = vmatpush.msra.mxu0 %v318
    %1372 = vmatpush.msra.mxu0 %v311
    %1373 = vmatpush.msra.mxu0 %v304
    %1374 = vmatpush.msra.mxu0 %v297
    %1375 = vmatpush.msra.mxu0 %v290
    %1376 = vmatpush.msra.mxu0 %v283
    %1377 = vmatpush.msra.mxu0 %v276
    %1378 = vmatpush.msra.mxu0 %v269
    %1379 = vmatpush.msra.mxu0 %v262
    %1380 = vmatmul.f32.gmra.mxu0 %v23
    %v1381 = vpop.f32.mrf.mxu0
    %v1382 = vadd.f32 %v1359, %v1381
    %1383 = vmatmul.f32.gmra.mxu0 %v30
    %v1384 = vpop.f32.mrf.mxu0
    %v1385 = vadd.f32 %v1362, %v1384
    %1386 = vdwg.mxu0
    %1387 = vmatpush.msra.mxu0 %v479
    %1388 = vmatpush.msra.mxu0 %v472
    %1389 = vmatpush.msra.mxu0 %v465
    %1390 = vmatpush.msra.mxu0 %v458
    %1391 = vmatpush.msra.mxu0 %v451
    %1392 = vmatpush.msra.mxu0 %v444
    %1393 = vmatpush.msra.mxu0 %v437
    %1394 = vmatpush.msra.mxu0 %v430
    %1395 = vmatpush.msra.mxu0 %v423
    %1396 = vmatpush.msra.mxu0 %v416
    %1397 = vmatpush.msra.mxu0 %v409
    %1398 = vmatpush.msra.mxu0 %v402
    %1399 = vmatpush.msra.mxu0 %v395
    %1400 = vmatpush.msra.mxu0 %v388
    %1401 = vmatpush.msra.mxu0 %v381
    %1402 = vmatpush.msra.mxu0 %v374
    %1403 = vmatmul.f32.gmra.mxu0 %v24
    %v1404 = vpop.f32.mrf.mxu0
    %v1405 = vadd.f32 %v1382, %v1404
    %1406 = vmatmul.f32.gmra.mxu0 %v31
    %v1407 = vpop.f32.mrf.mxu0
    %v1408 = vadd.f32 %v1385, %v1407
    %1409 = vdwg.mxu0
    %1410 = vmatpush.msra.mxu0 %v591
    %1411 = vmatpush.msra.mxu0 %v584
    %1412 = vmatpush.msra.mxu0 %v577
    %1413 = vmatpush.msra.mxu0 %v570
    %1414 = vmatpush.msra.mxu0 %v563
    %1415 = vmatpush.msra.mxu0 %v556
    %1416 = vmatpush.msra.mxu0 %v549
    %1417 = vmatpush.msra.mxu0 %v542
    %1418 = vmatpush.msra.mxu0 %v535
    %1419 = vmatpush.msra.mxu0 %v528
    %1420 = vmatpush.msra.mxu0 %v521
    %1421 = vmatpush.msra.mxu0 %v514
    %1422 = vmatpush.msra.mxu0 %v507
    %1423 = vmatpush.msra.mxu0 %v500
    %1424 = vmatpush.msra.mxu0 %v493
    %1425 = vmatpush.msra.mxu0 %v486
    %1426 = vmatmul.f32.gmra.mxu0 %v25
    %v1427 = vpop.f32.mrf.mxu0
    %v1428 = vadd.f32 %v1405, %v1427
    %1429 = vmatmul.f32.gmra.mxu0 %v32
    %v1430 = vpop.f32.mrf.mxu0
    %v1431 = vadd.f32 %v1408, %v1430
    %1432 = vdwg.mxu0
    %1433 = vmatpush.msra.mxu0 %v703
    %1434 = vmatpush.msra.mxu0 %v696
    %1435 = vmatpush.msra.mxu0 %v689
    %1436 = vmatpush.msra.mxu0 %v682
    %1437 = vmatpush.msra.mxu0 %v675
    %1438 = vmatpush.msra.mxu0 %v668
    %1439 = vmatpush.msra.mxu0 %v661
    %1440 = vmatpush.msra.mxu0 %v654
    %1441 = vmatpush.msra.mxu0 %v647
    %1442 = vmatpush.msra.mxu0 %v640
    %1443 = vmatpush.msra.mxu0 %v633
    %1444 = vmatpush.msra.mxu0 %v626
    %1445 = vmatpush.msra.mxu0 %v619
    %1446 = vmatpush.msra.mxu0 %v612
    %1447 = vmatpush.msra.mxu0 %v605
    %1448 = vmatpush.msra.mxu0 %v598
    %1449 = vmatmul.f32.gmra.mxu0 %v26
    %v1450 = vpop.f32.mrf.mxu0
    %v1451 = vadd.f32 %v1428, %v1450
    %1452 = vmatmul.f32.gmra.mxu0 %v33
    %v1453 = vpop.f32.mrf.mxu0
    %v1454 = vadd.f32 %v1431, %v1453
    %1455 = vdwg.mxu0
    %1456 = vmatpush.msra.mxu0 %v815
    %1457 = vmatpush.msra.mxu0 %v808
    %1458 = vmatpush.msra.mxu0 %v801
    %1459 = vmatpush.msra.mxu0 %v794
    %1460 = vmatpush.msra.mxu0 %v787
    %1461 = vmatpush.msra.mxu0 %v780
    %1462 = vmatpush.msra.mxu0 %v773
    %1463 = vmatpush.msra.mxu0 %v766
    %1464 = vmatpush.msra.mxu0 %v759
    %1465 = vmatpush.msra.mxu0 %v752
    %1466 = vmatpush.msra.mxu0 %v745
    %1467 = vmatpush.msra.mxu0 %v738
    %1468 = vmatpush.msra.mxu0 %v731
    %1469 = vmatpush.msra.mxu0 %v724
    %1470 = vmatpush.msra.mxu0 %v717
    %1471 = vmatpush.msra.mxu0 %v710
    %1472 = vmatmul.f32.gmra.mxu0 %v27
    %v1473 = vpop.f32.mrf.mxu0
    %v1474 = vadd.f32 %v1451, %v1473
    %1475 = vmatmul.f32.gmra.mxu0 %v34
    %v1476 = vpop.f32.mrf.mxu0
    %v1477 = vadd.f32 %v1454, %v1476
    %1478 = vdwg.mxu0
    %1479 = vmatpush.msra.mxu0 %v144
    %1480 = vmatpush.msra.mxu0 %v137
    %1481 = vmatpush.msra.mxu0 %v130
    %1482 = vmatpush.msra.mxu0 %v123
    %1483 = vmatpush.msra.mxu0 %v116
    %1484 = vmatpush.msra.mxu0 %v109
    %1485 = vmatpush.msra.mxu0 %v102
    %1486 = vmatpush.msra.mxu0 %v95
    %1487 = vmatpush.msra.mxu0 %v88
    %1488 = vmatpush.msra.mxu0 %v81
    %1489 = vmatpush.msra.mxu0 %v74
    %1490 = vmatpush.msra.mxu0 %v67
    %1491 = vmatpush.msra.mxu0 %v60
    %1492 = vmatpush.msra.mxu0 %v53
    %1493 = vmatpush.msra.mxu0 %v46
    %1494 = vmatpush.msra.mxu0 %v39
    %1495 = vmatmul.f32.gmra.mxu0 %v21
    %v1496 = vpop.f32.mrf.mxu0
    %v1497 = vadd.f32 %v825, %v1496
    %1498 = vmatmul.f32.gmra.mxu0 %v28
    %v1499 = vpop.f32.mrf.mxu0
    %v1500 = vadd.f32 %v825, %v1499
    %1501 = vdwg.mxu0
    %1502 = vmatpush.msra.mxu0 %v256
    %1503 = vmatpush.msra.mxu0 %v249
    %1504 = vmatpush.msra.mxu0 %v242
    %1505 = vmatpush.msra.mxu0 %v235
    %1506 = vmatpush.msra.mxu0 %v228
    %1507 = vmatpush.msra.mxu0 %v221
    %1508 = vmatpush.msra.mxu0 %v214
    %1509 = vmatpush.msra.mxu0 %v207
    %1510 = vmatpush.msra.mxu0 %v200
    %1511 = vmatpush.msra.mxu0 %v193
    %1512 = vmatpush.msra.mxu0 %v186
    %1513 = vmatpush.msra.mxu0 %v179
    %1514 = vmatpush.msra.mxu0 %v172
    %1515 = vmatpush.msra.mxu0 %v165
    %1516 = vmatpush.msra.mxu0 %v158
    %1517 = vmatpush.msra.mxu0 %v151
    %1518 = vmatmul.f32.gmra.mxu0 %v22
    %v1519 = vpop.f32.mrf.mxu0
    %v1520 = vadd.f32 %v1497, %v1519
    %1521 = vmatmul.f32.gmra.mxu0 %v29
    %v1522 = vpop.f32.mrf.mxu0
    %v1523 = vadd.f32 %v1500, %v1522
    %1524 = vdwg.mxu0
    %1525 = vmatpush.msra.mxu0 %v368
    %1526 = vmatpush.msra.mxu0 %v361
    %1527 = vmatpush.msra.mxu0 %v354
    %1528 = vmatpush.msra.mxu0 %v347
    %1529 = vmatpush.msra.mxu0 %v340
    %1530 = vmatpush.msra.mxu0 %v333
    %1531 = vmatpush.msra.mxu0 %v326
    %1532 = vmatpush.msra.mxu0 %v319
    %1533 = vmatpush.msra.mxu0 %v312
    %1534 = vmatpush.msra.mxu0 %v305
    %1535 = vmatpush.msra.mxu0 %v298
    %1536 = vmatpush.msra.mxu0 %v291
    %1537 = vmatpush.msra.mxu0 %v284
    %1538 = vmatpush.msra.mxu0 %v277
    %1539 = vmatpush.msra.mxu0 %v270
    %1540 = vmatpush.msra.mxu0 %v263
    %1541 = vmatmul.f32.gmra.mxu0 %v23
    %v1542 = vpop.f32.mrf.mxu0
    %v1543 = vadd.f32 %v1520, %v1542
    %1544 = vmatmul.f32.gmra.mxu0 %v30
    %v1545 = vpop.f32.mrf.mxu0
    %v1546 = vadd.f32 %v1523, %v1545
    %1547 = vdwg.mxu0
    %1548 = vmatpush.msra.mxu0 %v480
    %1549 = vmatpush.msra.mxu0 %v473
    %1550 = vmatpush.msra.mxu0 %v466
    %1551 = vmatpush.msra.mxu0 %v459
    %1552 = vmatpush.msra.mxu0 %v452
    %1553 = vmatpush.msra.mxu0 %v445
    %1554 = vmatpush.msra.mxu0 %v438
    %1555 = vmatpush.msra.mxu0 %v431
    %1556 = vmatpush.msra.mxu0 %v424
    %1557 = vmatpush.msra.mxu0 %v417
    %1558 = vmatpush.msra.mxu0 %v410
    %1559 = vmatpush.msra.mxu0 %v403
    %1560 = vmatpush.msra.mxu0 %v396
    %1561 = vmatpush.msra.mxu0 %v389
    %1562 = vmatpush.msra.mxu0 %v382
    %1563 = vmatpush.msra.mxu0 %v375
    %1564 = vmatmul.f32.gmra.mxu0 %v24
    %v1565 = vpop.f32.mrf.mxu0
    %v1566 = vadd.f32 %v1543, %v1565
    %1567 = vmatmul.f32.gmra.mxu0 %v31
    %v1568 = vpop.f32.mrf.mxu0
    %v1569 = vadd.f32 %v1546, %v1568
    %1570 = vdwg.mxu0
    %1571 = vmatpush.msra.mxu0 %v592
    %1572 = vmatpush.msra.mxu0 %v585
    %1573 = vmatpush.msra.mxu0 %v578
    %1574 = vmatpush.msra.mxu0 %v571
    %1575 = vmatpush.msra.mxu0 %v564
    %1576 = vmatpush.msra.mxu0 %v557
    %1577 = vmatpush.msra.mxu0 %v550
    %1578 = vmatpush.msra.mxu0 %v543
    %1579 = vmatpush.msra.mxu0 %v536
    %1580 = vmatpush.msra.mxu0 %v529
    %1581 = vmatpush.msra.mxu0 %v522
    %1582 = vmatpush.msra.mxu0 %v515
    %1583 = vmatpush.msra.mxu0 %v508
    %1584 = vmatpush.msra.mxu0 %v501
    %1585 = vmatpush.msra.mxu0 %v494
    %1586 = vmatpush.msra.mxu0 %v487
    %1587 = vmatmul.f32.gmra.mxu0 %v25
    %v1588 = vpop.f32.mrf.mxu0
    %v1589 = vadd.f32 %v1566, %v1588
    %1590 = vmatmul.f32.gmra.mxu0 %v32
    %v1591 = vpop.f32.mrf.mxu0
    %v1592 = vadd.f32 %v1569, %v1591
    %1593 = vdwg.mxu0
    %1594 = vmatpush.msra.mxu0 %v704
    %1595 = vmatpush.msra.mxu0 %v697
    %1596 = vmatpush.msra.mxu0 %v690
    %1597 = vmatpush.msra.mxu0 %v683
    %1598 = vmatpush.msra.mxu0 %v676
    %1599 = vmatpush.msra.mxu0 %v669
    %1600 = vmatpush.msra.mxu0 %v662
    %1601 = vmatpush.msra.mxu0 %v655
    %1602 = vmatpush.msra.mxu0 %v648
    %1603 = vmatpush.msra.mxu0 %v641
    %1604 = vmatpush.msra.mxu0 %v634
    %1605 = vmatpush.msra.mxu0 %v627
    %1606 = vmatpush.msra.mxu0 %v620
    %1607 = vmatpush.msra.mxu0 %v613
    %1608 = vmatpush.msra.mxu0 %v606
    %1609 = vmatpush.msra.mxu0 %v599
    %1610 = vmatmul.f32.gmra.mxu0 %v26
    %v1611 = vpop.f32.mrf.mxu0
    %v1612 = vadd.f32 %v1589, %v1611
    %1613 = vmatmul.f32.gmra.mxu0 %v33
    %v1614 = vpop.f32.mrf.mxu0
    %v1615 = vadd.f32 %v1592, %v1614
    %1616 = vdwg.mxu0
    %1617 = vmatpush.msra.mxu0 %v816
    %1618 = vmatpush.msra.mxu0 %v809
    %1619 = vmatpush.msra.mxu0 %v802
    %1620 = vmatpush.msra.mxu0 %v795
    %1621 = vmatpush.msra.mxu0 %v788
    %1622 = vmatpush.msra.mxu0 %v781
    %1623 = vmatpush.msra.mxu0 %v774
    %1624 = vmatpush.msra.mxu0 %v767
    %1625 = vmatpush.msra.mxu0 %v760
    %1626 = vmatpush.msra.mxu0 %v753
    %1627 = vmatpush.msra.mxu0 %v746
    %1628 = vmatpush.msra.mxu0 %v739
    %1629 = vmatpush.msra.mxu0 %v732
    %1630 = vmatpush.msra.mxu0 %v725
    %1631 = vmatpush.msra.mxu0 %v718
    %1632 = vmatpush.msra.mxu0 %v711
    %1633 = vmatmul.f32.gmra.mxu0 %v27
    %v1634 = vpop.f32.mrf.mxu0
    %v1635 = vadd.f32 %v1612, %v1634
    %1636 = vmatmul.f32.gmra.mxu0 %v34
    %v1637 = vpop.f32.mrf.mxu0
    %v1638 = vadd.f32 %v1615, %v1637
    %1639 = vdwg.mxu0
    %1640 = vmatpush.msra.mxu0 %v145
    %1641 = vmatpush.msra.mxu0 %v138
    %1642 = vmatpush.msra.mxu0 %v131
    %1643 = vmatpush.msra.mxu0 %v124
    %1644 = vmatpush.msra.mxu0 %v117
    %1645 = vmatpush.msra.mxu0 %v110
    %1646 = vmatpush.msra.mxu0 %v103
    %1647 = vmatpush.msra.mxu0 %v96
    %1648 = vmatpush.msra.mxu0 %v89
    %1649 = vmatpush.msra.mxu0 %v82
    %1650 = vmatpush.msra.mxu0 %v75
    %1651 = vmatpush.msra.mxu0 %v68
    %1652 = vmatpush.msra.mxu0 %v61
    %1653 = vmatpush.msra.mxu0 %v54
    %1654 = vmatpush.msra.mxu0 %v47
    %1655 = vmatpush.msra.mxu0 %v40
    %1656 = vmatmul.f32.gmra.mxu0 %v21
    %v1657 = vpop.f32.mrf.mxu0
    %v1658 = vadd.f32 %v826, %v1657
    %1659 = vmatmul.f32.gmra.mxu0 %v28
    %v1660 = vpop.f32.mrf.mxu0
    %v1661 = vadd.f32 %v826, %v1660
    %1662 = vdwg.mxu0
    %1663 = vmatpush.msra.mxu0 %v257
    %1664 = vmatpush.msra.mxu0 %v250
    %1665 = vmatpush.msra.mxu0 %v243
    %1666 = vmatpush.msra.mxu0 %v236
    %1667 = vmatpush.msra.mxu0 %v229
    %1668 = vmatpush.msra.mxu0 %v222
    %1669 = vmatpush.msra.mxu0 %v215
    %1670 = vmatpush.msra.mxu0 %v208
    %1671 = vmatpush.msra.mxu0 %v201
    %1672 = vmatpush.msra.mxu0 %v194
    %1673 = vmatpush.msra.mxu0 %v187
    %1674 = vmatpush.msra.mxu0 %v180
    %1675 = vmatpush.msra.mxu0 %v173
    %1676 = vmatpush.msra.mxu0 %v166
    %1677 = vmatpush.msra.mxu0 %v159
    %1678 = vmatpush.msra.mxu0 %v152
    %1679 = vmatmul.f32.gmra.mxu0 %v22
    %v1680 = vpop.f32.mrf.mxu0
    %v1681 = vadd.f32 %v1658, %v1680
    %1682 = vmatmul.f32.gmra.mxu0 %v29
    %v1683 = vpop.f32.mrf.mxu0
    %v1684 = vadd.f32 %v1661, %v1683
    %1685 = vdwg.mxu0
    %1686 = vmatpush.msra.mxu0 %v369
    %1687 = vmatpush.msra.mxu0 %v362
    %1688 = vmatpush.msra.mxu0 %v355
    %1689 = vmatpush.msra.mxu0 %v348
    %1690 = vmatpush.msra.mxu0 %v341
    %1691 = vmatpush.msra.mxu0 %v334
    %1692 = vmatpush.msra.mxu0 %v327
    %1693 = vmatpush.msra.mxu0 %v320
    %1694 = vmatpush.msra.mxu0 %v313
    %1695 = vmatpush.msra.mxu0 %v306
    %1696 = vmatpush.msra.mxu0 %v299
    %1697 = vmatpush.msra.mxu0 %v292
    %1698 = vmatpush.msra.mxu0 %v285
    %1699 = vmatpush.msra.mxu0 %v278
    %1700 = vmatpush.msra.mxu0 %v271
    %1701 = vmatpush.msra.mxu0 %v264
    %1702 = vmatmul.f32.gmra.mxu0 %v23
    %v1703 = vpop.f32.mrf.mxu0
    %v1704 = vadd.f32 %v1681, %v1703
    %1705 = vmatmul.f32.gmra.mxu0 %v30
    %v1706 = vpop.f32.mrf.mxu0
    %v1707 = vadd.f32 %v1684, %v1706
    %1708 = vdwg.mxu0
    %1709 = vmatpush.msra.mxu0 %v481
    %1710 = vmatpush.msra.mxu0 %v474
    %1711 = vmatpush.msra.mxu0 %v467
    %1712 = vmatpush.msra.mxu0 %v460
    %1713 = vmatpush.msra.mxu0 %v453
    %1714 = vmatpush.msra.mxu0 %v446
    %1715 = vmatpush.msra.mxu0 %v439
    %1716 = vmatpush.msra.mxu0 %v432
    %1717 = vmatpush.msra.mxu0 %v425
    %1718 = vmatpush.msra.mxu0 %v418
    %1719 = vmatpush.msra.mxu0 %v411
    %1720 = vmatpush.msra.mxu0 %v404
    %1721 = vmatpush.msra.mxu0 %v397
    %1722 = vmatpush.msra.mxu0 %v390
    %1723 = vmatpush.msra.mxu0 %v383
    %1724 = vmatpush.msra.mxu0 %v376
    %1725 = vmatmul.f32.gmra.mxu0 %v24
    %v1726 = vpop.f32.mrf.mxu0
    %v1727 = vadd.f32 %v1704, %v1726
    %1728 = vmatmul.f32.gmra.mxu0 %v31
    %v1729 = vpop.f32.mrf.mxu0
    %v1730 = vadd.f32 %v1707, %v1729
    %1731 = vdwg.mxu0
    %1732 = vmatpush.msra.mxu0 %v593
    %1733 = vmatpush.msra.mxu0 %v586
    %1734 = vmatpush.msra.mxu0 %v579
    %1735 = vmatpush.msra.mxu0 %v572
    %1736 = vmatpush.msra.mxu0 %v565
    %1737 = vmatpush.msra.mxu0 %v558
    %1738 = vmatpush.msra.mxu0 %v551
    %1739 = vmatpush.msra.mxu0 %v544
    %1740 = vmatpush.msra.mxu0 %v537
    %1741 = vmatpush.msra.mxu0 %v530
    %1742 = vmatpush.msra.mxu0 %v523
    %1743 = vmatpush.msra.mxu0 %v516
    %1744 = vmatpush.msra.mxu0 %v509
    %1745 = vmatpush.msra.mxu0 %v502
    %1746 = vmatpush.msra.mxu0 %v495
    %1747 = vmatpush.msra.mxu0 %v488
    %1748 = vmatmul.f32.gmra.mxu0 %v25
    %v1749 = vpop.f32.mrf.mxu0
    %v1750 = vadd.f32 %v1727, %v1749
    %1751 = vmatmul.f32.gmra.mxu0 %v32
    %v1752 = vpop.f32.mrf.mxu0
    %v1753 = vadd.f32 %v1730, %v1752
    %1754 = vdwg.mxu0
    %1755 = vmatpush.msra.mxu0 %v705
    %1756 = vmatpush.msra.mxu0 %v698
    %1757 = vmatpush.msra.mxu0 %v691
    %1758 = vmatpush.msra.mxu0 %v684
    %1759 = vmatpush.msra.mxu0 %v677
    %1760 = vmatpush.msra.mxu0 %v670
    %1761 = vmatpush.msra.mxu0 %v663
    %1762 = vmatpush.msra.mxu0 %v656
    %1763 = vmatpush.msra.mxu0 %v649
    %1764 = vmatpush.msra.mxu0 %v642
    %1765 = vmatpush.msra.mxu0 %v635
    %1766 = vmatpush.msra.mxu0 %v628
    %1767 = vmatpush.msra.mxu0 %v621
    %1768 = vmatpush.msra.mxu0 %v614
    %1769 = vmatpush.msra.mxu0 %v607
    %1770 = vmatpush.msra.mxu0 %v600
    %1771 = vmatmul.f32.gmra.mxu0 %v26
    %v1772 = vpop.f32.mrf.mxu0
    %v1773 = vadd.f32 %v1750, %v1772
    %1774 = vmatmul.f32.gmra.mxu0 %v33
    %v1775 = vpop.f32.mrf.mxu0
    %v1776 = vadd.f32 %v1753, %v1775
    %1777 = vdwg.mxu0
    %1778 = vmatpush.msra.mxu0 %v817
    %1779 = vmatpush.msra.mxu0 %v810
    %1780 = vmatpush.msra.mxu0 %v803
    %1781 = vmatpush.msra.mxu0 %v796
    %1782 = vmatpush.msra.mxu0 %v789
    %1783 = vmatpush.msra.mxu0 %v782
    %1784 = vmatpush.msra.mxu0 %v775
    %1785 = vmatpush.msra.mxu0 %v768
    %1786 = vmatpush.msra.mxu0 %v761
    %1787 = vmatpush.msra.mxu0 %v754
    %1788 = vmatpush.msra.mxu0 %v747
    %1789 = vmatpush.msra.mxu0 %v740
    %1790 = vmatpush.msra.mxu0 %v733
    %1791 = vmatpush.msra.mxu0 %v726
    %1792 = vmatpush.msra.mxu0 %v719
    %1793 = vmatpush.msra.mxu0 %v712
    %1794 = vmatmul.f32.gmra.mxu0 %v27
    %v1795 = vpop.f32.mrf.mxu0
    %v1796 = vadd.f32 %v1773, %v1795
    %1797 = vmatmul.f32.gmra.mxu0 %v34
    %v1798 = vpop.f32.mrf.mxu0
    %v1799 = vadd.f32 %v1776, %v1798
    %1800 = vdwg.mxu0
    %1801 = vmatpush.msra.mxu0 %v146
    %1802 = vmatpush.msra.mxu0 %v139
    %1803 = vmatpush.msra.mxu0 %v132
    %1804 = vmatpush.msra.mxu0 %v125
    %1805 = vmatpush.msra.mxu0 %v118
    %1806 = vmatpush.msra.mxu0 %v111
    %1807 = vmatpush.msra.mxu0 %v104
    %1808 = vmatpush.msra.mxu0 %v97
    %1809 = vmatpush.msra.mxu0 %v90
    %1810 = vmatpush.msra.mxu0 %v83
    %1811 = vmatpush.msra.mxu0 %v76
    %1812 = vmatpush.msra.mxu0 %v69
    %1813 = vmatpush.msra.mxu0 %v62
    %1814 = vmatpush.msra.mxu0 %v55
    %1815 = vmatpush.msra.mxu0 %v48
    %1816 = vmatpush.msra.mxu0 %v41
    %1817 = vmatmul.f32.gmra.mxu0 %v21
    %v1818 = vpop.f32.mrf.mxu0
    %v1819 = vadd.f32 %v827, %v1818
    %1820 = vmatmul.f32.gmra.mxu0 %v28
    %v1821 = vpop.f32.mrf.mxu0
    %v1822 = vadd.f32 %v827, %v1821
    %1823 = vdwg.mxu0
    %1824 = vmatpush.msra.mxu0 %v258
    %1825 = vmatpush.msra.mxu0 %v251
    %1826 = vmatpush.msra.mxu0 %v244
    %1827 = vmatpush.msra.mxu0 %v237
    %1828 = vmatpush.msra.mxu0 %v230
    %1829 = vmatpush.msra.mxu0 %v223
    %1830 = vmatpush.msra.mxu0 %v216
    %1831 = vmatpush.msra.mxu0 %v209
    %1832 = vmatpush.msra.mxu0 %v202
    %1833 = vmatpush.msra.mxu0 %v195
    %1834 = vmatpush.msra.mxu0 %v188
    %1835 = vmatpush.msra.mxu0 %v181
    %1836 = vmatpush.msra.mxu0 %v174
    %1837 = vmatpush.msra.mxu0 %v167
    %1838 = vmatpush.msra.mxu0 %v160
    %1839 = vmatpush.msra.mxu0 %v153
    %1840 = vmatmul.f32.gmra.mxu0 %v22
    %v1841 = vpop.f32.mrf.mxu0
    %v1842 = vadd.f32 %v1819, %v1841
    %1843 = vmatmul.f32.gmra.mxu0 %v29
    %v1844 = vpop.f32.mrf.mxu0
    %v1845 = vadd.f32 %v1822, %v1844
    %1846 = vdwg.mxu0
    %1847 = vmatpush.msra.mxu0 %v370
    %1848 = vmatpush.msra.mxu0 %v363
    %1849 = vmatpush.msra.mxu0 %v356
    %1850 = vmatpush.msra.mxu0 %v349
    %1851 = vmatpush.msra.mxu0 %v342
    %1852 = vmatpush.msra.mxu0 %v335
    %1853 = vmatpush.msra.mxu0 %v328
    %1854 = vmatpush.msra.mxu0 %v321
    %1855 = vmatpush.msra.mxu0 %v314
    %1856 = vmatpush.msra.mxu0 %v307
    %1857 = vmatpush.msra.mxu0 %v300
    %1858 = vmatpush.msra.mxu0 %v293
    %1859 = vmatpush.msra.mxu0 %v286
    %1860 = vmatpush.msra.mxu0 %v279
    %1861 = vmatpush.msra.mxu0 %v272
    %1862 = vmatpush.msra.mxu0 %v265
    %1863 = vmatmul.f32.gmra.mxu0 %v23
    %v1864 = vpop.f32.mrf.mxu0
    %v1865 = vadd.f32 %v1842, %v1864
    %1866 = vmatmul.f32.gmra.mxu0 %v30
    %v1867 = vpop.f32.mrf.mxu0
    %v1868 = vadd.f32 %v1845, %v1867
    %1869 = vdwg.mxu0
    %1870 = vmatpush.msra.mxu0 %v482
    %1871 = vmatpush.msra.mxu0 %v475
    %1872 = vmatpush.msra.mxu0 %v468
    %1873 = vmatpush.msra.mxu0 %v461
    %1874 = vmatpush.msra.mxu0 %v454
    %1875 = vmatpush.msra.mxu0 %v447
    %1876 = vmatpush.msra.mxu0 %v440
    %1877 = vmatpush.msra.mxu0 %v433
    %1878 = vmatpush.msra.mxu0 %v426
    %1879 = vmatpush.msra.mxu0 %v419
    %1880 = vmatpush.msra.mxu0 %v412
    %1881 = vmatpush.msra.mxu0 %v405
    %1882 = vmatpush.msra.mxu0 %v398
    %1883 = vmatpush.msra.mxu0 %v391
    %1884 = vmatpush.msra.mxu0 %v384
    %1885 = vmatpush.msra.mxu0 %v377
    %1886 = vmatmul.f32.gmra.mxu0 %v24
    %v1887 = vpop.f32.mrf.mxu0
    %v1888 = vadd.f32 %v1865, %v1887
    %1889 = vmatmul.f32.gmra.mxu0 %v31
    %v1890 = vpop.f32.mrf.mxu0
    %v1891 = vadd.f32 %v1868, %v1890
    %1892 = vdwg.mxu0
    %1893 = vmatpush.msra.mxu0 %v594
    %1894 = vmatpush.msra.mxu0 %v587
    %1895 = vmatpush.msra.mxu0 %v580
    %1896 = vmatpush.msra.mxu0 %v573
    %1897 = vmatpush.msra.mxu0 %v566
    %1898 = vmatpush.msra.mxu0 %v559
    %1899 = vmatpush.msra.mxu0 %v552
    %1900 = vmatpush.msra.mxu0 %v545
    %1901 = vmatpush.msra.mxu0 %v538
    %1902 = vmatpush.msra.mxu0 %v531
    %1903 = vmatpush.msra.mxu0 %v524
    %1904 = vmatpush.msra.mxu0 %v517
    %1905 = vmatpush.msra.mxu0 %v510
    %1906 = vmatpush.msra.mxu0 %v503
    %1907 = vmatpush.msra.mxu0 %v496
    %1908 = vmatpush.msra.mxu0 %v489
    %1909 = vmatmul.f32.gmra.mxu0 %v25
    %v1910 = vpop.f32.mrf.mxu0
    %v1911 = vadd.f32 %v1888, %v1910
    %1912 = vmatmul.f32.gmra.mxu0 %v32
    %v1913 = vpop.f32.mrf.mxu0
    %v1914 = vadd.f32 %v1891, %v1913
    %1915 = vdwg.mxu0
    %1916 = vmatpush.msra.mxu0 %v706
    %1917 = vmatpush.msra.mxu0 %v699
    %1918 = vmatpush.msra.mxu0 %v692
    %1919 = vmatpush.msra.mxu0 %v685
    %1920 = vmatpush.msra.mxu0 %v678
    %1921 = vmatpush.msra.mxu0 %v671
    %1922 = vmatpush.msra.mxu0 %v664
    %1923 = vmatpush.msra.mxu0 %v657
    %1924 = vmatpush.msra.mxu0 %v650
    %1925 = vmatpush.msra.mxu0 %v643
    %1926 = vmatpush.msra.mxu0 %v636
    %1927 = vmatpush.msra.mxu0 %v629
    %1928 = vmatpush.msra.mxu0 %v622
    %1929 = vmatpush.msra.mxu0 %v615
    %1930 = vmatpush.msra.mxu0 %v608
    %1931 = vmatpush.msra.mxu0 %v601
    %1932 = vmatmul.f32.gmra.mxu0 %v26
    %v1933 = vpop.f32.mrf.mxu0
    %v1934 = vadd.f32 %v1911, %v1933
    %1935 = vmatmul.f32.gmra.mxu0 %v33
    %v1936 = vpop.f32.mrf.mxu0
    %v1937 = vadd.f32 %v1914, %v1936
    %1938 = vdwg.mxu0
    %1939 = vmatpush.msra.mxu0 %v818
    %1940 = vmatpush.msra.mxu0 %v811
    %1941 = vmatpush.msra.mxu0 %v804
    %1942 = vmatpush.msra.mxu0 %v797
    %1943 = vmatpush.msra.mxu0 %v790
    %1944 = vmatpush.msra.mxu0 %v783
    %1945 = vmatpush.msra.mxu0 %v776
    %1946 = vmatpush.msra.mxu0 %v769
    %1947 = vmatpush.msra.mxu0 %v762
    %1948 = vmatpush.msra.mxu0 %v755
    %1949 = vmatpush.msra.mxu0 %v748
    %1950 = vmatpush.msra.mxu0 %v741
    %1951 = vmatpush.msra.mxu0 %v734
    %1952 = vmatpush.msra.mxu0 %v727
    %1953 = vmatpush.msra.mxu0 %v720
    %1954 = vmatpush.msra.mxu0 %v713
    %1955 = vmatmul.f32.gmra.mxu0 %v27
    %v1956 = vpop.f32.mrf.mxu0
    %v1957 = vadd.f32 %v1934, %v1956
    %1958 = vmatmul.f32.gmra.mxu0 %v34
    %v1959 = vpop.f32.mrf.mxu0
    %v1960 = vadd.f32 %v1937, %v1959
    %1961 = vdwg.mxu0
    %v1962 = vmax.f32 %v991, 0.0
    %v1963 = vmax.f32 %v1152, 0.0
    %v1964 = vmax.f32 %v1313, 0.0
    %v1965 = vmax.f32 %v1474, 0.0
    %v1966 = vmax.f32 %v1635, 0.0
    %v1967 = vmax.f32 %v1796, 0.0
    %v1968 = vmax.f32 %v1957, 0.0
    %v1969 = vmax.f32 %v994, 0.0
    %v1970 = vmax.f32 %v1155, 0.0
    %v1971 = vmax.f32 %v1316, 0.0
    %v1972 = vmax.f32 %v1477, 0.0
    %v1973 = vmax.f32 %v1638, 0.0
    %v1974 = vmax.f32 %v1799, 0.0
    %v1975 = vmax.f32 %v1960, 0.0
    %v1976 = vld [vmem:[%s3] sm:$0xff]
    %v1977 = vld [vmem:[%s3 + $0x8] sm:$0xff]
    %v1978 = vld [vmem:[%s3 + $0x10] sm:$0xff]
    %v1979 = vld [vmem:[%s3 + $0x18] sm:$0xff]
    %v1980 = vld [vmem:[%s3 + $0x20] sm:$0xff]
    %v1981 = vld [vmem:[%s3 + $0x28] sm:$0xff]
    %v1982 = vld [vmem:[%s3 + $0x30] sm:$0xff]
    %v1983 = vld [vmem:[%s3 + $0x38] sm:$0xff]
    %v1984 = vld [vmem:[%s3 + $0x40] sm:$0xff]
    %v1985 = vld [vmem:[%s3 + $0x48] sm:$0xff]
    %v1986 = vld [vmem:[%s3 + $0x50] sm:$0xff]
    %v1987 = vld [vmem:[%s3 + $0x58] sm:$0xff]
    %v1988 = vld [vmem:[%s3 + $0x60] sm:$0xff]
    %v1989 = vld [vmem:[%s3 + $0x68] sm:$0xff]
    %v1990 = vld [vmem:[%s3 + $0x70] sm:$0xff]
    %v1991 = vld [vmem:[%s3 + $0x78] sm:$0xff]
    %v1992 = vld [vmem:[%s3 + $0x80] sm:$0xff]
    %v1993 = vld [vmem:[%s3 + $0x88] sm:$0xff]
    %v1994 = vld [vmem:[%s3 + $0x90] sm:$0xff]
    %v1995 = vld [vmem:[%s3 + $0x98] sm:$0xff]
    %v1996 = vld [vmem:[%s3 + $0xa0] sm:$0xff]
    %v1997 = vld [vmem:[%s3 + $0xa8] sm:$0xff]
    %v1998 = vld [vmem:[%s3 + $0xb0] sm:$0xff]
    %v1999 = vld [vmem:[%s3 + $0xb8] sm:$0xff]
    %v2000 = vld [vmem:[%s3 + $0xc0] sm:$0xff]
    %v2001 = vld [vmem:[%s3 + $0xc8] sm:$0xff]
    %v2002 = vld [vmem:[%s3 + $0xd0] sm:$0xff]
    %v2003 = vld [vmem:[%s3 + $0xd8] sm:$0xff]
    %v2004 = vld [vmem:[%s3 + $0xe0] sm:$0xff]
    %v2005 = vld [vmem:[%s3 + $0xe8] sm:$0xff]
    %v2006 = vld [vmem:[%s3 + $0xf0] sm:$0xff]
    %v2007 = vld [vmem:[%s3 + $0xf8] sm:$0xff]
    %v2008 = vld [vmem:[%s3 + $0x100] sm:$0xff]
    %v2009 = vld [vmem:[%s3 + $0x108] sm:$0xff]
    %v2010 = vld [vmem:[%s3 + $0x110] sm:$0xff]
    %v2011 = vld [vmem:[%s3 + $0x118] sm:$0xff]
    %v2012 = vld [vmem:[%s3 + $0x120] sm:$0xff]
    %v2013 = vld [vmem:[%s3 + $0x128] sm:$0xff]
    %v2014 = vld [vmem:[%s3 + $0x130] sm:$0xff]
    %v2015 = vld [vmem:[%s3 + $0x138] sm:$0xff]
    %v2016 = vld [vmem:[%s3 + $0x140] sm:$0xff]
    %v2017 = vld [vmem:[%s3 + $0x148] sm:$0xff]
    %v2018 = vld [vmem:[%s3 + $0x150] sm:$0xff]
    %v2019 = vld [vmem:[%s3 + $0x158] sm:$0xff]
    %v2020 = vld [vmem:[%s3 + $0x160] sm:$0xff]
    %v2021 = vld [vmem:[%s3 + $0x168] sm:$0xff]
    %v2022 = vld [vmem:[%s3 + $0x170] sm:$0xff]
    %v2023 = vld [vmem:[%s3 + $0x178] sm:$0xff]
    %v2024 = vld [vmem:[%s3 + $0x180] sm:$0xff]
    %v2025 = vld [vmem:[%s3 + $0x188] sm:$0xff]
    %v2026 = vld [vmem:[%s3 + $0x190] sm:$0xff]
    %v2027 = vld [vmem:[%s3 + $0x198] sm:$0xff]
    %v2028 = vld [vmem:[%s3 + $0x1a0] sm:$0xff]
    %v2029 = vld [vmem:[%s3 + $0x1a8] sm:$0xff]
    %v2030 = vld [vmem:[%s3 + $0x1b0] sm:$0xff]
    %v2031 = vld [vmem:[%s3 + $0x1b8] sm:$0xff]
    %v2032 = vld [vmem:[%s3 + $0x1c0] sm:$0xff]
    %v2033 = vld [vmem:[%s3 + $0x1c8] sm:$0xff]
    %v2034 = vld [vmem:[%s3 + $0x1d0] sm:$0xff]
    %v2035 = vld [vmem:[%s3 + $0x1d8] sm:$0xff]
    %v2036 = vld [vmem:[%s3 + $0x1e0] sm:$0xff]
    %v2037 = vld [vmem:[%s3 + $0x1e8] sm:$0xff]
    %v2038 = vld [vmem:[%s3 + $0x1f0] sm:$0xff]
    %v2039 = vld [vmem:[%s3 + $0x1f8] sm:$0xff]
    %v2040 = vld [vmem:[%s3 + $0x200] sm:$0xff]
    %v2041 = vld [vmem:[%s3 + $0x208] sm:$0xff]
    %v2042 = vld [vmem:[%s3 + $0x210] sm:$0xff]
    %v2043 = vld [vmem:[%s3 + $0x218] sm:$0xff]
    %v2044 = vld [vmem:[%s3 + $0x220] sm:$0xff]
    %v2045 = vld [vmem:[%s3 + $0x228] sm:$0xff]
    %v2046 = vld [vmem:[%s3 + $0x230] sm:$0xff]
    %v2047 = vld [vmem:[%s3 + $0x238] sm:$0xff]
    %v2048 = vld [vmem:[%s3 + $0x240] sm:$0xff]
    %v2049 = vld [vmem:[%s3 + $0x248] sm:$0xff]
    %v2050 = vld [vmem:[%s3 + $0x250] sm:$0xff]
    %v2051 = vld [vmem:[%s3 + $0x258] sm:$0xff]
    %v2052 = vld [vmem:[%s3 + $0x260] sm:$0xff]
    %v2053 = vld [vmem:[%s3 + $0x268] sm:$0xff]
    %v2054 = vld [vmem:[%s3 + $0x270] sm:$0xff]
    %v2055 = vld [vmem:[%s3 + $0x278] sm:$0xff]
    %v2056 = vld [vmem:[%s3 + $0x280] sm:$0xff]
    %v2057 = vld [vmem:[%s3 + $0x288] sm:$0xff]
    %v2058 = vld [vmem:[%s3 + $0x290] sm:$0xff]
    %v2059 = vld [vmem:[%s3 + $0x298] sm:$0xff]
    %v2060 = vld [vmem:[%s3 + $0x2a0] sm:$0xff]
    %v2061 = vld [vmem:[%s3 + $0x2a8] sm:$0xff]
    %v2062 = vld [vmem:[%s3 + $0x2b0] sm:$0xff]
    %v2063 = vld [vmem:[%s3 + $0x2b8] sm:$0xff]
    %v2064 = vld [vmem:[%s3 + $0x2c0] sm:$0xff]
    %v2065 = vld [vmem:[%s3 + $0x2c8] sm:$0xff]
    %v2066 = vld [vmem:[%s3 + $0x2d0] sm:$0xff]
    %v2067 = vld [vmem:[%s3 + $0x2d8] sm:$0xff]
    %v2068 = vld [vmem:[%s3 + $0x2e0] sm:$0xff]
    %v2069 = vld [vmem:[%s3 + $0x2e8] sm:$0xff]
    %v2070 = vld [vmem:[%s3 + $0x2f0] sm:$0xff]
    %v2071 = vld [vmem:[%s3 + $0x2f8] sm:$0xff]
    %v2072 = vld [vmem:[%s3 + $0x300] sm:$0xff]
    %v2073 = vld [vmem:[%s3 + $0x308] sm:$0xff]
    %v2074 = vld [vmem:[%s3 + $0x310] sm:$0xff]
    %v2075 = vld [vmem:[%s3 + $0x318] sm:$0xff]
    %v2076 = vld [vmem:[%s3 + $0x320] sm:$0xff]
    %v2077 = vld [vmem:[%s3 + $0x328] sm:$0xff]
    %v2078 = vld [vmem:[%s3 + $0x330] sm:$0xff]
    %v2079 = vld [vmem:[%s3 + $0x338] sm:$0xff]
    %v2080 = vld [vmem:[%s3 + $0x340] sm:$0xff]
    %v2081 = vld [vmem:[%s3 + $0x348] sm:$0xff]
    %v2082 = vld [vmem:[%s3 + $0x350] sm:$0xff]
    %v2083 = vld [vmem:[%s3 + $0x358] sm:$0xff]
    %v2084 = vld [vmem:[%s3 + $0x360] sm:$0xff]
    %v2085 = vld [vmem:[%s3 + $0x368] sm:$0xff]
    %v2086 = vld [vmem:[%s3 + $0x370] sm:$0xff]
    %v2087 = vld [vmem:[%s3 + $0x378] sm:$0xff]
    %v2088 = vld [vmem:[%s3 + $0x380] sm:$0xff]
    %v2089 = vld [vmem:[%s3 + $0x388] sm:$0xff]
    %v2090 = vld [vmem:[%s3 + $0x390] sm:$0xff]
    %v2091 = vld [vmem:[%s3 + $0x398] sm:$0xff]
    %v2092 = vld [vmem:[%s3 + $0x3a0] sm:$0xff]
    %v2093 = vld [vmem:[%s3 + $0x3a8] sm:$0xff]
    %v2094 = vld [vmem:[%s3 + $0x3b0] sm:$0xff]
    %v2095 = vld [vmem:[%s3 + $0x3b8] sm:$0xff]
    %v2096 = vld [vmem:[%s3 + $0x3c0] sm:$0xff]
    %v2097 = vld [vmem:[%s3 + $0x3c8] sm:$0xff]
    %v2098 = vld [vmem:[%s3 + $0x3d0] sm:$0xff]
    %v2099 = vld [vmem:[%s3 + $0x3d8] sm:$0xff]
    %v2100 = vld [vmem:[%s3 + $0x3e0] sm:$0xff]
    %v2101 = vld [vmem:[%s3 + $0x3e8] sm:$0xff]
    %v2102 = vld [vmem:[%s3 + $0x3f0] sm:$0xff]
    %v2103 = vld [vmem:[%s3 + $0x3f8] sm:$0xff]
    %v2104 = vld [vmem:[%s3 + $0x400] sm:$0xff]
    %v2105 = vld [vmem:[%s3 + $0x408] sm:$0xff]
    %v2106 = vld [vmem:[%s3 + $0x410] sm:$0xff]
    %v2107 = vld [vmem:[%s3 + $0x418] sm:$0xff]
    %v2108 = vld [vmem:[%s3 + $0x420] sm:$0xff]
    %v2109 = vld [vmem:[%s3 + $0x428] sm:$0xff]
    %v2110 = vld [vmem:[%s3 + $0x430] sm:$0xff]
    %v2111 = vld [vmem:[%s3 + $0x438] sm:$0xff]
    %v2112 = vld [vmem:[%s3 + $0x440] sm:$0xff]
    %v2113 = vld [vmem:[%s3 + $0x448] sm:$0xff]
    %v2114 = vld [vmem:[%s3 + $0x450] sm:$0xff]
    %v2115 = vld [vmem:[%s3 + $0x458] sm:$0xff]
    %v2116 = vld [vmem:[%s3 + $0x460] sm:$0xff]
    %v2117 = vld [vmem:[%s3 + $0x468] sm:$0xff]
    %v2118 = vld [vmem:[%s3 + $0x470] sm:$0xff]
    %v2119 = vld [vmem:[%s3 + $0x478] sm:$0xff]
    %v2120 = vld [vmem:[%s3 + $0x480] sm:$0xff]
    %v2121 = vld [vmem:[%s3 + $0x488] sm:$0xff]
    %v2122 = vld [vmem:[%s3 + $0x490] sm:$0xff]
    %v2123 = vld [vmem:[%s3 + $0x498] sm:$0xff]
    %v2124 = vld [vmem:[%s3 + $0x4a0] sm:$0xff]
    %v2125 = vld [vmem:[%s3 + $0x4a8] sm:$0xff]
    %v2126 = vld [vmem:[%s3 + $0x4b0] sm:$0xff]
    %v2127 = vld [vmem:[%s3 + $0x4b8] sm:$0xff]
    %v2128 = vld [vmem:[%s3 + $0x4c0] sm:$0xff]
    %v2129 = vld [vmem:[%s3 + $0x4c8] sm:$0xff]
    %v2130 = vld [vmem:[%s3 + $0x4d0] sm:$0xff]
    %v2131 = vld [vmem:[%s3 + $0x4d8] sm:$0xff]
    %v2132 = vld [vmem:[%s3 + $0x4e0] sm:$0xff]
    %v2133 = vld [vmem:[%s3 + $0x4e8] sm:$0xff]
    %v2134 = vld [vmem:[%s3 + $0x4f0] sm:$0xff]
    %v2135 = vld [vmem:[%s3 + $0x4f8] sm:$0xff]
    %v2136 = vld [vmem:[%s3 + $0x500] sm:$0xff]
    %v2137 = vld [vmem:[%s3 + $0x508] sm:$0xff]
    %v2138 = vld [vmem:[%s3 + $0x510] sm:$0xff]
    %v2139 = vld [vmem:[%s3 + $0x518] sm:$0xff]
    %v2140 = vld [vmem:[%s3 + $0x520] sm:$0xff]
    %v2141 = vld [vmem:[%s3 + $0x528] sm:$0xff]
    %v2142 = vld [vmem:[%s3 + $0x530] sm:$0xff]
    %v2143 = vld [vmem:[%s3 + $0x538] sm:$0xff]
    %v2144 = vld [vmem:[%s3 + $0x540] sm:$0xff]
    %v2145 = vld [vmem:[%s3 + $0x548] sm:$0xff]
    %v2146 = vld [vmem:[%s3 + $0x550] sm:$0xff]
    %v2147 = vld [vmem:[%s3 + $0x558] sm:$0xff]
    %v2148 = vld [vmem:[%s3 + $0x560] sm:$0xff]
    %v2149 = vld [vmem:[%s3 + $0x568] sm:$0xff]
    %v2150 = vld [vmem:[%s3 + $0x570] sm:$0xff]
    %v2151 = vld [vmem:[%s3 + $0x578] sm:$0xff]
    %v2152 = vld [vmem:[%s3 + $0x580] sm:$0xff]
    %v2153 = vld [vmem:[%s3 + $0x588] sm:$0xff]
    %v2154 = vld [vmem:[%s3 + $0x590] sm:$0xff]
    %v2155 = vld [vmem:[%s3 + $0x598] sm:$0xff]
    %v2156 = vld [vmem:[%s3 + $0x5a0] sm:$0xff]
    %v2157 = vld [vmem:[%s3 + $0x5a8] sm:$0xff]
    %v2158 = vld [vmem:[%s3 + $0x5b0] sm:$0xff]
    %v2159 = vld [vmem:[%s3 + $0x5b8] sm:$0xff]
    %v2160 = vld [vmem:[%s3 + $0x5c0] sm:$0xff]
    %v2161 = vld [vmem:[%s3 + $0x5c8] sm:$0xff]
    %v2162 = vld [vmem:[%s3 + $0x5d0] sm:$0xff]
    %v2163 = vld [vmem:[%s3 + $0x5d8] sm:$0xff]
    %v2164 = vld [vmem:[%s3 + $0x5e0] sm:$0xff]
    %v2165 = vld [vmem:[%s3 + $0x5e8] sm:$0xff]
    %v2166 = vld [vmem:[%s3 + $0x5f0] sm:$0xff]
    %v2167 = vld [vmem:[%s3 + $0x5f8] sm:$0xff]
    %v2168 = vld [vmem:[%s3 + $0x600] sm:$0xff]
    %v2169 = vld [vmem:[%s3 + $0x608] sm:$0xff]
    %v2170 = vld [vmem:[%s3 + $0x610] sm:$0xff]
    %v2171 = vld [vmem:[%s3 + $0x618] sm:$0xff]
    %v2172 = vld [vmem:[%s3 + $0x620] sm:$0xff]
    %v2173 = vld [vmem:[%s3 + $0x628] sm:$0xff]
    %v2174 = vld [vmem:[%s3 + $0x630] sm:$0xff]
    %v2175 = vld [vmem:[%s3 + $0x638] sm:$0xff]
    %v2176 = vld [vmem:[%s3 + $0x640] sm:$0xff]
    %v2177 = vld [vmem:[%s3 + $0x648] sm:$0xff]
    %v2178 = vld [vmem:[%s3 + $0x650] sm:$0xff]
    %v2179 = vld [vmem:[%s3 + $0x658] sm:$0xff]
    %v2180 = vld [vmem:[%s3 + $0x660] sm:$0xff]
    %v2181 = vld [vmem:[%s3 + $0x668] sm:$0xff]
    %v2182 = vld [vmem:[%s3 + $0x670] sm:$0xff]
    %v2183 = vld [vmem:[%s3 + $0x678] sm:$0xff]
    %v2184 = vld [vmem:[%s3 + $0x680] sm:$0xff]
    %v2185 = vld [vmem:[%s3 + $0x688] sm:$0xff]
    %v2186 = vld [vmem:[%s3 + $0x690] sm:$0xff]
    %v2187 = vld [vmem:[%s3 + $0x698] sm:$0xff]
    %v2188 = vld [vmem:[%s3 + $0x6a0] sm:$0xff]
    %v2189 = vld [vmem:[%s3 + $0x6a8] sm:$0xff]
    %v2190 = vld [vmem:[%s3 + $0x6b0] sm:$0xff]
    %v2191 = vld [vmem:[%s3 + $0x6b8] sm:$0xff]
    %v2192 = vld [vmem:[%s3 + $0x6c0] sm:$0xff]
    %v2193 = vld [vmem:[%s3 + $0x6c8] sm:$0xff]
    %v2194 = vld [vmem:[%s3 + $0x6d0] sm:$0xff]
    %v2195 = vld [vmem:[%s3 + $0x6d8] sm:$0xff]
    %v2196 = vld [vmem:[%s3 + $0x6e0] sm:$0xff]
    %v2197 = vld [vmem:[%s3 + $0x6e8] sm:$0xff]
    %v2198 = vld [vmem:[%s3 + $0x6f0] sm:$0xff]
    %v2199 = vld [vmem:[%s3 + $0x6f8] sm:$0xff]
    %v2200 = vld [vmem:[%s3 + $0x700] sm:$0xff]
    %v2201 = vld [vmem:[%s3 + $0x708] sm:$0xff]
    %v2202 = vld [vmem:[%s3 + $0x710] sm:$0xff]
    %v2203 = vld [vmem:[%s3 + $0x718] sm:$0xff]
    %v2204 = vld [vmem:[%s3 + $0x720] sm:$0xff]
    %v2205 = vld [vmem:[%s3 + $0x728] sm:$0xff]
    %v2206 = vld [vmem:[%s3 + $0x730] sm:$0xff]
    %v2207 = vld [vmem:[%s3 + $0x738] sm:$0xff]
    %v2208 = vld [vmem:[%s3 + $0x740] sm:$0xff]
    %v2209 = vld [vmem:[%s3 + $0x748] sm:$0xff]
    %v2210 = vld [vmem:[%s3 + $0x750] sm:$0xff]
    %v2211 = vld [vmem:[%s3 + $0x758] sm:$0xff]
    %v2212 = vld [vmem:[%s3 + $0x760] sm:$0xff]
    %v2213 = vld [vmem:[%s3 + $0x768] sm:$0xff]
    %v2214 = vld [vmem:[%s3 + $0x770] sm:$0xff]
    %v2215 = vld [vmem:[%s3 + $0x778] sm:$0xff]
    %v2216 = vld [vmem:[%s3 + $0x780] sm:$0xff]
    %v2217 = vld [vmem:[%s3 + $0x788] sm:$0xff]
    %v2218 = vld [vmem:[%s3 + $0x790] sm:$0xff]
    %v2219 = vld [vmem:[%s3 + $0x798] sm:$0xff]
    %v2220 = vld [vmem:[%s3 + $0x7a0] sm:$0xff]
    %v2221 = vld [vmem:[%s3 + $0x7a8] sm:$0xff]
    %v2222 = vld [vmem:[%s3 + $0x7b0] sm:$0xff]
    %v2223 = vld [vmem:[%s3 + $0x7b8] sm:$0xff]
    %v2224 = vld [vmem:[%s3 + $0x7c0] sm:$0xff]
    %v2225 = vld [vmem:[%s3 + $0x7c8] sm:$0xff]
    %v2226 = vld [vmem:[%s3 + $0x7d0] sm:$0xff]
    %v2227 = vld [vmem:[%s3 + $0x7d8] sm:$0xff]
    %v2228 = vld [vmem:[%s3 + $0x7e0] sm:$0xff]
    %v2229 = vld [vmem:[%s3 + $0x7e8] sm:$0xff]
    %v2230 = vld [vmem:[%s3 + $0x7f0] sm:$0xff]
    %v2231 = vld [vmem:[%s3 + $0x7f8] sm:$0xff]
    %v2232 = vld [vmem:[%s3 + $0x800] sm:$0xff]
    %v2233 = vld [vmem:[%s3 + $0x808] sm:$0xff]
    %v2234 = vld [vmem:[%s3 + $0x810] sm:$0xff]
    %v2235 = vld [vmem:[%s3 + $0x818] sm:$0xff]
    %v2236 = vld [vmem:[%s3 + $0x820] sm:$0xff]
    %v2237 = vld [vmem:[%s3 + $0x828] sm:$0xff]
    %v2238 = vld [vmem:[%s3 + $0x830] sm:$0xff]
    %v2239 = vld [vmem:[%s3 + $0x838] sm:$0xff]
    %v2240 = vld [vmem:[%s3 + $0x840] sm:$0xff]
    %v2241 = vld [vmem:[%s3 + $0x848] sm:$0xff]
    %v2242 = vld [vmem:[%s3 + $0x850] sm:$0xff]
    %v2243 = vld [vmem:[%s3 + $0x858] sm:$0xff]
    %v2244 = vld [vmem:[%s3 + $0x860] sm:$0xff]
    %v2245 = vld [vmem:[%s3 + $0x868] sm:$0xff]
    %v2246 = vld [vmem:[%s3 + $0x870] sm:$0xff]
    %v2247 = vld [vmem:[%s3 + $0x878] sm:$0xff]
    %v2248 = vld [vmem:[%s3 + $0x880] sm:$0xff]
    %v2249 = vld [vmem:[%s3 + $0x888] sm:$0xff]
    %v2250 = vld [vmem:[%s3 + $0x890] sm:$0xff]
    %v2251 = vld [vmem:[%s3 + $0x898] sm:$0xff]
    %v2252 = vld [vmem:[%s3 + $0x8a0] sm:$0xff]
    %v2253 = vld [vmem:[%s3 + $0x8a8] sm:$0xff]
    %v2254 = vld [vmem:[%s3 + $0x8b0] sm:$0xff]
    %v2255 = vld [vmem:[%s3 + $0x8b8] sm:$0xff]
    %v2256 = vld [vmem:[%s3 + $0x8c0] sm:$0xff]
    %v2257 = vld [vmem:[%s3 + $0x8c8] sm:$0xff]
    %v2258 = vld [vmem:[%s3 + $0x8d0] sm:$0xff]
    %v2259 = vld [vmem:[%s3 + $0x8d8] sm:$0xff]
    %v2260 = vld [vmem:[%s3 + $0x8e0] sm:$0xff]
    %v2261 = vld [vmem:[%s3 + $0x8e8] sm:$0xff]
    %v2262 = vld [vmem:[%s3 + $0x8f0] sm:$0xff]
    %v2263 = vld [vmem:[%s3 + $0x8f8] sm:$0xff]
    %v2264 = vld [vmem:[%s3 + $0x900] sm:$0xff]
    %v2265 = vld [vmem:[%s3 + $0x908] sm:$0xff]
    %v2266 = vld [vmem:[%s3 + $0x910] sm:$0xff]
    %v2267 = vld [vmem:[%s3 + $0x918] sm:$0xff]
    %v2268 = vld [vmem:[%s3 + $0x920] sm:$0xff]
    %v2269 = vld [vmem:[%s3 + $0x928] sm:$0xff]
    %v2270 = vld [vmem:[%s3 + $0x930] sm:$0xff]
    %v2271 = vld [vmem:[%s3 + $0x938] sm:$0xff]
    %v2272 = vld [vmem:[%s3 + $0x940] sm:$0xff]
    %v2273 = vld [vmem:[%s3 + $0x948] sm:$0xff]
    %v2274 = vld [vmem:[%s3 + $0x950] sm:$0xff]
    %v2275 = vld [vmem:[%s3 + $0x958] sm:$0xff]
    %v2276 = vld [vmem:[%s3 + $0x960] sm:$0xff]
    %v2277 = vld [vmem:[%s3 + $0x968] sm:$0xff]
    %v2278 = vld [vmem:[%s3 + $0x970] sm:$0xff]
    %v2279 = vld [vmem:[%s3 + $0x978] sm:$0xff]
    %v2280 = vld [vmem:[%s3 + $0x980] sm:$0xff]
    %v2281 = vld [vmem:[%s3 + $0x988] sm:$0xff]
    %v2282 = vld [vmem:[%s3 + $0x990] sm:$0xff]
    %v2283 = vld [vmem:[%s3 + $0x998] sm:$0xff]
    %v2284 = vld [vmem:[%s3 + $0x9a0] sm:$0xff]
    %v2285 = vld [vmem:[%s3 + $0x9a8] sm:$0xff]
    %v2286 = vld [vmem:[%s3 + $0x9b0] sm:$0xff]
    %v2287 = vld [vmem:[%s3 + $0x9b8] sm:$0xff]
    %v2288 = vld [vmem:[%s3 + $0x9c0] sm:$0xff]
    %v2289 = vld [vmem:[%s3 + $0x9c8] sm:$0xff]
    %v2290 = vld [vmem:[%s3 + $0x9d0] sm:$0xff]
    %v2291 = vld [vmem:[%s3 + $0x9d8] sm:$0xff]
    %v2292 = vld [vmem:[%s3 + $0x9e0] sm:$0xff]
    %v2293 = vld [vmem:[%s3 + $0x9e8] sm:$0xff]
    %v2294 = vld [vmem:[%s3 + $0x9f0] sm:$0xff]
    %v2295 = vld [vmem:[%s3 + $0x9f8] sm:$0xff]
    %v2296 = vld [vmem:[%s3 + $0xa00] sm:$0xff]
    %v2297 = vld [vmem:[%s3 + $0xa08] sm:$0xff]
    %v2298 = vld [vmem:[%s3 + $0xa10] sm:$0xff]
    %v2299 = vld [vmem:[%s3 + $0xa18] sm:$0xff]
    %v2300 = vld [vmem:[%s3 + $0xa20] sm:$0xff]
    %v2301 = vld [vmem:[%s3 + $0xa28] sm:$0xff]
    %v2302 = vld [vmem:[%s3 + $0xa30] sm:$0xff]
    %v2303 = vld [vmem:[%s3 + $0xa38] sm:$0xff]
    %v2304 = vld [vmem:[%s3 + $0xa40] sm:$0xff]
    %v2305 = vld [vmem:[%s3 + $0xa48] sm:$0xff]
    %v2306 = vld [vmem:[%s3 + $0xa50] sm:$0xff]
    %v2307 = vld [vmem:[%s3 + $0xa58] sm:$0xff]
    %v2308 = vld [vmem:[%s3 + $0xa60] sm:$0xff]
    %v2309 = vld [vmem:[%s3 + $0xa68] sm:$0xff]
    %v2310 = vld [vmem:[%s3 + $0xa70] sm:$0xff]
    %v2311 = vld [vmem:[%s3 + $0xa78] sm:$0xff]
    %v2312 = vld [vmem:[%s3 + $0xa80] sm:$0xff]
    %v2313 = vld [vmem:[%s3 + $0xa88] sm:$0xff]
    %v2314 = vld [vmem:[%s3 + $0xa90] sm:$0xff]
    %v2315 = vld [vmem:[%s3 + $0xa98] sm:$0xff]
    %v2316 = vld [vmem:[%s3 + $0xaa0] sm:$0xff]
    %v2317 = vld [vmem:[%s3 + $0xaa8] sm:$0xff]
    %v2318 = vld [vmem:[%s3 + $0xab0] sm:$0xff]
    %v2319 = vld [vmem:[%s3 + $0xab8] sm:$0xff]
    %v2320 = vld [vmem:[%s3 + $0xac0] sm:$0xff]
    %v2321 = vld [vmem:[%s3 + $0xac8] sm:$0xff]
    %v2322 = vld [vmem:[%s3 + $0xad0] sm:$0xff]
    %v2323 = vld [vmem:[%s3 + $0xad8] sm:$0xff]
    %v2324 = vld [vmem:[%s3 + $0xae0] sm:$0xff]
    %v2325 = vld [vmem:[%s3 + $0xae8] sm:$0xff]
    %v2326 = vld [vmem:[%s3 + $0xaf0] sm:$0xff]
    %v2327 = vld [vmem:[%s3 + $0xaf8] sm:$0xff]
    %v2328 = vld [vmem:[%s3 + $0xb00] sm:$0xff]
    %v2329 = vld [vmem:[%s3 + $0xb08] sm:$0xff]
    %v2330 = vld [vmem:[%s3 + $0xb10] sm:$0xff]
    %v2331 = vld [vmem:[%s3 + $0xb18] sm:$0xff]
    %v2332 = vld [vmem:[%s3 + $0xb20] sm:$0xff]
    %v2333 = vld [vmem:[%s3 + $0xb28] sm:$0xff]
    %v2334 = vld [vmem:[%s3 + $0xb30] sm:$0xff]
    %v2335 = vld [vmem:[%s3 + $0xb38] sm:$0xff]
    %v2336 = vld [vmem:[%s3 + $0xb40] sm:$0xff]
    %v2337 = vld [vmem:[%s3 + $0xb48] sm:$0xff]
    %v2338 = vld [vmem:[%s3 + $0xb50] sm:$0xff]
    %v2339 = vld [vmem:[%s3 + $0xb58] sm:$0xff]
    %v2340 = vld [vmem:[%s3 + $0xb60] sm:$0xff]
    %v2341 = vld [vmem:[%s3 + $0xb68] sm:$0xff]
    %v2342 = vld [vmem:[%s3 + $0xb70] sm:$0xff]
    %v2343 = vld [vmem:[%s3 + $0xb78] sm:$0xff]
    %v2344 = vld [vmem:[%s3 + $0xb80] sm:$0xff]
    %v2345 = vld [vmem:[%s3 + $0xb88] sm:$0xff]
    %v2346 = vld [vmem:[%s3 + $0xb90] sm:$0xff]
    %v2347 = vld [vmem:[%s3 + $0xb98] sm:$0xff]
    %v2348 = vld [vmem:[%s3 + $0xba0] sm:$0xff]
    %v2349 = vld [vmem:[%s3 + $0xba8] sm:$0xff]
    %v2350 = vld [vmem:[%s3 + $0xbb0] sm:$0xff]
    %v2351 = vld [vmem:[%s3 + $0xbb8] sm:$0xff]
    %v2352 = vld [vmem:[%s3 + $0xbc0] sm:$0xff]
    %v2353 = vld [vmem:[%s3 + $0xbc8] sm:$0xff]
    %v2354 = vld [vmem:[%s3 + $0xbd0] sm:$0xff]
    %v2355 = vld [vmem:[%s3 + $0xbd8] sm:$0xff]
    %v2356 = vld [vmem:[%s3 + $0xbe0] sm:$0xff]
    %v2357 = vld [vmem:[%s3 + $0xbe8] sm:$0xff]
    %v2358 = vld [vmem:[%s3 + $0xbf0] sm:$0xff]
    %v2359 = vld [vmem:[%s3 + $0xbf8] sm:$0xff]
    %v2360 = vld [vmem:[%s3 + $0xc00] sm:$0xff]
    %v2361 = vld [vmem:[%s3 + $0xc08] sm:$0xff]
    %v2362 = vld [vmem:[%s3 + $0xc10] sm:$0xff]
    %v2363 = vld [vmem:[%s3 + $0xc18] sm:$0xff]
    %v2364 = vld [vmem:[%s3 + $0xc20] sm:$0xff]
    %v2365 = vld [vmem:[%s3 + $0xc28] sm:$0xff]
    %v2366 = vld [vmem:[%s3 + $0xc30] sm:$0xff]
    %v2367 = vld [vmem:[%s3 + $0xc38] sm:$0xff]
    %v2368 = vld [vmem:[%s3 + $0xc40] sm:$0xff]
    %v2369 = vld [vmem:[%s3 + $0xc48] sm:$0xff]
    %v2370 = vld [vmem:[%s3 + $0xc50] sm:$0xff]
    %v2371 = vld [vmem:[%s3 + $0xc58] sm:$0xff]
    %v2372 = vld [vmem:[%s3 + $0xc60] sm:$0xff]
    %v2373 = vld [vmem:[%s3 + $0xc68] sm:$0xff]
    %v2374 = vld [vmem:[%s3 + $0xc70] sm:$0xff]
    %v2375 = vld [vmem:[%s3 + $0xc78] sm:$0xff]
    %v2376 = vld [vmem:[%s3 + $0xc80] sm:$0xff]
    %v2377 = vld [vmem:[%s3 + $0xc88] sm:$0xff]
    %v2378 = vld [vmem:[%s3 + $0xc90] sm:$0xff]
    %v2379 = vld [vmem:[%s3 + $0xc98] sm:$0xff]
    %v2380 = vld [vmem:[%s3 + $0xca0] sm:$0xff]
    %v2381 = vld [vmem:[%s3 + $0xca8] sm:$0xff]
    %v2382 = vld [vmem:[%s3 + $0xcb0] sm:$0xff]
    %v2383 = vld [vmem:[%s3 + $0xcb8] sm:$0xff]
    %v2384 = vld [vmem:[%s3 + $0xcc0] sm:$0xff]
    %v2385 = vld [vmem:[%s3 + $0xcc8] sm:$0xff]
    %v2386 = vld [vmem:[%s3 + $0xcd0] sm:$0xff]
    %v2387 = vld [vmem:[%s3 + $0xcd8] sm:$0xff]
    %v2388 = vld [vmem:[%s3 + $0xce0] sm:$0xff]
    %v2389 = vld [vmem:[%s3 + $0xce8] sm:$0xff]
    %v2390 = vld [vmem:[%s3 + $0xcf0] sm:$0xff]
    %v2391 = vld [vmem:[%s3 + $0xcf8] sm:$0xff]
    %v2392 = vld [vmem:[%s3 + $0xd00] sm:$0xff]
    %v2393 = vld [vmem:[%s3 + $0xd08] sm:$0xff]
    %v2394 = vld [vmem:[%s3 + $0xd10] sm:$0xff]
    %v2395 = vld [vmem:[%s3 + $0xd18] sm:$0xff]
    %v2396 = vld [vmem:[%s3 + $0xd20] sm:$0xff]
    %v2397 = vld [vmem:[%s3 + $0xd28] sm:$0xff]
    %v2398 = vld [vmem:[%s3 + $0xd30] sm:$0xff]
    %v2399 = vld [vmem:[%s3 + $0xd38] sm:$0xff]
    %v2400 = vld [vmem:[%s3 + $0xd40] sm:$0xff]
    %v2401 = vld [vmem:[%s3 + $0xd48] sm:$0xff]
    %v2402 = vld [vmem:[%s3 + $0xd50] sm:$0xff]
    %v2403 = vld [vmem:[%s3 + $0xd58] sm:$0xff]
    %v2404 = vld [vmem:[%s3 + $0xd60] sm:$0xff]
    %v2405 = vld [vmem:[%s3 + $0xd68] sm:$0xff]
    %v2406 = vld [vmem:[%s3 + $0xd70] sm:$0xff]
    %v2407 = vld [vmem:[%s3 + $0xd78] sm:$0xff]
    %v2408 = vld [vmem:[%s3 + $0xd80] sm:$0xff]
    %v2409 = vld [vmem:[%s3 + $0xd88] sm:$0xff]
    %v2410 = vld [vmem:[%s3 + $0xd90] sm:$0xff]
    %v2411 = vld [vmem:[%s3 + $0xd98] sm:$0xff]
    %v2412 = vld [vmem:[%s3 + $0xda0] sm:$0xff]
    %v2413 = vld [vmem:[%s3 + $0xda8] sm:$0xff]
    %v2414 = vld [vmem:[%s3 + $0xdb0] sm:$0xff]
    %v2415 = vld [vmem:[%s3 + $0xdb8] sm:$0xff]
    %v2416 = vld [vmem:[%s3 + $0xdc0] sm:$0xff]
    %v2417 = vld [vmem:[%s3 + $0xdc8] sm:$0xff]
    %v2418 = vld [vmem:[%s3 + $0xdd0] sm:$0xff]
    %v2419 = vld [vmem:[%s3 + $0xdd8] sm:$0xff]
    %v2420 = vld [vmem:[%s3 + $0xde0] sm:$0xff]
    %v2421 = vld [vmem:[%s3 + $0xde8] sm:$0xff]
    %v2422 = vld [vmem:[%s3 + $0xdf0] sm:$0xff]
    %v2423 = vld [vmem:[%s3 + $0xdf8] sm:$0xff]
    %v2424 = vld [vmem:[%s3 + $0xe00] sm:$0xff]
    %v2425 = vld [vmem:[%s3 + $0xe08] sm:$0xff]
    %v2426 = vld [vmem:[%s3 + $0xe10] sm:$0xff]
    %v2427 = vld [vmem:[%s3 + $0xe18] sm:$0xff]
    %v2428 = vld [vmem:[%s3 + $0xe20] sm:$0xff]
    %v2429 = vld [vmem:[%s3 + $0xe28] sm:$0xff]
    %v2430 = vld [vmem:[%s3 + $0xe30] sm:$0xff]
    %v2431 = vld [vmem:[%s3 + $0xe38] sm:$0xff]
    %v2432 = vld [vmem:[%s3 + $0xe40] sm:$0xff]
    %v2433 = vld [vmem:[%s3 + $0xe48] sm:$0xff]
    %v2434 = vld [vmem:[%s3 + $0xe50] sm:$0xff]
    %v2435 = vld [vmem:[%s3 + $0xe58] sm:$0xff]
    %v2436 = vld [vmem:[%s3 + $0xe60] sm:$0xff]
    %v2437 = vld [vmem:[%s3 + $0xe68] sm:$0xff]
    %v2438 = vld [vmem:[%s3 + $0xe70] sm:$0xff]
    %v2439 = vld [vmem:[%s3 + $0xe78] sm:$0xff]
    %v2440 = vld [vmem:[%s3 + $0xe80] sm:$0xff]
    %v2441 = vld [vmem:[%s3 + $0xe88] sm:$0xff]
    %v2442 = vld [vmem:[%s3 + $0xe90] sm:$0xff]
    %v2443 = vld [vmem:[%s3 + $0xe98] sm:$0xff]
    %v2444 = vld [vmem:[%s3 + $0xea0] sm:$0xff]
    %v2445 = vld [vmem:[%s3 + $0xea8] sm:$0xff]
    %v2446 = vld [vmem:[%s3 + $0xeb0] sm:$0xff]
    %v2447 = vld [vmem:[%s3 + $0xeb8] sm:$0xff]
    %v2448 = vld [vmem:[%s3 + $0xec0] sm:$0xff]
    %v2449 = vld [vmem:[%s3 + $0xec8] sm:$0xff]
    %v2450 = vld [vmem:[%s3 + $0xed0] sm:$0xff]
    %v2451 = vld [vmem:[%s3 + $0xed8] sm:$0xff]
    %v2452 = vld [vmem:[%s3 + $0xee0] sm:$0xff]
    %v2453 = vld [vmem:[%s3 + $0xee8] sm:$0xff]
    %v2454 = vld [vmem:[%s3 + $0xef0] sm:$0xff]
    %v2455 = vld [vmem:[%s3 + $0xef8] sm:$0xff]
    %v2456 = vld [vmem:[%s3 + $0xf00] sm:$0xff]
    %v2457 = vld [vmem:[%s3 + $0xf08] sm:$0xff]
    %v2458 = vld [vmem:[%s3 + $0xf10] sm:$0xff]
    %v2459 = vld [vmem:[%s3 + $0xf18] sm:$0xff]
    %v2460 = vld [vmem:[%s3 + $0xf20] sm:$0xff]
    %v2461 = vld [vmem:[%s3 + $0xf28] sm:$0xff]
    %v2462 = vld [vmem:[%s3 + $0xf30] sm:$0xff]
    %v2463 = vld [vmem:[%s3 + $0xf38] sm:$0xff]
    %v2464 = vld [vmem:[%s3 + $0xf40] sm:$0xff]
    %v2465 = vld [vmem:[%s3 + $0xf48] sm:$0xff]
    %v2466 = vld [vmem:[%s3 + $0xf50] sm:$0xff]
    %v2467 = vld [vmem:[%s3 + $0xf58] sm:$0xff]
    %v2468 = vld [vmem:[%s3 + $0xf60] sm:$0xff]
    %v2469 = vld [vmem:[%s3 + $0xf68] sm:$0xff]
    %v2470 = vld [vmem:[%s3 + $0xf70] sm:$0xff]
    %v2471 = vld [vmem:[%s3 + $0xf78] sm:$0xff]
    %v2472 = vld [vmem:[%s3 + $0xf80] sm:$0xff]
    %v2473 = vld [vmem:[%s3 + $0xf88] sm:$0xff]
    %v2474 = vld [vmem:[%s3 + $0xf90] sm:$0xff]
    %v2475 = vld [vmem:[%s3 + $0xf98] sm:$0xff]
    %v2476 = vld [vmem:[%s3 + $0xfa0] sm:$0xff]
    %v2477 = vld [vmem:[%s3 + $0xfa8] sm:$0xff]
    %v2478 = vld [vmem:[%s3 + $0xfb0] sm:$0xff]
    %v2479 = vld [vmem:[%s3 + $0xfb8] sm:$0xff]
    %v2480 = vld [vmem:[%s3 + $0xfc0] sm:$0xff]
    %v2481 = vld [vmem:[%s3 + $0xfc8] sm:$0xff]
    %v2482 = vld [vmem:[%s3 + $0xfd0] sm:$0xff]
    %v2483 = vld [vmem:[%s3 + $0xfd8] sm:$0xff]
    %v2484 = vld [vmem:[%s3 + $0xfe0] sm:$0xff]
    %v2485 = vld [vmem:[%s3 + $0xfe8] sm:$0xff]
    %v2486 = vld [vmem:[%s3 + $0xff0] sm:$0xff]
    %v2487 = vld [vmem:[%s3 + $0xff8] sm:$0xff]
    %v2488 = vld [vmem:[%s3 + $0x1000] sm:$0xff]
    %v2489 = vld [vmem:[%s3 + $0x1008] sm:$0xff]
    %v2490 = vld [vmem:[%s3 + $0x1010] sm:$0xff]
    %v2491 = vld [vmem:[%s3 + $0x1018] sm:$0xff]
    %v2492 = vld [vmem:[%s3 + $0x1020] sm:$0xff]
    %v2493 = vld [vmem:[%s3 + $0x1028] sm:$0xff]
    %v2494 = vld [vmem:[%s3 + $0x1030] sm:$0xff]
    %v2495 = vld [vmem:[%s3 + $0x1038] sm:$0xff]
    %v2496 = vld [vmem:[%s3 + $0x1040] sm:$0xff]
    %v2497 = vld [vmem:[%s3 + $0x1048] sm:$0xff]
    %v2498 = vld [vmem:[%s3 + $0x1050] sm:$0xff]
    %v2499 = vld [vmem:[%s3 + $0x1058] sm:$0xff]
    %v2500 = vld [vmem:[%s3 + $0x1060] sm:$0xff]
    %v2501 = vld [vmem:[%s3 + $0x1068] sm:$0xff]
    %v2502 = vld [vmem:[%s3 + $0x1070] sm:$0xff]
    %v2503 = vld [vmem:[%s3 + $0x1078] sm:$0xff]
    %v2504 = vld [vmem:[%s3 + $0x1080] sm:$0xff]
    %v2505 = vld [vmem:[%s3 + $0x1088] sm:$0xff]
    %v2506 = vld [vmem:[%s3 + $0x1090] sm:$0xff]
    %v2507 = vld [vmem:[%s3 + $0x1098] sm:$0xff]
    %v2508 = vld [vmem:[%s3 + $0x10a0] sm:$0xff]
    %v2509 = vld [vmem:[%s3 + $0x10a8] sm:$0xff]
    %v2510 = vld [vmem:[%s3 + $0x10b0] sm:$0xff]
    %v2511 = vld [vmem:[%s3 + $0x10b8] sm:$0xff]
    %v2512 = vld [vmem:[%s3 + $0x10c0] sm:$0xff]
    %v2513 = vld [vmem:[%s3 + $0x10c8] sm:$0xff]
    %v2514 = vld [vmem:[%s3 + $0x10d0] sm:$0xff]
    %v2515 = vld [vmem:[%s3 + $0x10d8] sm:$0xff]
    %v2516 = vld [vmem:[%s3 + $0x10e0] sm:$0xff]
    %v2517 = vld [vmem:[%s3 + $0x10e8] sm:$0xff]
    %v2518 = vld [vmem:[%s3 + $0x10f0] sm:$0xff]
    %v2519 = vld [vmem:[%s3 + $0x10f8] sm:$0xff]
    %v2520 = vld [vmem:[%s3 + $0x1100] sm:$0xff]
    %v2521 = vld [vmem:[%s3 + $0x1108] sm:$0xff]
    %v2522 = vld [vmem:[%s3 + $0x1110] sm:$0xff]
    %v2523 = vld [vmem:[%s3 + $0x1118] sm:$0xff]
    %v2524 = vld [vmem:[%s3 + $0x1120] sm:$0xff]
    %v2525 = vld [vmem:[%s3 + $0x1128] sm:$0xff]
    %v2526 = vld [vmem:[%s3 + $0x1130] sm:$0xff]
    %v2527 = vld [vmem:[%s3 + $0x1138] sm:$0xff]
    %v2528 = vld [vmem:[%s3 + $0x1140] sm:$0xff]
    %v2529 = vld [vmem:[%s3 + $0x1148] sm:$0xff]
    %v2530 = vld [vmem:[%s3 + $0x1150] sm:$0xff]
    %v2531 = vld [vmem:[%s3 + $0x1158] sm:$0xff]
    %v2532 = vld [vmem:[%s3 + $0x1160] sm:$0xff]
    %v2533 = vld [vmem:[%s3 + $0x1168] sm:$0xff]
    %v2534 = vld [vmem:[%s3 + $0x1170] sm:$0xff]
    %v2535 = vld [vmem:[%s3 + $0x1178] sm:$0xff]
    %v2536 = vld [vmem:[%s3 + $0x1180] sm:$0xff]
    %v2537 = vld [vmem:[%s3 + $0x1188] sm:$0xff]
    %v2538 = vld [vmem:[%s3 + $0x1190] sm:$0xff]
    %v2539 = vld [vmem:[%s3 + $0x1198] sm:$0xff]
    %v2540 = vld [vmem:[%s3 + $0x11a0] sm:$0xff]
    %v2541 = vld [vmem:[%s3 + $0x11a8] sm:$0xff]
    %v2542 = vld [vmem:[%s3 + $0x11b0] sm:$0xff]
    %v2543 = vld [vmem:[%s3 + $0x11b8] sm:$0xff]
    %v2544 = vld [vmem:[%s3 + $0x11c0] sm:$0xff]
    %v2545 = vld [vmem:[%s3 + $0x11c8] sm:$0xff]
    %v2546 = vld [vmem:[%s3 + $0x11d0] sm:$0xff]
    %v2547 = vld [vmem:[%s3 + $0x11d8] sm:$0xff]
    %v2548 = vld [vmem:[%s3 + $0x11e0] sm:$0xff]
    %v2549 = vld [vmem:[%s3 + $0x11e8] sm:$0xff]
    %v2550 = vld [vmem:[%s3 + $0x11f0] sm:$0xff]
    %v2551 = vld [vmem:[%s3 + $0x11f8] sm:$0xff]
    %v2552 = vld [vmem:[%s3 + $0x1200] sm:$0xff]
    %v2553 = vld [vmem:[%s3 + $0x1208] sm:$0xff]
    %v2554 = vld [vmem:[%s3 + $0x1210] sm:$0xff]
    %v2555 = vld [vmem:[%s3 + $0x1218] sm:$0xff]
    %v2556 = vld [vmem:[%s3 + $0x1220] sm:$0xff]
    %v2557 = vld [vmem:[%s3 + $0x1228] sm:$0xff]
    %v2558 = vld [vmem:[%s3 + $0x1230] sm:$0xff]
    %v2559 = vld [vmem:[%s3 + $0x1238] sm:$0xff]
    %v2560 = vld [vmem:[%s3 + $0x1240] sm:$0xff]
    %v2561 = vld [vmem:[%s3 + $0x1248] sm:$0xff]
    %v2562 = vld [vmem:[%s3 + $0x1250] sm:$0xff]
    %v2563 = vld [vmem:[%s3 + $0x1258] sm:$0xff]
    %v2564 = vld [vmem:[%s3 + $0x1260] sm:$0xff]
    %v2565 = vld [vmem:[%s3 + $0x1268] sm:$0xff]
    %v2566 = vld [vmem:[%s3 + $0x1270] sm:$0xff]
    %v2567 = vld [vmem:[%s3 + $0x1278] sm:$0xff]
    %v2568 = vld [vmem:[%s3 + $0x1280] sm:$0xff]
    %v2569 = vld [vmem:[%s3 + $0x1288] sm:$0xff]
    %v2570 = vld [vmem:[%s3 + $0x1290] sm:$0xff]
    %v2571 = vld [vmem:[%s3 + $0x1298] sm:$0xff]
    %v2572 = vld [vmem:[%s3 + $0x12a0] sm:$0xff]
    %v2573 = vld [vmem:[%s3 + $0x12a8] sm:$0xff]
    %v2574 = vld [vmem:[%s3 + $0x12b0] sm:$0xff]
    %v2575 = vld [vmem:[%s3 + $0x12b8] sm:$0xff]
    %v2576 = vld [vmem:[%s3 + $0x12c0] sm:$0xff]
    %v2577 = vld [vmem:[%s3 + $0x12c8] sm:$0xff]
    %v2578 = vld [vmem:[%s3 + $0x12d0] sm:$0xff]
    %v2579 = vld [vmem:[%s3 + $0x12d8] sm:$0xff]
    %v2580 = vld [vmem:[%s3 + $0x12e0] sm:$0xff]
    %v2581 = vld [vmem:[%s3 + $0x12e8] sm:$0xff]
    %v2582 = vld [vmem:[%s3 + $0x12f0] sm:$0xff]
    %v2583 = vld [vmem:[%s3 + $0x12f8] sm:$0xff]
    %v2584 = vld [vmem:[%s3 + $0x1300] sm:$0xff]
    %v2585 = vld [vmem:[%s3 + $0x1308] sm:$0xff]
    %v2586 = vld [vmem:[%s3 + $0x1310] sm:$0xff]
    %v2587 = vld [vmem:[%s3 + $0x1318] sm:$0xff]
    %v2588 = vld [vmem:[%s3 + $0x1320] sm:$0xff]
    %v2589 = vld [vmem:[%s3 + $0x1328] sm:$0xff]
    %v2590 = vld [vmem:[%s3 + $0x1330] sm:$0xff]
    %v2591 = vld [vmem:[%s3 + $0x1338] sm:$0xff]
    %v2592 = vld [vmem:[%s3 + $0x1340] sm:$0xff]
    %v2593 = vld [vmem:[%s3 + $0x1348] sm:$0xff]
    %v2594 = vld [vmem:[%s3 + $0x1350] sm:$0xff]
    %v2595 = vld [vmem:[%s3 + $0x1358] sm:$0xff]
    %v2596 = vld [vmem:[%s3 + $0x1360] sm:$0xff]
    %v2597 = vld [vmem:[%s3 + $0x1368] sm:$0xff]
    %v2598 = vld [vmem:[%s3 + $0x1370] sm:$0xff]
    %v2599 = vld [vmem:[%s3 + $0x1378] sm:$0xff]
    %v2600 = vld [vmem:[%s3 + $0x1380] sm:$0xff]
    %v2601 = vld [vmem:[%s3 + $0x1388] sm:$0xff]
    %v2602 = vld [vmem:[%s3 + $0x1390] sm:$0xff]
    %v2603 = vld [vmem:[%s3 + $0x1398] sm:$0xff]
    %v2604 = vld [vmem:[%s3 + $0x13a0] sm:$0xff]
    %v2605 = vld [vmem:[%s3 + $0x13a8] sm:$0xff]
    %v2606 = vld [vmem:[%s3 + $0x13b0] sm:$0xff]
    %v2607 = vld [vmem:[%s3 + $0x13b8] sm:$0xff]
    %v2608 = vld [vmem:[%s3 + $0x13c0] sm:$0xff]
    %v2609 = vld [vmem:[%s3 + $0x13c8] sm:$0xff]
    %v2610 = vld [vmem:[%s3 + $0x13d0] sm:$0xff]
    %v2611 = vld [vmem:[%s3 + $0x13d8] sm:$0xff]
    %v2612 = vld [vmem:[%s3 + $0x13e0] sm:$0xff]
    %v2613 = vld [vmem:[%s3 + $0x13e8] sm:$0xff]
    %v2614 = vld [vmem:[%s3 + $0x13f0] sm:$0xff]
    %v2615 = vld [vmem:[%s3 + $0x13f8] sm:$0xff]
    %v2616 = vld [vmem:[%s3 + $0x1400] sm:$0xff]
    %v2617 = vld [vmem:[%s3 + $0x1408] sm:$0xff]
    %v2618 = vld [vmem:[%s3 + $0x1410] sm:$0xff]
    %v2619 = vld [vmem:[%s3 + $0x1418] sm:$0xff]
    %v2620 = vld [vmem:[%s3 + $0x1420] sm:$0xff]
    %v2621 = vld [vmem:[%s3 + $0x1428] sm:$0xff]
    %v2622 = vld [vmem:[%s3 + $0x1430] sm:$0xff]
    %v2623 = vld [vmem:[%s3 + $0x1438] sm:$0xff]
    %v2624 = vld [vmem:[%s3 + $0x1440] sm:$0xff]
    %v2625 = vld [vmem:[%s3 + $0x1448] sm:$0xff]
    %v2626 = vld [vmem:[%s3 + $0x1450] sm:$0xff]
    %v2627 = vld [vmem:[%s3 + $0x1458] sm:$0xff]
    %v2628 = vld [vmem:[%s3 + $0x1460] sm:$0xff]
    %v2629 = vld [vmem:[%s3 + $0x1468] sm:$0xff]
    %v2630 = vld [vmem:[%s3 + $0x1470] sm:$0xff]
    %v2631 = vld [vmem:[%s3 + $0x1478] sm:$0xff]
    %v2632 = vld [vmem:[%s3 + $0x1480] sm:$0xff]
    %v2633 = vld [vmem:[%s3 + $0x1488] sm:$0xff]
    %v2634 = vld [vmem:[%s3 + $0x1490] sm:$0xff]
    %v2635 = vld [vmem:[%s3 + $0x1498] sm:$0xff]
    %v2636 = vld [vmem:[%s3 + $0x14a0] sm:$0xff]
    %v2637 = vld [vmem:[%s3 + $0x14a8] sm:$0xff]
    %v2638 = vld [vmem:[%s3 + $0x14b0] sm:$0xff]
    %v2639 = vld [vmem:[%s3 + $0x14b8] sm:$0xff]
    %v2640 = vld [vmem:[%s3 + $0x14c0] sm:$0xff]
    %v2641 = vld [vmem:[%s3 + $0x14c8] sm:$0xff]
    %v2642 = vld [vmem:[%s3 + $0x14d0] sm:$0xff]
    %v2643 = vld [vmem:[%s3 + $0x14d8] sm:$0xff]
    %v2644 = vld [vmem:[%s3 + $0x14e0] sm:$0xff]
    %v2645 = vld [vmem:[%s3 + $0x14e8] sm:$0xff]
    %v2646 = vld [vmem:[%s3 + $0x14f0] sm:$0xff]
    %v2647 = vld [vmem:[%s3 + $0x14f8] sm:$0xff]
    %v2648 = vld [vmem:[%s3 + $0x1500] sm:$0xff]
    %v2649 = vld [vmem:[%s3 + $0x1508] sm:$0xff]
    %v2650 = vld [vmem:[%s3 + $0x1510] sm:$0xff]
    %v2651 = vld [vmem:[%s3 + $0x1518] sm:$0xff]
    %v2652 = vld [vmem:[%s3 + $0x1520] sm:$0xff]
    %v2653 = vld [vmem:[%s3 + $0x1528] sm:$0xff]
    %v2654 = vld [vmem:[%s3 + $0x1530] sm:$0xff]
    %v2655 = vld [vmem:[%s3 + $0x1538] sm:$0xff]
    %v2656 = vld [vmem:[%s3 + $0x1540] sm:$0xff]
    %v2657 = vld [vmem:[%s3 + $0x1548] sm:$0xff]
    %v2658 = vld [vmem:[%s3 + $0x1550] sm:$0xff]
    %v2659 = vld [vmem:[%s3 + $0x1558] sm:$0xff]
    %v2660 = vld [vmem:[%s3 + $0x1560] sm:$0xff]
    %v2661 = vld [vmem:[%s3 + $0x1568] sm:$0xff]
    %v2662 = vld [vmem:[%s3 + $0x1570] sm:$0xff]
    %v2663 = vld [vmem:[%s3 + $0x1578] sm:$0xff]
    %v2664 = vld [vmem:[%s3 + $0x1580] sm:$0xff]
    %v2665 = vld [vmem:[%s3 + $0x1588] sm:$0xff]
    %v2666 = vld [vmem:[%s3 + $0x1590] sm:$0xff]
    %v2667 = vld [vmem:[%s3 + $0x1598] sm:$0xff]
    %v2668 = vld [vmem:[%s3 + $0x15a0] sm:$0xff]
    %v2669 = vld [vmem:[%s3 + $0x15a8] sm:$0xff]
    %v2670 = vld [vmem:[%s3 + $0x15b0] sm:$0xff]
    %v2671 = vld [vmem:[%s3 + $0x15b8] sm:$0xff]
    %v2672 = vld [vmem:[%s3 + $0x15c0] sm:$0xff]
    %v2673 = vld [vmem:[%s3 + $0x15c8] sm:$0xff]
    %v2674 = vld [vmem:[%s3 + $0x15d0] sm:$0xff]
    %v2675 = vld [vmem:[%s3 + $0x15d8] sm:$0xff]
    %v2676 = vld [vmem:[%s3 + $0x15e0] sm:$0xff]
    %v2677 = vld [vmem:[%s3 + $0x15e8] sm:$0xff]
    %v2678 = vld [vmem:[%s3 + $0x15f0] sm:$0xff]
    %v2679 = vld [vmem:[%s3 + $0x15f8] sm:$0xff]
    %v2680 = vld [vmem:[%s3 + $0x1600] sm:$0xff]
    %v2681 = vld [vmem:[%s3 + $0x1608] sm:$0xff]
    %v2682 = vld [vmem:[%s3 + $0x1610] sm:$0xff]
    %v2683 = vld [vmem:[%s3 + $0x1618] sm:$0xff]
    %v2684 = vld [vmem:[%s3 + $0x1620] sm:$0xff]
    %v2685 = vld [vmem:[%s3 + $0x1628] sm:$0xff]
    %v2686 = vld [vmem:[%s3 + $0x1630] sm:$0xff]
    %v2687 = vld [vmem:[%s3 + $0x1638] sm:$0xff]
    %v2688 = vld [vmem:[%s3 + $0x1640] sm:$0xff]
    %v2689 = vld [vmem:[%s3 + $0x1648] sm:$0xff]
    %v2690 = vld [vmem:[%s3 + $0x1650] sm:$0xff]
    %v2691 = vld [vmem:[%s3 + $0x1658] sm:$0xff]
    %v2692 = vld [vmem:[%s3 + $0x1660] sm:$0xff]
    %v2693 = vld [vmem:[%s3 + $0x1668] sm:$0xff]
    %v2694 = vld [vmem:[%s3 + $0x1670] sm:$0xff]
    %v2695 = vld [vmem:[%s3 + $0x1678] sm:$0xff]
    %v2696 = vld [vmem:[%s3 + $0x1680] sm:$0xff]
    %v2697 = vld [vmem:[%s3 + $0x1688] sm:$0xff]
    %v2698 = vld [vmem:[%s3 + $0x1690] sm:$0xff]
    %v2699 = vld [vmem:[%s3 + $0x1698] sm:$0xff]
    %v2700 = vld [vmem:[%s3 + $0x16a0] sm:$0xff]
    %v2701 = vld [vmem:[%s3 + $0x16a8] sm:$0xff]
    %v2702 = vld [vmem:[%s3 + $0x16b0] sm:$0xff]
    %v2703 = vld [vmem:[%s3 + $0x16b8] sm:$0xff]
    %v2704 = vld [vmem:[%s3 + $0x16c0] sm:$0xff]
    %v2705 = vld [vmem:[%s3 + $0x16c8] sm:$0xff]
    %v2706 = vld [vmem:[%s3 + $0x16d0] sm:$0xff]
    %v2707 = vld [vmem:[%s3 + $0x16d8] sm:$0xff]
    %v2708 = vld [vmem:[%s3 + $0x16e0] sm:$0xff]
    %v2709 = vld [vmem:[%s3 + $0x16e8] sm:$0xff]
    %v2710 = vld [vmem:[%s3 + $0x16f0] sm:$0xff]
    %v2711 = vld [vmem:[%s3 + $0x16f8] sm:$0xff]
    %v2712 = vld [vmem:[%s3 + $0x1700] sm:$0xff]
    %v2713 = vld [vmem:[%s3 + $0x1708] sm:$0xff]
    %v2714 = vld [vmem:[%s3 + $0x1710] sm:$0xff]
    %v2715 = vld [vmem:[%s3 + $0x1718] sm:$0xff]
    %v2716 = vld [vmem:[%s3 + $0x1720] sm:$0xff]
    %v2717 = vld [vmem:[%s3 + $0x1728] sm:$0xff]
    %v2718 = vld [vmem:[%s3 + $0x1730] sm:$0xff]
    %v2719 = vld [vmem:[%s3 + $0x1738] sm:$0xff]
    %v2720 = vld [vmem:[%s3 + $0x1740] sm:$0xff]
    %v2721 = vld [vmem:[%s3 + $0x1748] sm:$0xff]
    %v2722 = vld [vmem:[%s3 + $0x1750] sm:$0xff]
    %v2723 = vld [vmem:[%s3 + $0x1758] sm:$0xff]
    %v2724 = vld [vmem:[%s3 + $0x1760] sm:$0xff]
    %v2725 = vld [vmem:[%s3 + $0x1768] sm:$0xff]
    %v2726 = vld [vmem:[%s3 + $0x1770] sm:$0xff]
    %v2727 = vld [vmem:[%s3 + $0x1778] sm:$0xff]
    %v2728 = vld [vmem:[%s3 + $0x1780] sm:$0xff]
    %v2729 = vld [vmem:[%s3 + $0x1788] sm:$0xff]
    %v2730 = vld [vmem:[%s3 + $0x1790] sm:$0xff]
    %v2731 = vld [vmem:[%s3 + $0x1798] sm:$0xff]
    %v2732 = vld [vmem:[%s3 + $0x17a0] sm:$0xff]
    %v2733 = vld [vmem:[%s3 + $0x17a8] sm:$0xff]
    %v2734 = vld [vmem:[%s3 + $0x17b0] sm:$0xff]
    %v2735 = vld [vmem:[%s3 + $0x17b8] sm:$0xff]
    %v2736 = vld [vmem:[%s3 + $0x17c0] sm:$0xff]
    %v2737 = vld [vmem:[%s3 + $0x17c8] sm:$0xff]
    %v2738 = vld [vmem:[%s3 + $0x17d0] sm:$0xff]
    %v2739 = vld [vmem:[%s3 + $0x17d8] sm:$0xff]
    %v2740 = vld [vmem:[%s3 + $0x17e0] sm:$0xff]
    %v2741 = vld [vmem:[%s3 + $0x17e8] sm:$0xff]
    %v2742 = vld [vmem:[%s3 + $0x17f0] sm:$0xff]
    %v2743 = vld [vmem:[%s3 + $0x17f8] sm:$0xff]
    %v2744 = vld [vmem:[%s3 + $0x1800] sm:$0xff]
    %v2745 = vld [vmem:[%s3 + $0x1808] sm:$0xff]
    %v2746 = vld [vmem:[%s3 + $0x1810] sm:$0xff]
    %v2747 = vld [vmem:[%s3 + $0x1818] sm:$0xff]
    %v2748 = vld [vmem:[%s3 + $0x1820] sm:$0xff]
    %v2749 = vld [vmem:[%s3 + $0x1828] sm:$0xff]
    %v2750 = vld [vmem:[%s3 + $0x1830] sm:$0xff]
    %v2751 = vld [vmem:[%s3 + $0x1838] sm:$0xff]
    %v2752 = vld [vmem:[%s3 + $0x1840] sm:$0xff]
    %v2753 = vld [vmem:[%s3 + $0x1848] sm:$0xff]
    %v2754 = vld [vmem:[%s3 + $0x1850] sm:$0xff]
    %v2755 = vld [vmem:[%s3 + $0x1858] sm:$0xff]
    %v2756 = vld [vmem:[%s3 + $0x1860] sm:$0xff]
    %v2757 = vld [vmem:[%s3 + $0x1868] sm:$0xff]
    %v2758 = vld [vmem:[%s3 + $0x1870] sm:$0xff]
    %v2759 = vld [vmem:[%s3 + $0x1878] sm:$0xff]
    %v2760 = vld [vmem:[%s4] sm:$0xff]
    %v2762 = vperm.slane %v2760, 0
    %v2763 = vperm.slane %v2760, 1
    %v2764 = vperm.slane %v2760, 2
    %v2765 = vperm.slane %v2760, 3
    %v2766 = vperm.slane %v2760, 4
    %v2767 = vperm.slane %v2760, 5
    %v2768 = vperm.slane %v2760, 6
    %2776 = vmatpush.msra.mxu0 %v2081
    %2777 = vmatpush.msra.mxu0 %v2074
    %2778 = vmatpush.msra.mxu0 %v2067
    %2779 = vmatpush.msra.mxu0 %v2060
    %2780 = vmatpush.msra.mxu0 %v2053
    %2781 = vmatpush.msra.mxu0 %v2046
    %2782 = vmatpush.msra.mxu0 %v2039
    %2783 = vmatpush.msra.mxu0 %v2032
    %2784 = vmatpush.msra.mxu0 %v2025
    %2785 = vmatpush.msra.mxu0 %v2018
    %2786 = vmatpush.msra.mxu0 %v2011
    %2787 = vmatpush.msra.mxu0 %v2004
    %2788 = vmatpush.msra.mxu0 %v1997
    %2789 = vmatpush.msra.mxu0 %v1990
    %2790 = vmatpush.msra.mxu0 %v1983
    %2791 = vmatpush.msra.mxu0 %v1976
    %2792 = vmatmul.f32.gmra.mxu0 %v1962
    %v2793 = vpop.f32.mrf.mxu0
    %v2794 = vadd.f32 %v2762, %v2793
    %2795 = vmatmul.f32.gmra.mxu0 %v1969
    %v2796 = vpop.f32.mrf.mxu0
    %v2797 = vadd.f32 %v2762, %v2796
    %2798 = vdwg.mxu0
    %2799 = vmatpush.msra.mxu0 %v2193
    %2800 = vmatpush.msra.mxu0 %v2186
    %2801 = vmatpush.msra.mxu0 %v2179
    %2802 = vmatpush.msra.mxu0 %v2172
    %2803 = vmatpush.msra.mxu0 %v2165
    %2804 = vmatpush.msra.mxu0 %v2158
    %2805 = vmatpush.msra.mxu0 %v2151
    %2806 = vmatpush.msra.mxu0 %v2144
    %2807 = vmatpush.msra.mxu0 %v2137
    %2808 = vmatpush.msra.mxu0 %v2130
    %2809 = vmatpush.msra.mxu0 %v2123
    %2810 = vmatpush.msra.mxu0 %v2116
    %2811 = vmatpush.msra.mxu0 %v2109
    %2812 = vmatpush.msra.mxu0 %v2102
    %2813 = vmatpush.msra.mxu0 %v2095
    %2814 = vmatpush.msra.mxu0 %v2088
    %2815 = vmatmul.f32.gmra.mxu0 %v1963
    %v2816 = vpop.f32.mrf.mxu0
    %v2817 = vadd.f32 %v2794, %v2816
    %2818 = vmatmul.f32.gmra.mxu0 %v1970
    %v2819 = vpop.f32.mrf.mxu0
    %v2820 = vadd.f32 %v2797, %v2819
    %2821 = vdwg.mxu0
    %2822 = vmatpush.msra.mxu0 %v2305
    %2823 = vmatpush.msra.mxu0 %v2298
    %2824 = vmatpush.msra.mxu0 %v2291
    %2825 = vmatpush.msra.mxu0 %v2284
    %2826 = vmatpush.msra.mxu0 %v2277
    %2827 = vmatpush.msra.mxu0 %v2270
    %2828 = vmatpush.msra.mxu0 %v2263
    %2829 = vmatpush.msra.mxu0 %v2256
    %2830 = vmatpush.msra.mxu0 %v2249
    %2831 = vmatpush.msra.mxu0 %v2242
    %2832 = vmatpush.msra.mxu0 %v2235
    %2833 = vmatpush.msra.mxu0 %v2228
    %2834 = vmatpush.msra.mxu0 %v2221
    %2835 = vmatpush.msra.mxu0 %v2214
    %2836 = vmatpush.msra.mxu0 %v2207
    %2837 = vmatpush.msra.mxu0 %v2200
    %2838 = vmatmul.f32.gmra.mxu0 %v1964
    %v2839 = vpop.f32.mrf.mxu0
    %v2840 = vadd.f32 %v2817, %v2839
    %2841 = vmatmul.f32.gmra.mxu0 %v1971
    %v2842 = vpop.f32.mrf.mxu0
    %v2843 = vadd.f32 %v2820, %v2842
    %2844 = vdwg.mxu0
    %2845 = vmatpush.msra.mxu0 %v2417
    %2846 = vmatpush.msra.mxu0 %v2410
    %2847 = vmatpush.msra.mxu0 %v2403
    %2848 = vmatpush.msra.mxu0 %v2396
    %2849 = vmatpush.msra.mxu0 %v2389
    %2850 = vmatpush.msra.mxu0 %v2382
    %2851 = vmatpush.msra.mxu0 %v2375
    %2852 = vmatpush.msra.mxu0 %v2368
    %2853 = vmatpush.msra.mxu0 %v2361
    %2854 = vmatpush.msra.mxu0 %v2354
    %2855 = vmatpush.msra.mxu0 %v2347
    %2856 = vmatpush.msra.mxu0 %v2340
    %2857 = vmatpush.msra.mxu0 %v2333
    %2858 = vmatpush.msra.mxu0 %v2326
    %2859 = vmatpush.msra.mxu0 %v2319
    %2860 = vmatpush.msra.mxu0 %v2312
    %2861 = vmatmul.f32.gmra.mxu0 %v1965
    %v2862 = vpop.f32.mrf.mxu0
    %v2863 = vadd.f32 %v2840, %v2862
    %2864 = vmatmul.f32.gmra.mxu0 %v1972
    %v2865 = vpop.f32.mrf.mxu0
    %v2866 = vadd.f32 %v2843, %v2865
    %2867 = vdwg.mxu0
    %2868 = vmatpush.msra.mxu0 %v2529
    %2869 = vmatpush.msra.mxu0 %v2522
    %2870 = vmatpush.msra.mxu0 %v2515
    %2871 = vmatpush.msra.mxu0 %v2508
    %2872 = vmatpush.msra.mxu0 %v2501
    %2873 = vmatpush.msra.mxu0 %v2494
    %2874 = vmatpush.msra.mxu0 %v2487
    %2875 = vmatpush.msra.mxu0 %v2480
    %2876 = vmatpush.msra.mxu0 %v2473
    %2877 = vmatpush.msra.mxu0 %v2466
    %2878 = vmatpush.msra.mxu0 %v2459
    %2879 = vmatpush.msra.mxu0 %v2452
    %2880 = vmatpush.msra.mxu0 %v2445
    %2881 = vmatpush.msra.mxu0 %v2438
    %2882 = vmatpush.msra.mxu0 %v2431
    %2883 = vmatpush.msra.mxu0 %v2424
    %2884 = vmatmul.f32.gmra.mxu0 %v1966
    %v2885 = vpop.f32.mrf.mxu0
    %v2886 = vadd.f32 %v2863, %v2885
    %2887 = vmatmul.f32.gmra.mxu0 %v1973
    %v2888 = vpop.f32.mrf.mxu0
    %v2889 = vadd.f32 %v2866, %v2888
    %2890 = vdwg.mxu0
    %2891 = vmatpush.msra.mxu0 %v2641
    %2892 = vmatpush.msra.mxu0 %v2634
    %2893 = vmatpush.msra.mxu0 %v2627
    %2894 = vmatpush.msra.mxu0 %v2620
    %2895 = vmatpush.msra.mxu0 %v2613
    %2896 = vmatpush.msra.mxu0 %v2606
    %2897 = vmatpush.msra.mxu0 %v2599
    %2898 = vmatpush.msra.mxu0 %v2592
    %2899 = vmatpush.msra.mxu0 %v2585
    %2900 = vmatpush.msra.mxu0 %v2578
    %2901 = vmatpush.msra.mxu0 %v2571
    %2902 = vmatpush.msra.mxu0 %v2564
    %2903 = vmatpush.msra.mxu0 %v2557
    %2904 = vmatpush.msra.mxu0 %v2550
    %2905 = vmatpush.msra.mxu0 %v2543
    %2906 = vmatpush.msra.mxu0 %v2536
    %2907 = vmatmul.f32.gmra.mxu0 %v1967
    %v2908 = vpop.f32.mrf.mxu0
    %v2909 = vadd.f32 %v2886, %v2908
    %2910 = vmatmul.f32.gmra.mxu0 %v1974
    %v2911 = vpop.f32.mrf.mxu0
    %v2912 = vadd.f32 %v2889, %v2911
    %2913 = vdwg.mxu0
    %2914 = vmatpush.msra.mxu0 %v2753
    %2915 = vmatpush.msra.mxu0 %v2746
    %2916 = vmatpush.msra.mxu0 %v2739
    %2917 = vmatpush.msra.mxu0 %v2732
    %2918 = vmatpush.msra.mxu0 %v2725
    %2919 = vmatpush.msra.mxu0 %v2718
    %2920 = vmatpush.msra.mxu0 %v2711
    %2921 = vmatpush.msra.mxu0 %v2704
    %2922 = vmatpush.msra.mxu0 %v2697
    %2923 = vmatpush.msra.mxu0 %v2690
    %2924 = vmatpush.msra.mxu0 %v2683
    %2925 = vmatpush.msra.mxu0 %v2676
    %2926 = vmatpush.msra.mxu0 %v2669
    %2927 = vmatpush.msra.mxu0 %v2662
    %2928 = vmatpush.msra.mxu0 %v2655
    %2929 = vmatpush.msra.mxu0 %v2648
    %2930 = vmatmul.f32.gmra.mxu0 %v1968
    %v2931 = vpop.f32.mrf.mxu0
    %v2932 = vadd.f32 %v2909, %v2931
    %2933 = vmatmul.f32.gmra.mxu0 %v1975
    %v2934 = vpop.f32.mrf.mxu0
    %v2935 = vadd.f32 %v2912, %v2934
    %2936 = vdwg.mxu0
    %2937 = vmatpush.msra.mxu0 %v2082
    %2938 = vmatpush.msra.mxu0 %v2075
    %2939 = vmatpush.msra.mxu0 %v2068
    %2940 = vmatpush.msra.mxu0 %v2061
    %2941 = vmatpush.msra.mxu0 %v2054
    %2942 = vmatpush.msra.mxu0 %v2047
    %2943 = vmatpush.msra.mxu0 %v2040
    %2944 = vmatpush.msra.mxu0 %v2033
    %2945 = vmatpush.msra.mxu0 %v2026
    %2946 = vmatpush.msra.mxu0 %v2019
    %2947 = vmatpush.msra.mxu0 %v2012
    %2948 = vmatpush.msra.mxu0 %v2005
    %2949 = vmatpush.msra.mxu0 %v1998
    %2950 = vmatpush.msra.mxu0 %v1991
    %2951 = vmatpush.msra.mxu0 %v1984
    %2952 = vmatpush.msra.mxu0 %v1977
    %2953 = vmatmul.f32.gmra.mxu0 %v1962
    %v2954 = vpop.f32.mrf.mxu0
    %v2955 = vadd.f32 %v2763, %v2954
    %2956 = vmatmul.f32.gmra.mxu0 %v1969
    %v2957 = vpop.f32.mrf.mxu0
    %v2958 = vadd.f32 %v2763, %v2957
    %2959 = vdwg.mxu0
    %2960 = vmatpush.msra.mxu0 %v2194
    %2961 = vmatpush.msra.mxu0 %v2187
    %2962 = vmatpush.msra.mxu0 %v2180
    %2963 = vmatpush.msra.mxu0 %v2173
    %2964 = vmatpush.msra.mxu0 %v2166
    %2965 = vmatpush.msra.mxu0 %v2159
    %2966 = vmatpush.msra.mxu0 %v2152
    %2967 = vmatpush.msra.mxu0 %v2145
    %2968 = vmatpush.msra.mxu0 %v2138
    %2969 = vmatpush.msra.mxu0 %v2131
    %2970 = vmatpush.msra.mxu0 %v2124
    %2971 = vmatpush.msra.mxu0 %v2117
    %2972 = vmatpush.msra.mxu0 %v2110
    %2973 = vmatpush.msra.mxu0 %v2103
    %2974 = vmatpush.msra.mxu0 %v2096
    %2975 = vmatpush.msra.mxu0 %v2089
    %2976 = vmatmul.f32.gmra.mxu0 %v1963
    %v2977 = vpop.f32.mrf.mxu0
    %v2978 = vadd.f32 %v2955, %v2977
    %2979 = vmatmul.f32.gmra.mxu0 %v1970
    %v2980 = vpop.f32.mrf.mxu0
    %v2981 = vadd.f32 %v2958, %v2980
    %2982 = vdwg.mxu0
    %2983 = vmatpush.msra.mxu0 %v2306
    %2984 = vmatpush.msra.mxu0 %v2299
    %2985 = vmatpush.msra.mxu0 %v2292
    %2986 = vmatpush.msra.mxu0 %v2285
    %2987 = vmatpush.msra.mxu0 %v2278
    %2988 = vmatpush.msra.mxu0 %v2271
    %2989 = vmatpush.msra.mxu0 %v2264
    %2990 = vmatpush.msra.mxu0 %v2257
    %2991 = vmatpush.msra.mxu0 %v2250
    %2992 = vmatpush.msra.mxu0 %v2243
    %2993 = vmatpush.msra.mxu0 %v2236
    %2994 = vmatpush.msra.mxu0 %v2229
    %2995 = vmatpush.msra.mxu0 %v2222
    %2996 = vmatpush.msra.mxu0 %v2215
    %2997 = vmatpush.msra.mxu0 %v2208
    %2998 = vmatpush.msra.mxu0 %v2201
    %2999 = vmatmul.f32.gmra.mxu0 %v1964
    %v3000 = vpop.f32.mrf.mxu0
    %v3001 = vadd.f32 %v2978, %v3000
    %3002 = vmatmul.f32.gmra.mxu0 %v1971
    %v3003 = vpop.f32.mrf.mxu0
    %v3004 = vadd.f32 %v2981, %v3003
    %3005 = vdwg.mxu0
    %3006 = vmatpush.msra.mxu0 %v2418
    %3007 = vmatpush.msra.mxu0 %v2411
    %3008 = vmatpush.msra.mxu0 %v2404
    %3009 = vmatpush.msra.mxu0 %v2397
    %3010 = vmatpush.msra.mxu0 %v2390
    %3011 = vmatpush.msra.mxu0 %v2383
    %3012 = vmatpush.msra.mxu0 %v2376
    %3013 = vmatpush.msra.mxu0 %v2369
    %3014 = vmatpush.msra.mxu0 %v2362
    %3015 = vmatpush.msra.mxu0 %v2355
    %3016 = vmatpush.msra.mxu0 %v2348
    %3017 = vmatpush.msra.mxu0 %v2341
    %3018 = vmatpush.msra.mxu0 %v2334
    %3019 = vmatpush.msra.mxu0 %v2327
    %3020 = vmatpush.msra.mxu0 %v2320
    %3021 = vmatpush.msra.mxu0 %v2313
    %3022 = vmatmul.f32.gmra.mxu0 %v1965
    %v3023 = vpop.f32.mrf.mxu0
    %v3024 = vadd.f32 %v3001, %v3023
    %3025 = vmatmul.f32.gmra.mxu0 %v1972
    %v3026 = vpop.f32.mrf.mxu0
    %v3027 = vadd.f32 %v3004, %v3026
    %3028 = vdwg.mxu0
    %3029 = vmatpush.msra.mxu0 %v2530
    %3030 = vmatpush.msra.mxu0 %v2523
    %3031 = vmatpush.msra.mxu0 %v2516
    %3032 = vmatpush.msra.mxu0 %v2509
    %3033 = vmatpush.msra.mxu0 %v2502
    %3034 = vmatpush.msra.mxu0 %v2495
    %3035 = vmatpush.msra.mxu0 %v2488
    %3036 = vmatpush.msra.mxu0 %v2481
    %3037 = vmatpush.msra.mxu0 %v2474
    %3038 = vmatpush.msra.mxu0 %v2467
    %3039 = vmatpush.msra.mxu0 %v2460
    %3040 = vmatpush.msra.mxu0 %v2453
    %3041 = vmatpush.msra.mxu0 %v2446
    %3042 = vmatpush.msra.mxu0 %v2439
    %3043 = vmatpush.msra.mxu0 %v2432
    %3044 = vmatpush.msra.mxu0 %v2425
    %3045 = vmatmul.f32.gmra.mxu0 %v1966
    %v3046 = vpop.f32.mrf.mxu0
    %v3047 = vadd.f32 %v3024, %v3046
    %3048 = vmatmul.f32.gmra.mxu0 %v1973
    %v3049 = vpop.f32.mrf.mxu0
    %v3050 = vadd.f32 %v3027, %v3049
    %3051 = vdwg.mxu0
    %3052 = vmatpush.msra.mxu0 %v2642
    %3053 = vmatpush.msra.mxu0 %v2635
    %3054 = vmatpush.msra.mxu0 %v2628
    %3055 = vmatpush.msra.mxu0 %v2621
    %3056 = vmatpush.msra.mxu0 %v2614
    %3057 = vmatpush.msra.mxu0 %v2607
    %3058 = vmatpush.msra.mxu0 %v2600
    %3059 = vmatpush.msra.mxu0 %v2593
    %3060 = vmatpush.msra.mxu0 %v2586
    %3061 = vmatpush.msra.mxu0 %v2579
    %3062 = vmatpush.msra.mxu0 %v2572
    %3063 = vmatpush.msra.mxu0 %v2565
    %3064 = vmatpush.msra.mxu0 %v2558
    %3065 = vmatpush.msra.mxu0 %v2551
    %3066 = vmatpush.msra.mxu0 %v2544
    %3067 = vmatpush.msra.mxu0 %v2537
    %3068 = vmatmul.f32.gmra.mxu0 %v1967
    %v3069 = vpop.f32.mrf.mxu0
    %v3070 = vadd.f32 %v3047, %v3069
    %3071 = vmatmul.f32.gmra.mxu0 %v1974
    %v3072 = vpop.f32.mrf.mxu0
    %v3073 = vadd.f32 %v3050, %v3072
    %3074 = vdwg.mxu0
    %3075 = vmatpush.msra.mxu0 %v2754
    %3076 = vmatpush.msra.mxu0 %v2747
    %3077 = vmatpush.msra.mxu0 %v2740
    %3078 = vmatpush.msra.mxu0 %v2733
    %3079 = vmatpush.msra.mxu0 %v2726
    %3080 = vmatpush.msra.mxu0 %v2719
    %3081 = vmatpush.msra.mxu0 %v2712
    %3082 = vmatpush.msra.mxu0 %v2705
    %3083 = vmatpush.msra.mxu0 %v2698
    %3084 = vmatpush.msra.mxu0 %v2691
    %3085 = vmatpush.msra.mxu0 %v2684
    %3086 = vmatpush.msra.mxu0 %v2677
    %3087 = vmatpush.msra.mxu0 %v2670
    %3088 = vmatpush.msra.mxu0 %v2663
    %3089 = vmatpush.msra.mxu0 %v2656
    %3090 = vmatpush.msra.mxu0 %v2649
    %3091 = vmatmul.f32.gmra.mxu0 %v1968
    %v3092 = vpop.f32.mrf.mxu0
    %v3093 = vadd.f32 %v3070, %v3092
    %3094 = vmatmul.f32.gmra.mxu0 %v1975
    %v3095 = vpop.f32.mrf.mxu0
    %v3096 = vadd.f32 %v3073, %v3095
    %3097 = vdwg.mxu0
    %3098 = vmatpush.msra.mxu0 %v2083
    %3099 = vmatpush.msra.mxu0 %v2076
    %3100 = vmatpush.msra.mxu0 %v2069
    %3101 = vmatpush.msra.mxu0 %v2062
    %3102 = vmatpush.msra.mxu0 %v2055
    %3103 = vmatpush.msra.mxu0 %v2048
    %3104 = vmatpush.msra.mxu0 %v2041
    %3105 = vmatpush.msra.mxu0 %v2034
    %3106 = vmatpush.msra.mxu0 %v2027
    %3107 = vmatpush.msra.mxu0 %v2020
    %3108 = vmatpush.msra.mxu0 %v2013
    %3109 = vmatpush.msra.mxu0 %v2006
    %3110 = vmatpush.msra.mxu0 %v1999
    %3111 = vmatpush.msra.mxu0 %v1992
    %3112 = vmatpush.msra.mxu0 %v1985
    %3113 = vmatpush.msra.mxu0 %v1978
    %3114 = vmatmul.f32.gmra.mxu0 %v1962
    %v3115 = vpop.f32.mrf.mxu0
    %v3116 = vadd.f32 %v2764, %v3115
    %3117 = vmatmul.f32.gmra.mxu0 %v1969
    %v3118 = vpop.f32.mrf.mxu0
    %v3119 = vadd.f32 %v2764, %v3118
    %3120 = vdwg.mxu0
    %3121 = vmatpush.msra.mxu0 %v2195
    %3122 = vmatpush.msra.mxu0 %v2188
    %3123 = vmatpush.msra.mxu0 %v2181
    %3124 = vmatpush.msra.mxu0 %v2174
    %3125 = vmatpush.msra.mxu0 %v2167
    %3126 = vmatpush.msra.mxu0 %v2160
    %3127 = vmatpush.msra.mxu0 %v2153
    %3128 = vmatpush.msra.mxu0 %v2146
    %3129 = vmatpush.msra.mxu0 %v2139
    %3130 = vmatpush.msra.mxu0 %v2132
    %3131 = vmatpush.msra.mxu0 %v2125
    %3132 = vmatpush.msra.mxu0 %v2118
    %3133 = vmatpush.msra.mxu0 %v2111
    %3134 = vmatpush.msra.mxu0 %v2104
    %3135 = vmatpush.msra.mxu0 %v2097
    %3136 = vmatpush.msra.mxu0 %v2090
    %3137 = vmatmul.f32.gmra.mxu0 %v1963
    %v3138 = vpop.f32.mrf.mxu0
    %v3139 = vadd.f32 %v3116, %v3138
    %3140 = vmatmul.f32.gmra.mxu0 %v1970
    %v3141 = vpop.f32.mrf.mxu0
    %v3142 = vadd.f32 %v3119, %v3141
    %3143 = vdwg.mxu0
    %3144 = vmatpush.msra.mxu0 %v2307
    %3145 = vmatpush.msra.mxu0 %v2300
    %3146 = vmatpush.msra.mxu0 %v2293
    %3147 = vmatpush.msra.mxu0 %v2286
    %3148 = vmatpush.msra.mxu0 %v2279
    %3149 = vmatpush.msra.mxu0 %v2272
    %3150 = vmatpush.msra.mxu0 %v2265
    %3151 = vmatpush.msra.mxu0 %v2258
    %3152 = vmatpush.msra.mxu0 %v2251
    %3153 = vmatpush.msra.mxu0 %v2244
    %3154 = vmatpush.msra.mxu0 %v2237
    %3155 = vmatpush.msra.mxu0 %v2230
    %3156 = vmatpush.msra.mxu0 %v2223
    %3157 = vmatpush.msra.mxu0 %v2216
    %3158 = vmatpush.msra.mxu0 %v2209
    %3159 = vmatpush.msra.mxu0 %v2202
    %3160 = vmatmul.f32.gmra.mxu0 %v1964
    %v3161 = vpop.f32.mrf.mxu0
    %v3162 = vadd.f32 %v3139, %v3161
    %3163 = vmatmul.f32.gmra.mxu0 %v1971
    %v3164 = vpop.f32.mrf.mxu0
    %v3165 = vadd.f32 %v3142, %v3164
    %3166 = vdwg.mxu0
    %3167 = vmatpush.msra.mxu0 %v2419
    %3168 = vmatpush.msra.mxu0 %v2412
    %3169 = vmatpush.msra.mxu0 %v2405
    %3170 = vmatpush.msra.mxu0 %v2398
    %3171 = vmatpush.msra.mxu0 %v2391
    %3172 = vmatpush.msra.mxu0 %v2384
    %3173 = vmatpush.msra.mxu0 %v2377
    %3174 = vmatpush.msra.mxu0 %v2370
    %3175 = vmatpush.msra.mxu0 %v2363
    %3176 = vmatpush.msra.mxu0 %v2356
    %3177 = vmatpush.msra.mxu0 %v2349
    %3178 = vmatpush.msra.mxu0 %v2342
    %3179 = vmatpush.msra.mxu0 %v2335
    %3180 = vmatpush.msra.mxu0 %v2328
    %3181 = vmatpush.msra.mxu0 %v2321
    %3182 = vmatpush.msra.mxu0 %v2314
    %3183 = vmatmul.f32.gmra.mxu0 %v1965
    %v3184 = vpop.f32.mrf.mxu0
    %v3185 = vadd.f32 %v3162, %v3184
    %3186 = vmatmul.f32.gmra.mxu0 %v1972
    %v3187 = vpop.f32.mrf.mxu0
    %v3188 = vadd.f32 %v3165, %v3187
    %3189 = vdwg.mxu0
    %3190 = vmatpush.msra.mxu0 %v2531
    %3191 = vmatpush.msra.mxu0 %v2524
    %3192 = vmatpush.msra.mxu0 %v2517
    %3193 = vmatpush.msra.mxu0 %v2510
    %3194 = vmatpush.msra.mxu0 %v2503
    %3195 = vmatpush.msra.mxu0 %v2496
    %3196 = vmatpush.msra.mxu0 %v2489
    %3197 = vmatpush.msra.mxu0 %v2482
    %3198 = vmatpush.msra.mxu0 %v2475
    %3199 = vmatpush.msra.mxu0 %v2468
    %3200 = vmatpush.msra.mxu0 %v2461
    %3201 = vmatpush.msra.mxu0 %v2454
    %3202 = vmatpush.msra.mxu0 %v2447
    %3203 = vmatpush.msra.mxu0 %v2440
    %3204 = vmatpush.msra.mxu0 %v2433
    %3205 = vmatpush.msra.mxu0 %v2426
    %3206 = vmatmul.f32.gmra.mxu0 %v1966
    %v3207 = vpop.f32.mrf.mxu0
    %v3208 = vadd.f32 %v3185, %v3207
    %3209 = vmatmul.f32.gmra.mxu0 %v1973
    %v3210 = vpop.f32.mrf.mxu0
    %v3211 = vadd.f32 %v3188, %v3210
    %3212 = vdwg.mxu0
    %3213 = vmatpush.msra.mxu0 %v2643
    %3214 = vmatpush.msra.mxu0 %v2636
    %3215 = vmatpush.msra.mxu0 %v2629
    %3216 = vmatpush.msra.mxu0 %v2622
    %3217 = vmatpush.msra.mxu0 %v2615
    %3218 = vmatpush.msra.mxu0 %v2608
    %3219 = vmatpush.msra.mxu0 %v2601
    %3220 = vmatpush.msra.mxu0 %v2594
    %3221 = vmatpush.msra.mxu0 %v2587
    %3222 = vmatpush.msra.mxu0 %v2580
    %3223 = vmatpush.msra.mxu0 %v2573
    %3224 = vmatpush.msra.mxu0 %v2566
    %3225 = vmatpush.msra.mxu0 %v2559
    %3226 = vmatpush.msra.mxu0 %v2552
    %3227 = vmatpush.msra.mxu0 %v2545
    %3228 = vmatpush.msra.mxu0 %v2538
    %3229 = vmatmul.f32.gmra.mxu0 %v1967
    %v3230 = vpop.f32.mrf.mxu0
    %v3231 = vadd.f32 %v3208, %v3230
    %3232 = vmatmul.f32.gmra.mxu0 %v1974
    %v3233 = vpop.f32.mrf.mxu0
    %v3234 = vadd.f32 %v3211, %v3233
    %3235 = vdwg.mxu0
    %3236 = vmatpush.msra.mxu0 %v2755
    %3237 = vmatpush.msra.mxu0 %v2748
    %3238 = vmatpush.msra.mxu0 %v2741
    %3239 = vmatpush.msra.mxu0 %v2734
    %3240 = vmatpush.msra.mxu0 %v2727
    %3241 = vmatpush.msra.mxu0 %v2720
    %3242 = vmatpush.msra.mxu0 %v2713
    %3243 = vmatpush.msra.mxu0 %v2706
    %3244 = vmatpush.msra.mxu0 %v2699
    %3245 = vmatpush.msra.mxu0 %v2692
    %3246 = vmatpush.msra.mxu0 %v2685
    %3247 = vmatpush.msra.mxu0 %v2678
    %3248 = vmatpush.msra.mxu0 %v2671
    %3249 = vmatpush.msra.mxu0 %v2664
    %3250 = vmatpush.msra.mxu0 %v2657
    %3251 = vmatpush.msra.mxu0 %v2650
    %3252 = vmatmul.f32.gmra.mxu0 %v1968
    %v3253 = vpop.f32.mrf.mxu0
    %v3254 = vadd.f32 %v3231, %v3253
    %3255 = vmatmul.f32.gmra.mxu0 %v1975
    %v3256 = vpop.f32.mrf.mxu0
    %v3257 = vadd.f32 %v3234, %v3256
    %3258 = vdwg.mxu0
    %3259 = vmatpush.msra.mxu0 %v2084
    %3260 = vmatpush.msra.mxu0 %v2077
    %3261 = vmatpush.msra.mxu0 %v2070
    %3262 = vmatpush.msra.mxu0 %v2063
    %3263 = vmatpush.msra.mxu0 %v2056
    %3264 = vmatpush.msra.mxu0 %v2049
    %3265 = vmatpush.msra.mxu0 %v2042
    %3266 = vmatpush.msra.mxu0 %v2035
    %3267 = vmatpush.msra.mxu0 %v2028
    %3268 = vmatpush.msra.mxu0 %v2021
    %3269 = vmatpush.msra.mxu0 %v2014
    %3270 = vmatpush.msra.mxu0 %v2007
    %3271 = vmatpush.msra.mxu0 %v2000
    %3272 = vmatpush.msra.mxu0 %v1993
    %3273 = vmatpush.msra.mxu0 %v1986
    %3274 = vmatpush.msra.mxu0 %v1979
    %3275 = vmatmul.f32.gmra.mxu0 %v1962
    %v3276 = vpop.f32.mrf.mxu0
    %v3277 = vadd.f32 %v2765, %v3276
    %3278 = vmatmul.f32.gmra.mxu0 %v1969
    %v3279 = vpop.f32.mrf.mxu0
    %v3280 = vadd.f32 %v2765, %v3279
    %3281 = vdwg.mxu0
    %3282 = vmatpush.msra.mxu0 %v2196
    %3283 = vmatpush.msra.mxu0 %v2189
    %3284 = vmatpush.msra.mxu0 %v2182
    %3285 = vmatpush.msra.mxu0 %v2175
    %3286 = vmatpush.msra.mxu0 %v2168
    %3287 = vmatpush.msra.mxu0 %v2161
    %3288 = vmatpush.msra.mxu0 %v2154
    %3289 = vmatpush.msra.mxu0 %v2147
    %3290 = vmatpush.msra.mxu0 %v2140
    %3291 = vmatpush.msra.mxu0 %v2133
    %3292 = vmatpush.msra.mxu0 %v2126
    %3293 = vmatpush.msra.mxu0 %v2119
    %3294 = vmatpush.msra.mxu0 %v2112
    %3295 = vmatpush.msra.mxu0 %v2105
    %3296 = vmatpush.msra.mxu0 %v2098
    %3297 = vmatpush.msra.mxu0 %v2091
    %3298 = vmatmul.f32.gmra.mxu0 %v1963
    %v3299 = vpop.f32.mrf.mxu0
    %v3300 = vadd.f32 %v3277, %v3299
    %3301 = vmatmul.f32.gmra.mxu0 %v1970
    %v3302 = vpop.f32.mrf.mxu0
    %v3303 = vadd.f32 %v3280, %v3302
    %3304 = vdwg.mxu0
    %3305 = vmatpush.msra.mxu0 %v2308
    %3306 = vmatpush.msra.mxu0 %v2301
    %3307 = vmatpush.msra.mxu0 %v2294
    %3308 = vmatpush.msra.mxu0 %v2287
    %3309 = vmatpush.msra.mxu0 %v2280
    %3310 = vmatpush.msra.mxu0 %v2273
    %3311 = vmatpush.msra.mxu0 %v2266
    %3312 = vmatpush.msra.mxu0 %v2259
    %3313 = vmatpush.msra.mxu0 %v2252
    %3314 = vmatpush.msra.mxu0 %v2245
    %3315 = vmatpush.msra.mxu0 %v2238
    %3316 = vmatpush.msra.mxu0 %v2231
    %3317 = vmatpush.msra.mxu0 %v2224
    %3318 = vmatpush.msra.mxu0 %v2217
    %3319 = vmatpush.msra.mxu0 %v2210
    %3320 = vmatpush.msra.mxu0 %v2203
    %3321 = vmatmul.f32.gmra.mxu0 %v1964
    %v3322 = vpop.f32.mrf.mxu0
    %v3323 = vadd.f32 %v3300, %v3322
    %3324 = vmatmul.f32.gmra.mxu0 %v1971
    %v3325 = vpop.f32.mrf.mxu0
    %v3326 = vadd.f32 %v3303, %v3325
    %3327 = vdwg.mxu0
    %3328 = vmatpush.msra.mxu0 %v2420
    %3329 = vmatpush.msra.mxu0 %v2413
    %3330 = vmatpush.msra.mxu0 %v2406
    %3331 = vmatpush.msra.mxu0 %v2399
    %3332 = vmatpush.msra.mxu0 %v2392
    %3333 = vmatpush.msra.mxu0 %v2385
    %3334 = vmatpush.msra.mxu0 %v2378
    %3335 = vmatpush.msra.mxu0 %v2371
    %3336 = vmatpush.msra.mxu0 %v2364
    %3337 = vmatpush.msra.mxu0 %v2357
    %3338 = vmatpush.msra.mxu0 %v2350
    %3339 = vmatpush.msra.mxu0 %v2343
    %3340 = vmatpush.msra.mxu0 %v2336
    %3341 = vmatpush.msra.mxu0 %v2329
    %3342 = vmatpush.msra.mxu0 %v2322
    %3343 = vmatpush.msra.mxu0 %v2315
    %3344 = vmatmul.f32.gmra.mxu0 %v1965
    %v3345 = vpop.f32.mrf.mxu0
    %v3346 = vadd.f32 %v3323, %v3345
    %3347 = vmatmul.f32.gmra.mxu0 %v1972
    %v3348 = vpop.f32.mrf.mxu0
    %v3349 = vadd.f32 %v3326, %v3348
    %3350 = vdwg.mxu0
    %3351 = vmatpush.msra.mxu0 %v2532
    %3352 = vmatpush.msra.mxu0 %v2525
    %3353 = vmatpush.msra.mxu0 %v2518
    %3354 = vmatpush.msra.mxu0 %v2511
    %3355 = vmatpush.msra.mxu0 %v2504
    %3356 = vmatpush.msra.mxu0 %v2497
    %3357 = vmatpush.msra.mxu0 %v2490
    %3358 = vmatpush.msra.mxu0 %v2483
    %3359 = vmatpush.msra.mxu0 %v2476
    %3360 = vmatpush.msra.mxu0 %v2469
    %3361 = vmatpush.msra.mxu0 %v2462
    %3362 = vmatpush.msra.mxu0 %v2455
    %3363 = vmatpush.msra.mxu0 %v2448
    %3364 = vmatpush.msra.mxu0 %v2441
    %3365 = vmatpush.msra.mxu0 %v2434
    %3366 = vmatpush.msra.mxu0 %v2427
    %3367 = vmatmul.f32.gmra.mxu0 %v1966
    %v3368 = vpop.f32.mrf.mxu0
    %v3369 = vadd.f32 %v3346, %v3368
    %3370 = vmatmul.f32.gmra.mxu0 %v1973
    %v3371 = vpop.f32.mrf.mxu0
    %v3372 = vadd.f32 %v3349, %v3371
    %3373 = vdwg.mxu0
    %3374 = vmatpush.msra.mxu0 %v2644
    %3375 = vmatpush.msra.mxu0 %v2637
    %3376 = vmatpush.msra.mxu0 %v2630
    %3377 = vmatpush.msra.mxu0 %v2623
    %3378 = vmatpush.msra.mxu0 %v2616
    %3379 = vmatpush.msra.mxu0 %v2609
    %3380 = vmatpush.msra.mxu0 %v2602
    %3381 = vmatpush.msra.mxu0 %v2595
    %3382 = vmatpush.msra.mxu0 %v2588
    %3383 = vmatpush.msra.mxu0 %v2581
    %3384 = vmatpush.msra.mxu0 %v2574
    %3385 = vmatpush.msra.mxu0 %v2567
    %3386 = vmatpush.msra.mxu0 %v2560
    %3387 = vmatpush.msra.mxu0 %v2553
    %3388 = vmatpush.msra.mxu0 %v2546
    %3389 = vmatpush.msra.mxu0 %v2539
    %3390 = vmatmul.f32.gmra.mxu0 %v1967
    %v3391 = vpop.f32.mrf.mxu0
    %v3392 = vadd.f32 %v3369, %v3391
    %3393 = vmatmul.f32.gmra.mxu0 %v1974
    %v3394 = vpop.f32.mrf.mxu0
    %v3395 = vadd.f32 %v3372, %v3394
    %3396 = vdwg.mxu0
    %3397 = vmatpush.msra.mxu0 %v2756
    %3398 = vmatpush.msra.mxu0 %v2749
    %3399 = vmatpush.msra.mxu0 %v2742
    %3400 = vmatpush.msra.mxu0 %v2735
    %3401 = vmatpush.msra.mxu0 %v2728
    %3402 = vmatpush.msra.mxu0 %v2721
    %3403 = vmatpush.msra.mxu0 %v2714
    %3404 = vmatpush.msra.mxu0 %v2707
    %3405 = vmatpush.msra.mxu0 %v2700
    %3406 = vmatpush.msra.mxu0 %v2693
    %3407 = vmatpush.msra.mxu0 %v2686
    %3408 = vmatpush.msra.mxu0 %v2679
    %3409 = vmatpush.msra.mxu0 %v2672
    %3410 = vmatpush.msra.mxu0 %v2665
    %3411 = vmatpush.msra.mxu0 %v2658
    %3412 = vmatpush.msra.mxu0 %v2651
    %3413 = vmatmul.f32.gmra.mxu0 %v1968
    %v3414 = vpop.f32.mrf.mxu0
    %v3415 = vadd.f32 %v3392, %v3414
    %3416 = vmatmul.f32.gmra.mxu0 %v1975
    %v3417 = vpop.f32.mrf.mxu0
    %v3418 = vadd.f32 %v3395, %v3417
    %3419 = vdwg.mxu0
    %3420 = vmatpush.msra.mxu0 %v2085
    %3421 = vmatpush.msra.mxu0 %v2078
    %3422 = vmatpush.msra.mxu0 %v2071
    %3423 = vmatpush.msra.mxu0 %v2064
    %3424 = vmatpush.msra.mxu0 %v2057
    %3425 = vmatpush.msra.mxu0 %v2050
    %3426 = vmatpush.msra.mxu0 %v2043
    %3427 = vmatpush.msra.mxu0 %v2036
    %3428 = vmatpush.msra.mxu0 %v2029
    %3429 = vmatpush.msra.mxu0 %v2022
    %3430 = vmatpush.msra.mxu0 %v2015
    %3431 = vmatpush.msra.mxu0 %v2008
    %3432 = vmatpush.msra.mxu0 %v2001
    %3433 = vmatpush.msra.mxu0 %v1994
    %3434 = vmatpush.msra.mxu0 %v1987
    %3435 = vmatpush.msra.mxu0 %v1980
    %3436 = vmatmul.f32.gmra.mxu0 %v1962
    %v3437 = vpop.f32.mrf.mxu0
    %v3438 = vadd.f32 %v2766, %v3437
    %3439 = vmatmul.f32.gmra.mxu0 %v1969
    %v3440 = vpop.f32.mrf.mxu0
    %v3441 = vadd.f32 %v2766, %v3440
    %3442 = vdwg.mxu0
    %3443 = vmatpush.msra.mxu0 %v2197
    %3444 = vmatpush.msra.mxu0 %v2190
    %3445 = vmatpush.msra.mxu0 %v2183
    %3446 = vmatpush.msra.mxu0 %v2176
    %3447 = vmatpush.msra.mxu0 %v2169
    %3448 = vmatpush.msra.mxu0 %v2162
    %3449 = vmatpush.msra.mxu0 %v2155
    %3450 = vmatpush.msra.mxu0 %v2148
    %3451 = vmatpush.msra.mxu0 %v2141
    %3452 = vmatpush.msra.mxu0 %v2134
    %3453 = vmatpush.msra.mxu0 %v2127
    %3454 = vmatpush.msra.mxu0 %v2120
    %3455 = vmatpush.msra.mxu0 %v2113
    %3456 = vmatpush.msra.mxu0 %v2106
    %3457 = vmatpush.msra.mxu0 %v2099
    %3458 = vmatpush.msra.mxu0 %v2092
    %3459 = vmatmul.f32.gmra.mxu0 %v1963
    %v3460 = vpop.f32.mrf.mxu0
    %v3461 = vadd.f32 %v3438, %v3460
    %3462 = vmatmul.f32.gmra.mxu0 %v1970
    %v3463 = vpop.f32.mrf.mxu0
    %v3464 = vadd.f32 %v3441, %v3463
    %3465 = vdwg.mxu0
    %3466 = vmatpush.msra.mxu0 %v2309
    %3467 = vmatpush.msra.mxu0 %v2302
    %3468 = vmatpush.msra.mxu0 %v2295
    %3469 = vmatpush.msra.mxu0 %v2288
    %3470 = vmatpush.msra.mxu0 %v2281
    %3471 = vmatpush.msra.mxu0 %v2274
    %3472 = vmatpush.msra.mxu0 %v2267
    %3473 = vmatpush.msra.mxu0 %v2260
    %3474 = vmatpush.msra.mxu0 %v2253
    %3475 = vmatpush.msra.mxu0 %v2246
    %3476 = vmatpush.msra.mxu0 %v2239
    %3477 = vmatpush.msra.mxu0 %v2232
    %3478 = vmatpush.msra.mxu0 %v2225
    %3479 = vmatpush.msra.mxu0 %v2218
    %3480 = vmatpush.msra.mxu0 %v2211
    %3481 = vmatpush.msra.mxu0 %v2204
    %3482 = vmatmul.f32.gmra.mxu0 %v1964
    %v3483 = vpop.f32.mrf.mxu0
    %v3484 = vadd.f32 %v3461, %v3483
    %3485 = vmatmul.f32.gmra.mxu0 %v1971
    %v3486 = vpop.f32.mrf.mxu0
    %v3487 = vadd.f32 %v3464, %v3486
    %3488 = vdwg.mxu0
    %3489 = vmatpush.msra.mxu0 %v2421
    %3490 = vmatpush.msra.mxu0 %v2414
    %3491 = vmatpush.msra.mxu0 %v2407
    %3492 = vmatpush.msra.mxu0 %v2400
    %3493 = vmatpush.msra.mxu0 %v2393
    %3494 = vmatpush.msra.mxu0 %v2386
    %3495 = vmatpush.msra.mxu0 %v2379
    %3496 = vmatpush.msra.mxu0 %v2372
    %3497 = vmatpush.msra.mxu0 %v2365
    %3498 = vmatpush.msra.mxu0 %v2358
    %3499 = vmatpush.msra.mxu0 %v2351
    %3500 = vmatpush.msra.mxu0 %v2344
    %3501 = vmatpush.msra.mxu0 %v2337
    %3502 = vmatpush.msra.mxu0 %v2330
    %3503 = vmatpush.msra.mxu0 %v2323
    %3504 = vmatpush.msra.mxu0 %v2316
    %3505 = vmatmul.f32.gmra.mxu0 %v1965
    %v3506 = vpop.f32.mrf.mxu0
    %v3507 = vadd.f32 %v3484, %v3506
    %3508 = vmatmul.f32.gmra.mxu0 %v1972
    %v3509 = vpop.f32.mrf.mxu0
    %v3510 = vadd.f32 %v3487, %v3509
    %3511 = vdwg.mxu0
    %3512 = vmatpush.msra.mxu0 %v2533
    %3513 = vmatpush.msra.mxu0 %v2526
    %3514 = vmatpush.msra.mxu0 %v2519
    %3515 = vmatpush.msra.mxu0 %v2512
    %3516 = vmatpush.msra.mxu0 %v2505
    %3517 = vmatpush.msra.mxu0 %v2498
    %3518 = vmatpush.msra.mxu0 %v2491
    %3519 = vmatpush.msra.mxu0 %v2484
    %3520 = vmatpush.msra.mxu0 %v2477
    %3521 = vmatpush.msra.mxu0 %v2470
    %3522 = vmatpush.msra.mxu0 %v2463
    %3523 = vmatpush.msra.mxu0 %v2456
    %3524 = vmatpush.msra.mxu0 %v2449
    %3525 = vmatpush.msra.mxu0 %v2442
    %3526 = vmatpush.msra.mxu0 %v2435
    %3527 = vmatpush.msra.mxu0 %v2428
    %3528 = vmatmul.f32.gmra.mxu0 %v1966
    %v3529 = vpop.f32.mrf.mxu0
    %v3530 = vadd.f32 %v3507, %v3529
    %3531 = vmatmul.f32.gmra.mxu0 %v1973
    %v3532 = vpop.f32.mrf.mxu0
    %v3533 = vadd.f32 %v3510, %v3532
    %3534 = vdwg.mxu0
    %3535 = vmatpush.msra.mxu0 %v2645
    %3536 = vmatpush.msra.mxu0 %v2638
    %3537 = vmatpush.msra.mxu0 %v2631
    %3538 = vmatpush.msra.mxu0 %v2624
    %3539 = vmatpush.msra.mxu0 %v2617
    %3540 = vmatpush.msra.mxu0 %v2610
    %3541 = vmatpush.msra.mxu0 %v2603
    %3542 = vmatpush.msra.mxu0 %v2596
    %3543 = vmatpush.msra.mxu0 %v2589
    %3544 = vmatpush.msra.mxu0 %v2582
    %3545 = vmatpush.msra.mxu0 %v2575
    %3546 = vmatpush.msra.mxu0 %v2568
    %3547 = vmatpush.msra.mxu0 %v2561
    %3548 = vmatpush.msra.mxu0 %v2554
    %3549 = vmatpush.msra.mxu0 %v2547
    %3550 = vmatpush.msra.mxu0 %v2540
    %3551 = vmatmul.f32.gmra.mxu0 %v1967
    %v3552 = vpop.f32.mrf.mxu0
    %v3553 = vadd.f32 %v3530, %v3552
    %3554 = vmatmul.f32.gmra.mxu0 %v1974
    %v3555 = vpop.f32.mrf.mxu0
    %v3556 = vadd.f32 %v3533, %v3555
    %3557 = vdwg.mxu0
    %3558 = vmatpush.msra.mxu0 %v2757
    %3559 = vmatpush.msra.mxu0 %v2750
    %3560 = vmatpush.msra.mxu0 %v2743
    %3561 = vmatpush.msra.mxu0 %v2736
    %3562 = vmatpush.msra.mxu0 %v2729
    %3563 = vmatpush.msra.mxu0 %v2722
    %3564 = vmatpush.msra.mxu0 %v2715
    %3565 = vmatpush.msra.mxu0 %v2708
    %3566 = vmatpush.msra.mxu0 %v2701
    %3567 = vmatpush.msra.mxu0 %v2694
    %3568 = vmatpush.msra.mxu0 %v2687
    %3569 = vmatpush.msra.mxu0 %v2680
    %3570 = vmatpush.msra.mxu0 %v2673
    %3571 = vmatpush.msra.mxu0 %v2666
    %3572 = vmatpush.msra.mxu0 %v2659
    %3573 = vmatpush.msra.mxu0 %v2652
    %3574 = vmatmul.f32.gmra.mxu0 %v1968
    %v3575 = vpop.f32.mrf.mxu0
    %v3576 = vadd.f32 %v3553, %v3575
    %3577 = vmatmul.f32.gmra.mxu0 %v1975
    %v3578 = vpop.f32.mrf.mxu0
    %v3579 = vadd.f32 %v3556, %v3578
    %3580 = vdwg.mxu0
    %3581 = vmatpush.msra.mxu0 %v2086
    %3582 = vmatpush.msra.mxu0 %v2079
    %3583 = vmatpush.msra.mxu0 %v2072
    %3584 = vmatpush.msra.mxu0 %v2065
    %3585 = vmatpush.msra.mxu0 %v2058
    %3586 = vmatpush.msra.mxu0 %v2051
    %3587 = vmatpush.msra.mxu0 %v2044
    %3588 = vmatpush.msra.mxu0 %v2037
    %3589 = vmatpush.msra.mxu0 %v2030
    %3590 = vmatpush.msra.mxu0 %v2023
    %3591 = vmatpush.msra.mxu0 %v2016
    %3592 = vmatpush.msra.mxu0 %v2009
    %3593 = vmatpush.msra.mxu0 %v2002
    %3594 = vmatpush.msra.mxu0 %v1995
    %3595 = vmatpush.msra.mxu0 %v1988
    %3596 = vmatpush.msra.mxu0 %v1981
    %3597 = vmatmul.f32.gmra.mxu0 %v1962
    %v3598 = vpop.f32.mrf.mxu0
    %v3599 = vadd.f32 %v2767, %v3598
    %3600 = vmatmul.f32.gmra.mxu0 %v1969
    %v3601 = vpop.f32.mrf.mxu0
    %v3602 = vadd.f32 %v2767, %v3601
    %3603 = vdwg.mxu0
    %3604 = vmatpush.msra.mxu0 %v2198
    %3605 = vmatpush.msra.mxu0 %v2191
    %3606 = vmatpush.msra.mxu0 %v2184
    %3607 = vmatpush.msra.mxu0 %v2177
    %3608 = vmatpush.msra.mxu0 %v2170
    %3609 = vmatpush.msra.mxu0 %v2163
    %3610 = vmatpush.msra.mxu0 %v2156
    %3611 = vmatpush.msra.mxu0 %v2149
    %3612 = vmatpush.msra.mxu0 %v2142
    %3613 = vmatpush.msra.mxu0 %v2135
    %3614 = vmatpush.msra.mxu0 %v2128
    %3615 = vmatpush.msra.mxu0 %v2121
    %3616 = vmatpush.msra.mxu0 %v2114
    %3617 = vmatpush.msra.mxu0 %v2107
    %3618 = vmatpush.msra.mxu0 %v2100
    %3619 = vmatpush.msra.mxu0 %v2093
    %3620 = vmatmul.f32.gmra.mxu0 %v1963
    %v3621 = vpop.f32.mrf.mxu0
    %v3622 = vadd.f32 %v3599, %v3621
    %3623 = vmatmul.f32.gmra.mxu0 %v1970
    %v3624 = vpop.f32.mrf.mxu0
    %v3625 = vadd.f32 %v3602, %v3624
    %3626 = vdwg.mxu0
    %3627 = vmatpush.msra.mxu0 %v2310
    %3628 = vmatpush.msra.mxu0 %v2303
    %3629 = vmatpush.msra.mxu0 %v2296
    %3630 = vmatpush.msra.mxu0 %v2289
    %3631 = vmatpush.msra.mxu0 %v2282
    %3632 = vmatpush.msra.mxu0 %v2275
    %3633 = vmatpush.msra.mxu0 %v2268
    %3634 = vmatpush.msra.mxu0 %v2261
    %3635 = vmatpush.msra.mxu0 %v2254
    %3636 = vmatpush.msra.mxu0 %v2247
    %3637 = vmatpush.msra.mxu0 %v2240
    %3638 = vmatpush.msra.mxu0 %v2233
    %3639 = vmatpush.msra.mxu0 %v2226
    %3640 = vmatpush.msra.mxu0 %v2219
    %3641 = vmatpush.msra.mxu0 %v2212
    %3642 = vmatpush.msra.mxu0 %v2205
    %3643 = vmatmul.f32.gmra.mxu0 %v1964
    %v3644 = vpop.f32.mrf.mxu0
    %v3645 = vadd.f32 %v3622, %v3644
    %3646 = vmatmul.f32.gmra.mxu0 %v1971
    %v3647 = vpop.f32.mrf.mxu0
    %v3648 = vadd.f32 %v3625, %v3647
    %3649 = vdwg.mxu0
    %3650 = vmatpush.msra.mxu0 %v2422
    %3651 = vmatpush.msra.mxu0 %v2415
    %3652 = vmatpush.msra.mxu0 %v2408
    %3653 = vmatpush.msra.mxu0 %v2401
    %3654 = vmatpush.msra.mxu0 %v2394
    %3655 = vmatpush.msra.mxu0 %v2387
    %3656 = vmatpush.msra.mxu0 %v2380
    %3657 = vmatpush.msra.mxu0 %v2373
    %3658 = vmatpush.msra.mxu0 %v2366
    %3659 = vmatpush.msra.mxu0 %v2359
    %3660 = vmatpush.msra.mxu0 %v2352
    %3661 = vmatpush.msra.mxu0 %v2345
    %3662 = vmatpush.msra.mxu0 %v2338
    %3663 = vmatpush.msra.mxu0 %v2331
    %3664 = vmatpush.msra.mxu0 %v2324
    %3665 = vmatpush.msra.mxu0 %v2317
    %3666 = vmatmul.f32.gmra.mxu0 %v1965
    %v3667 = vpop.f32.mrf.mxu0
    %v3668 = vadd.f32 %v3645, %v3667
    %3669 = vmatmul.f32.gmra.mxu0 %v1972
    %v3670 = vpop.f32.mrf.mxu0
    %v3671 = vadd.f32 %v3648, %v3670
    %3672 = vdwg.mxu0
    %3673 = vmatpush.msra.mxu0 %v2534
    %3674 = vmatpush.msra.mxu0 %v2527
    %3675 = vmatpush.msra.mxu0 %v2520
    %3676 = vmatpush.msra.mxu0 %v2513
    %3677 = vmatpush.msra.mxu0 %v2506
    %3678 = vmatpush.msra.mxu0 %v2499
    %3679 = vmatpush.msra.mxu0 %v2492
    %3680 = vmatpush.msra.mxu0 %v2485
    %3681 = vmatpush.msra.mxu0 %v2478
    %3682 = vmatpush.msra.mxu0 %v2471
    %3683 = vmatpush.msra.mxu0 %v2464
    %3684 = vmatpush.msra.mxu0 %v2457
    %3685 = vmatpush.msra.mxu0 %v2450
    %3686 = vmatpush.msra.mxu0 %v2443
    %3687 = vmatpush.msra.mxu0 %v2436
    %3688 = vmatpush.msra.mxu0 %v2429
    %3689 = vmatmul.f32.gmra.mxu0 %v1966
    %v3690 = vpop.f32.mrf.mxu0
    %v3691 = vadd.f32 %v3668, %v3690
    %3692 = vmatmul.f32.gmra.mxu0 %v1973
    %v3693 = vpop.f32.mrf.mxu0
    %v3694 = vadd.f32 %v3671, %v3693
    %3695 = vdwg.mxu0
    %3696 = vmatpush.msra.mxu0 %v2646
    %3697 = vmatpush.msra.mxu0 %v2639
    %3698 = vmatpush.msra.mxu0 %v2632
    %3699 = vmatpush.msra.mxu0 %v2625
    %3700 = vmatpush.msra.mxu0 %v2618
    %3701 = vmatpush.msra.mxu0 %v2611
    %3702 = vmatpush.msra.mxu0 %v2604
    %3703 = vmatpush.msra.mxu0 %v2597
    %3704 = vmatpush.msra.mxu0 %v2590
    %3705 = vmatpush.msra.mxu0 %v2583
    %3706 = vmatpush.msra.mxu0 %v2576
    %3707 = vmatpush.msra.mxu0 %v2569
    %3708 = vmatpush.msra.mxu0 %v2562
    %3709 = vmatpush.msra.mxu0 %v2555
    %3710 = vmatpush.msra.mxu0 %v2548
    %3711 = vmatpush.msra.mxu0 %v2541
    %3712 = vmatmul.f32.gmra.mxu0 %v1967
    %v3713 = vpop.f32.mrf.mxu0
    %v3714 = vadd.f32 %v3691, %v3713
    %3715 = vmatmul.f32.gmra.mxu0 %v1974
    %v3716 = vpop.f32.mrf.mxu0
    %v3717 = vadd.f32 %v3694, %v3716
    %3718 = vdwg.mxu0
    %3719 = vmatpush.msra.mxu0 %v2758
    %3720 = vmatpush.msra.mxu0 %v2751
    %3721 = vmatpush.msra.mxu0 %v2744
    %3722 = vmatpush.msra.mxu0 %v2737
    %3723 = vmatpush.msra.mxu0 %v2730
    %3724 = vmatpush.msra.mxu0 %v2723
    %3725 = vmatpush.msra.mxu0 %v2716
    %3726 = vmatpush.msra.mxu0 %v2709
    %3727 = vmatpush.msra.mxu0 %v2702
    %3728 = vmatpush.msra.mxu0 %v2695
    %3729 = vmatpush.msra.mxu0 %v2688
    %3730 = vmatpush.msra.mxu0 %v2681
    %3731 = vmatpush.msra.mxu0 %v2674
    %3732 = vmatpush.msra.mxu0 %v2667
    %3733 = vmatpush.msra.mxu0 %v2660
    %3734 = vmatpush.msra.mxu0 %v2653
    %3735 = vmatmul.f32.gmra.mxu0 %v1968
    %v3736 = vpop.f32.mrf.mxu0
    %v3737 = vadd.f32 %v3714, %v3736
    %3738 = vmatmul.f32.gmra.mxu0 %v1975
    %v3739 = vpop.f32.mrf.mxu0
    %v3740 = vadd.f32 %v3717, %v3739
    %3741 = vdwg.mxu0
    %3742 = vmatpush.msra.mxu0 %v2087
    %3743 = vmatpush.msra.mxu0 %v2080
    %3744 = vmatpush.msra.mxu0 %v2073
    %3745 = vmatpush.msra.mxu0 %v2066
    %3746 = vmatpush.msra.mxu0 %v2059
    %3747 = vmatpush.msra.mxu0 %v2052
    %3748 = vmatpush.msra.mxu0 %v2045
    %3749 = vmatpush.msra.mxu0 %v2038
    %3750 = vmatpush.msra.mxu0 %v2031
    %3751 = vmatpush.msra.mxu0 %v2024
    %3752 = vmatpush.msra.mxu0 %v2017
    %3753 = vmatpush.msra.mxu0 %v2010
    %3754 = vmatpush.msra.mxu0 %v2003
    %3755 = vmatpush.msra.mxu0 %v1996
    %3756 = vmatpush.msra.mxu0 %v1989
    %3757 = vmatpush.msra.mxu0 %v1982
    %3758 = vmatmul.f32.gmra.mxu0 %v1962
    %v3759 = vpop.f32.mrf.mxu0
    %v3760 = vadd.f32 %v2768, %v3759
    %3761 = vmatmul.f32.gmra.mxu0 %v1969
    %v3762 = vpop.f32.mrf.mxu0
    %v3763 = vadd.f32 %v2768, %v3762
    %3764 = vdwg.mxu0
    %3765 = vmatpush.msra.mxu0 %v2199
    %3766 = vmatpush.msra.mxu0 %v2192
    %3767 = vmatpush.msra.mxu0 %v2185
    %3768 = vmatpush.msra.mxu0 %v2178
    %3769 = vmatpush.msra.mxu0 %v2171
    %3770 = vmatpush.msra.mxu0 %v2164
    %3771 = vmatpush.msra.mxu0 %v2157
    %3772 = vmatpush.msra.mxu0 %v2150
    %3773 = vmatpush.msra.mxu0 %v2143
    %3774 = vmatpush.msra.mxu0 %v2136
    %3775 = vmatpush.msra.mxu0 %v2129
    %3776 = vmatpush.msra.mxu0 %v2122
    %3777 = vmatpush.msra.mxu0 %v2115
    %3778 = vmatpush.msra.mxu0 %v2108
    %3779 = vmatpush.msra.mxu0 %v2101
    %3780 = vmatpush.msra.mxu0 %v2094
    %3781 = vmatmul.f32.gmra.mxu0 %v1963
    %v3782 = vpop.f32.mrf.mxu0
    %v3783 = vadd.f32 %v3760, %v3782
    %3784 = vmatmul.f32.gmra.mxu0 %v1970
    %v3785 = vpop.f32.mrf.mxu0
    %v3786 = vadd.f32 %v3763, %v3785
    %3787 = vdwg.mxu0
    %3788 = vmatpush.msra.mxu0 %v2311
    %3789 = vmatpush.msra.mxu0 %v2304
    %3790 = vmatpush.msra.mxu0 %v2297
    %3791 = vmatpush.msra.mxu0 %v2290
    %3792 = vmatpush.msra.mxu0 %v2283
    %3793 = vmatpush.msra.mxu0 %v2276
    %3794 = vmatpush.msra.mxu0 %v2269
    %3795 = vmatpush.msra.mxu0 %v2262
    %3796 = vmatpush.msra.mxu0 %v2255
    %3797 = vmatpush.msra.mxu0 %v2248
    %3798 = vmatpush.msra.mxu0 %v2241
    %3799 = vmatpush.msra.mxu0 %v2234
    %3800 = vmatpush.msra.mxu0 %v2227
    %3801 = vmatpush.msra.mxu0 %v2220
    %3802 = vmatpush.msra.mxu0 %v2213
    %3803 = vmatpush.msra.mxu0 %v2206
    %3804 = vmatmul.f32.gmra.mxu0 %v1964
    %v3805 = vpop.f32.mrf.mxu0
    %v3806 = vadd.f32 %v3783, %v3805
    %3807 = vmatmul.f32.gmra.mxu0 %v1971
    %v3808 = vpop.f32.mrf.mxu0
    %v3809 = vadd.f32 %v3786, %v3808
    %3810 = vdwg.mxu0
    %3811 = vmatpush.msra.mxu0 %v2423
    %3812 = vmatpush.msra.mxu0 %v2416
    %3813 = vmatpush.msra.mxu0 %v2409
    %3814 = vmatpush.msra.mxu0 %v2402
    %3815 = vmatpush.msra.mxu0 %v2395
    %3816 = vmatpush.msra.mxu0 %v2388
    %3817 = vmatpush.msra.mxu0 %v2381
    %3818 = vmatpush.msra.mxu0 %v2374
    %3819 = vmatpush.msra.mxu0 %v2367
    %3820 = vmatpush.msra.mxu0 %v2360
    %3821 = vmatpush.msra.mxu0 %v2353
    %3822 = vmatpush.msra.mxu0 %v2346
    %3823 = vmatpush.msra.mxu0 %v2339
    %3824 = vmatpush.msra.mxu0 %v2332
    %3825 = vmatpush.msra.mxu0 %v2325
    %3826 = vmatpush.msra.mxu0 %v2318
    %3827 = vmatmul.f32.gmra.mxu0 %v1965
    %v3828 = vpop.f32.mrf.mxu0
    %v3829 = vadd.f32 %v3806, %v3828
    %3830 = vmatmul.f32.gmra.mxu0 %v1972
    %v3831 = vpop.f32.mrf.mxu0
    %v3832 = vadd.f32 %v3809, %v3831
    %3833 = vdwg.mxu0
    %3834 = vmatpush.msra.mxu0 %v2535
    %3835 = vmatpush.msra.mxu0 %v2528
    %3836 = vmatpush.msra.mxu0 %v2521
    %3837 = vmatpush.msra.mxu0 %v2514
    %3838 = vmatpush.msra.mxu0 %v2507
    %3839 = vmatpush.msra.mxu0 %v2500
    %3840 = vmatpush.msra.mxu0 %v2493
    %3841 = vmatpush.msra.mxu0 %v2486
    %3842 = vmatpush.msra.mxu0 %v2479
    %3843 = vmatpush.msra.mxu0 %v2472
    %3844 = vmatpush.msra.mxu0 %v2465
    %3845 = vmatpush.msra.mxu0 %v2458
    %3846 = vmatpush.msra.mxu0 %v2451
    %3847 = vmatpush.msra.mxu0 %v2444
    %3848 = vmatpush.msra.mxu0 %v2437
    %3849 = vmatpush.msra.mxu0 %v2430
    %3850 = vmatmul.f32.gmra.mxu0 %v1966
    %v3851 = vpop.f32.mrf.mxu0
    %v3852 = vadd.f32 %v3829, %v3851
    %3853 = vmatmul.f32.gmra.mxu0 %v1973
    %v3854 = vpop.f32.mrf.mxu0
    %v3855 = vadd.f32 %v3832, %v3854
    %3856 = vdwg.mxu0
    %3857 = vmatpush.msra.mxu0 %v2647
    %3858 = vmatpush.msra.mxu0 %v2640
    %3859 = vmatpush.msra.mxu0 %v2633
    %3860 = vmatpush.msra.mxu0 %v2626
    %3861 = vmatpush.msra.mxu0 %v2619
    %3862 = vmatpush.msra.mxu0 %v2612
    %3863 = vmatpush.msra.mxu0 %v2605
    %3864 = vmatpush.msra.mxu0 %v2598
    %3865 = vmatpush.msra.mxu0 %v2591
    %3866 = vmatpush.msra.mxu0 %v2584
    %3867 = vmatpush.msra.mxu0 %v2577
    %3868 = vmatpush.msra.mxu0 %v2570
    %3869 = vmatpush.msra.mxu0 %v2563
    %3870 = vmatpush.msra.mxu0 %v2556
    %3871 = vmatpush.msra.mxu0 %v2549
    %3872 = vmatpush.msra.mxu0 %v2542
    %3873 = vmatmul.f32.gmra.mxu0 %v1967
    %v3874 = vpop.f32.mrf.mxu0
    %v3875 = vadd.f32 %v3852, %v3874
    %3876 = vmatmul.f32.gmra.mxu0 %v1974
    %v3877 = vpop.f32.mrf.mxu0
    %v3878 = vadd.f32 %v3855, %v3877
    %3879 = vdwg.mxu0
    %3880 = vmatpush.msra.mxu0 %v2759
    %3881 = vmatpush.msra.mxu0 %v2752
    %3882 = vmatpush.msra.mxu0 %v2745
    %3883 = vmatpush.msra.mxu0 %v2738
    %3884 = vmatpush.msra.mxu0 %v2731
    %3885 = vmatpush.msra.mxu0 %v2724
    %3886 = vmatpush.msra.mxu0 %v2717
    %3887 = vmatpush.msra.mxu0 %v2710
    %3888 = vmatpush.msra.mxu0 %v2703
    %3889 = vmatpush.msra.mxu0 %v2696
    %3890 = vmatpush.msra.mxu0 %v2689
    %3891 = vmatpush.msra.mxu0 %v2682
    %3892 = vmatpush.msra.mxu0 %v2675
    %3893 = vmatpush.msra.mxu0 %v2668
    %3894 = vmatpush.msra.mxu0 %v2661
    %3895 = vmatpush.msra.mxu0 %v2654
    %3896 = vmatmul.f32.gmra.mxu0 %v1968
    %v3897 = vpop.f32.mrf.mxu0
    %v3898 = vadd.f32 %v3875, %v3897
    %3899 = vmatmul.f32.gmra.mxu0 %v1975
    %v3900 = vpop.f32.mrf.mxu0
    %v3901 = vadd.f32 %v3878, %v3900
    %3902 = vdwg.mxu0
    %v3903 = vmax.f32 %v2932, 0.0
    %v3904 = vmax.f32 %v3093, 0.0
    %v3905 = vmax.f32 %v3254, 0.0
    %v3906 = vmax.f32 %v3415, 0.0
    %v3907 = vmax.f32 %v3576, 0.0
    %v3908 = vmax.f32 %v3737, 0.0
    %v3909 = vmax.f32 %v3898, 0.0
    %v3910 = vmax.f32 %v2935, 0.0
    %v3911 = vmax.f32 %v3096, 0.0
    %v3912 = vmax.f32 %v3257, 0.0
    %v3913 = vmax.f32 %v3418, 0.0
    %v3914 = vmax.f32 %v3579, 0.0
    %v3915 = vmax.f32 %v3740, 0.0
    %v3916 = vmax.f32 %v3901, 0.0
    %3917 = vst [vmem:[#allocation2] sm:$0xff] %v3903
    %3918 = vst [vmem:[#allocation2 + $0x8] sm:$0xff] %v3904
    %3919 = vst [vmem:[#allocation2 + $0x10] sm:$0xff] %v3905
    %3920 = vst [vmem:[#allocation2 + $0x18] sm:$0xff] %v3906
    %3921 = vst [vmem:[#allocation2 + $0x20] sm:$0xff] %v3907
    %3922 = vst [vmem:[#allocation2 + $0x28] sm:$0xff] %v3908
    %3923 = vst [vmem:[#allocation2 + $0x30] sm:$0xff] %v3909
    %3924 = vst [vmem:[#allocation2 + $0x38] sm:$0xff] %v3910
    %3925 = vst [vmem:[#allocation2 + $0x40] sm:$0xff] %v3911
    %3926 = vst [vmem:[#allocation2 + $0x48] sm:$0xff] %v3912
    %3927 = vst [vmem:[#allocation2 + $0x50] sm:$0xff] %v3913
    %3928 = vst [vmem:[#allocation2 + $0x58] sm:$0xff] %v3914
    %3929 = vst [vmem:[#allocation2 + $0x60] sm:$0xff] %v3915
    %3930 = vst [vmem:[#allocation2 + $0x68] sm:$0xff] %v3916
    // Predicated region
    $region22: #{autoencoder_forward.1} parent=1 // pred_check
      _
    $region23: #{autoencoder_forward.1} parent=1 // pred_check_branch
      %3932 = sbr.rel (0) target = $region25
    $region24: #{autoencoder_forward.1} parent=1 // pred_region
      %3934 = vsyncadd [#allocation3], 0
      %s3935 = sshll.u32 [#allocation2], 4
      %s3936 = int_to_ptr.vmem [resolvable:$true] %s3935
      %s3937 = sshll.u32 %s5, 4
      %s3938 = int_to_ptr.hbm [resolvable:$true] %s3937
      %3943 = dma.vmem_to_hbm [thread:$0]  %s3936, 1792, %s3938, [#allocation3], 896, 896, 56
    $region25: #{autoencoder_forward.1} parent=1 // pred_fallthru
      _
    // Predicated region
    $region26: #{autoencoder_forward.1} parent=1 // pred_check
      _
    $region27: #{autoencoder_forward.1} parent=1 // pred_check_branch
      %3945 = sbr.rel (0) target = $region29
    $region28: #{autoencoder_forward.1} parent=1 // pred_region
      %3947 = dma.done [#allocation3], 1792
    $region29: #{autoencoder_forward.1} parent=1 // pred_fallthru
      _
    %3948 = vsyncpa [#allocation3], 1

</llo_original>
